<compile_context>
chip_gen: v5e
topology: v5e:2x2
jax: 0.10.0
libtpu: 0.0.40
codegen_flags: <defaults>
</compile_context>

<pallas_src>
import functools

import numpy as np
import jax
import jax.numpy as jnp
from jax import lax
from jax.experimental import pallas as pl
from jax.experimental.pallas import tpu as pltpu

# Synthetic config (mirrors cfg.MODEL.ROI_BOX_HEAD.*)
POOLER_RESOLUTION = 7
POOLER_SCALES = (0.25,)       # single-scale pooler
POOLER_SAMPLING_RATIO = 2
ROIS_PER_STEP = 8             # R: ROIs per grid step -> matmul N = R*64 = 512


def _roi_align_kernel(gb_ref, rois_ref, feat_ref, hhww_ref, out_ref, lhs_ref, *,
                      P, R, sr, scale, H, W, C):
    del gb_ref                     # consumed only by the index_maps
    g = pl.program_id(0)
    HW = H * W
    inv_sr2 = 1.0 / float(sr * sr)
    fH, fW = float(H), float(W)

    # Grid-invariant spatial tables (precomputed on host, constant block -> DMA'd once).
    hh = hhww_ref[0:1, :]          # [1, HW] feature row index of each lane (f32)
    ww = hhww_ref[1:2, :]          # [1, HW] feature col index of each lane (f32)
    pbin = lax.broadcasted_iota(jnp.int32, (8, 1), 0).astype(jnp.float32)  # padded bin 0..7

    for j in range(R):             # static unroll: all lhs store offsets stay static/aligned
        base = (g * R + j) * 4     # flat 1-D rois layout in SMEM
        x1 = rois_ref[base + 0] * scale
        y1 = rois_ref[base + 1] * scale
        x2 = rois_ref[base + 2] * scale
        y2 = rois_ref[base + 3] * scale
        bin_w = jnp.maximum(x2 - x1, 1.0) * (1.0 / P)
        bin_h = jnp.maximum(y2 - y1, 1.0) * (1.0 / P)

        # Separable bilinear weights (legacy non-aligned ROIAlign), summed over sr samples:
        #   wy[ph, col] depends only on (ph, h=col//W); wx[pw, col] only on (pw, w=col%W).
        wy = jnp.zeros((8, HW), jnp.float32)
        wx = jnp.zeros((8, HW), jnp.float32)
        for i in range(sr):        # static sampling loop
            off = (i + 0.5) / sr
            y = y1 + (pbin + off) * bin_h        # [8,1]
            x = x1 + (pbin + off) * bin_w        # [8,1]
            vy = (y >= -1.0) & (y <= fH)
            vx = (x >= -1.0) & (x <= fW)
            yc = jnp.clip(y, 0.0, fH - 1.0)
            xc = jnp.clip(x, 0.0, fW - 1.0)
            ty = jnp.maximum(1.0 - jnp.abs(yc - hh), 0.0)   # [8,HW] via broadcast
            tx = jnp.maximum(1.0 - jnp.abs(xc - ww), 0.0)
            wy = wy + jnp.where(vy, ty, 0.0)
            wx = wx + jnp.where(vx, tx, 0.0)
        wx = wx * inv_sr2          # fold the 1/sr^2 average in

        # Outer-product expansion, stored in 16-row bf16 chunks (full (16,128) tiles);
        # no [64,HW] f32 intermediate is materialized.  Row = ph*8 + pw.
        for ph in range(0, 8, 2):
            chunk = jnp.concatenate(
                [wy[ph:ph + 1, :] * wx, wy[ph + 1:ph + 2, :] * wx], axis=0)   # [16, HW] f32
            lhs_ref[pl.ds(j * 64 + ph * 8, 16), :] = chunk.astype(jnp.bfloat16)

    # One MXU matmul per group, lane-dense output:
    #   feat[C, HW] . lhs^T[HW, R*64] -> [C, R*64]   (bf16 inputs, f32 accumulation)
    out_ref[0] = lax.dot_general(
        feat_ref[0], lhs_ref[...],
        dimension_numbers=(((1,), (1,)), ((), ())),
        preferred_element_type=jnp.float32)


def roi_align_pallas(feat, rois_flat, group_batch, hhww, *, P, R, sr, scale, H, W, C):
    """feat: [N, C, H*W] bf16.  rois_flat: [G*R*4] f32.  group_batch: [G] i32.  hhww: [8, H*W] f32."""
    assert P <= 8, "8x8 padded bin packing requires pooler resolution <= 8"
    HW = H * W
    G = int(group_batch.shape[0])
    kernel = functools.partial(_roi_align_kernel, P=P, R=R, sr=sr, scale=scale,
                               H=H, W=W, C=C)

    # Explicit VMEM budget: 2x feature block (bf16) + 2x out block + hhww + lhs scratch,
    # generous margin, capped at 48 MiB so the same budget is valid on v7x (64 MiB physical).
    feat_block = C * HW * 2
    out_block = C * R * 64 * 4
    lhs_bytes = R * 64 * HW * 2
    hhww_bytes = 8 * HW * 4
    needed = 2 * feat_block + 2 * out_block + 2 * hhww_bytes + lhs_bytes
    vmem_limit = int(min(48 << 20, max(32 << 20, needed + (8 << 20))))

    return pl.pallas_call(
        kernel,
        out_shape=jax.ShapeDtypeStruct((G, C, R * 64), jnp.float32),
        grid_spec=pltpu.PrefetchScalarGridSpec(
            num_scalar_prefetch=1,                           # group_batch -> SMEM, used in index_map
            grid=(G,),
            in_specs=[
                pl.BlockSpec(memory_space=pltpu.MemorySpace.SMEM),            # flat rois (f32 scalars)
                pl.BlockSpec((1, C, HW), lambda g, gb: (gb[g], 0, 0)),        # per-group feature map (bf16)
                pl.BlockSpec((8, HW), lambda g, gb: (0, 0)),                  # grid-invariant h/w table
            ],
            out_specs=pl.BlockSpec((1, C, R * 64), lambda g, gb: (g, 0, 0)),  # lane-dense slab
            scratch_shapes=[pltpu.VMEM((R * 64, HW), jnp.bfloat16)],          # stacked weight LHS (bf16)
        ),
        compiler_params=pltpu.CompilerParams(
            dimension_semantics=("parallel",),
            vmem_limit_bytes=vmem_limit),
    )(group_batch, rois_flat, feat, hhww)


def make_roi_box_feature_extractor_forward(x_nchw, proposals):
    """Forward pass: Pooler(x, proposals) -> [K, C, P, P] (same as the torch module)."""
    P, sr, scale = POOLER_RESOLUTION, POOLER_SAMPLING_RATIO, POOLER_SCALES[0]
    R = ROIS_PER_STEP
    N, C, H, W = x_nchw.shape

    # Pooler.convert_to_roi_format + group packing: pad each image's ROI count to a
    # multiple of R so every grid step reads a single image's feature map; groups stay
    # sorted by image so consecutive steps reuse the same feature block.
    padded, group_batch, slot_ids = [], [], []
    slot_base = 0
    for i, b in enumerate(proposals):
        b = jnp.asarray(b, jnp.float32).reshape(-1, 4)
        k = int(b.shape[0])
        g_i = (k + R - 1) // R
        pad = g_i * R - k
        if pad:
            b = jnp.concatenate([b, jnp.zeros((pad, 4), jnp.float32)], axis=0)
        padded.append(b)
        group_batch += [i] * g_i
        slot_ids.append(np.arange(k, dtype=np.int32) + slot_base)
        slot_base += g_i * R
    G = len(group_batch)
    if G == 0:
        return jnp.zeros((0, C, P, P), jnp.float32)

    rois_flat = jnp.concatenate(padded, axis=0).reshape(-1)           # [G*R*4] flat 1-D SMEM layout
    group_batch = jnp.asarray(group_batch, jnp.int32)                 # [G]
    slot_ids = jnp.asarray(np.concatenate(slot_ids), jnp.int32)       # [K] real-ROI slots

    # NCHW -> [N, C, H*W] in bf16: channels on sublanes, flat spatial on lanes (no transpose).
    feat = x_nchw.reshape(N, C, H * W).astype(jnp.bfloat16)

    # Grid-invariant spatial index table: row 0 = h(col) = col//W, row 1 = w(col) = col%W.
    cols = np.arange(H * W, dtype=np.int64)
    hhww_np = np.zeros((8, H * W), np.float32)
    hhww_np[0] = (cols // W).astype(np.float32)
    hhww_np[1] = (cols % W).astype(np.float32)
    hhww = jnp.asarray(hhww_np)

    out_slab = roi_align_pallas(feat, rois_flat, group_batch, hhww,
                                P=P, R=R, sr=sr, scale=scale, H=H, W=W, C=C)  # [G, C, R*64]

    # Unpack padded 8x8 bin blocks, drop pad rows/cols and pad ROIs -> [K, C, P, P] (NCHW).
    out = out_slab.reshape(G, C, R, 8, 8).transpose(0, 2, 1, 3, 4).reshape(G * R, C, 8, 8)
    out = jnp.take(out, slot_ids, axis=0)[:, :, :P, :P]
    return out


# ------------------------- pure-numpy reference (ROIAlign) -------------------------
def _bilinear(fm, y, x, H, W):
    if y < -1.0 or y > H or x < -1.0 or x > W:
        return np.zeros((fm.shape[-1],), np.float32)
    y = min(max(y, 0.0), H - 1.0)
    x = min(max(x, 0.0), W - 1.0)
    y0 = int(np.floor(y)); x0 = int(np.floor(x))
    y1i = min(y0 + 1, H - 1); x1i = min(x0 + 1, W - 1)
    ly = y - y0; lx = x - x0
    return ((1 - ly) * (1 - lx) * fm[y0, x0] + (1 - ly) * lx * fm[y0, x1i]
            + ly * (1 - lx) * fm[y1i, x0] + ly * lx * fm[y1i, x1i]).astype(np.float32)


def roi_align_ref(feat_nhwc, rois, batch_idx, P, sr, scale):
    feat_nhwc = np.asarray(feat_nhwc); rois = np.asarray(rois)
    N, H, W, C = feat_nhwc.shape
    K = rois.shape[0]
    out = np.zeros((K, P, P, C), np.float32)
    for k in range(K):
        fm = feat_nhwc[int(batch_idx[k])]
        x1, y1, x2, y2 = (rois[k].astype(np.float64) * scale).tolist()
        rw = max(x2 - x1, 1.0); rh = max(y2 - y1, 1.0)
        bw = rw / P; bh = rh / P
        for ph in range(P):
            for pw in range(P):
                acc = np.zeros((C,), np.float32)
                for iy in range(sr):
                    yy = y1 + ph * bh + (iy + 0.5) * bh / sr
                    for ix in range(sr):
                        xx = x1 + pw * bw + (ix + 0.5) * bw / sr
                        acc += _bilinear(fm, yy, xx, H, W)
                out[k, ph, pw] = acc / (sr * sr)
    return out


if __name__ == "__main__":
    key = jax.random.PRNGKey(0)
    N, C, H, W = 2, 32, 16, 16                     # PyTorch-style NCHW input
    x_nchw = jax.random.normal(key, (N, C, H, W), jnp.float32)

    # proposals: per-image boxes (x1, y1, x2, y2) in image coordinates (image size = H/scale = 64)
    boxes_img0 = jnp.array([[4.0, 6.0, 40.0, 50.0],
                            [0.0, 0.0, 63.0, 63.0]], jnp.float32)
    boxes_img1 = jnp.array([[10.5, 12.25, 30.75, 44.5]], jnp.float32)
    proposals = [boxes_img0, boxes_img1]

    out = make_roi_box_feature_extractor_forward(x_nchw, proposals)
    out = jax.block_until_ready(out)               # [K=3, C=32, P=7, P=7]

    # correctness check vs. independent numpy ROIAlign
    # (tolerance accounts for the bf16 MXU inputs; error bound ~2^-8 * max|feat|)
    rois_np = np.concatenate([np.asarray(b) for b in proposals], axis=0)
    bidx_np = np.concatenate([np.full((b.shape[0],), i) for i, b in enumerate(proposals)])
    feat_nhwc = np.transpose(np.asarray(x_nchw), (0, 2, 3, 1))
    ref = roi_align_ref(feat_nhwc, rois_np, bidx_np,
                        POOLER_RESOLUTION, POOLER_SAMPLING_RATIO, POOLER_SCALES[0])
    ref = np.transpose(ref, (0, 3, 1, 2))
    np.testing.assert_allclose(np.asarray(out), ref, atol=3e-2, rtol=3e-2)
    print("KERNEL_OK")
</pallas_src>

<mosaic_0001>
module attributes {stable_mosaic.version = 11 : i64} {
  func.func @_roi_align_kernel(%arg0: i32, %arg1: memref<2xi32, #tpu.memory_space<smem>>, %arg2: memref<64xf32, #tpu.memory_space<smem>>, %arg3: memref<1x32x256xbf16, #tpu.memory_space<vmem>>, %arg4: memref<8x256xf32, #tpu.memory_space<vmem>>, %arg5: memref<1x32x512xf32, #tpu.memory_space<vmem>>, %arg6: memref<512x256xbf16, #tpu.memory_space<vmem>>) attributes {dimension_semantics = [#tpu.dimension_semantics<parallel>], iteration_bounds = array<i64: 2>, scalar_prefetch = 1 : i64, scratch_operands = 1 : i64, tpu.core_type = #tpu.core_type<tc>, window_params = [{transform_indices = @transform_0, window_bounds = array<i64: 64>}, {transform_indices = @transform_1, window_bounds = array<i64: 1, 32, 256>}, {pipeline_mode = #tpu.pipeline_mode<synchronous>, transform_indices = @transform_2, window_bounds = array<i64: 8, 256>}, {transform_indices = @transform_3, window_bounds = array<i64: 1, 32, 512>}]} {
    %c0 = arith.constant 0 : index
    %c0_0 = arith.constant 0 : index
    %0 = vector.load %arg4[%c0, %c0_0] : memref<8x256xf32, #tpu.memory_space<vmem>>, vector<1x256xf32>
    %c1 = arith.constant 1 : index
    %c0_1 = arith.constant 0 : index
    %1 = vector.load %arg4[%c1, %c0_1] : memref<8x256xf32, #tpu.memory_space<vmem>>, vector<1x256xf32>
    %2 = tpu.iota {dimensions = array<i32: 0>} : vector<8x1xi32>
    %3 = arith.sitofp %2 : vector<8x1xi32> to vector<8x1xf32>
    %c8_i32 = arith.constant 8 : i32
    %4 = arith.muli %arg0, %c8_i32 : i32
    %c0_i32 = arith.constant 0 : i32
    %5 = arith.addi %4, %c0_i32 : i32
    %c4_i32 = arith.constant 4 : i32
    %6 = arith.muli %5, %c4_i32 : i32
    %c0_i32_2 = arith.constant 0 : i32
    %7 = arith.addi %6, %c0_i32_2 : i32
    %8 = arith.index_cast %7 : i32 to index
    %9 = memref.load %arg2[%8] : memref<64xf32, #tpu.memory_space<smem>>
    %cst = arith.constant 2.500000e-01 : f32
    %10 = arith.mulf %9, %cst : f32
    %c1_i32 = arith.constant 1 : i32
    %11 = arith.addi %6, %c1_i32 : i32
    %12 = arith.index_cast %11 : i32 to index
    %13 = memref.load %arg2[%12] : memref<64xf32, #tpu.memory_space<smem>>
    %cst_3 = arith.constant 2.500000e-01 : f32
    %14 = arith.mulf %13, %cst_3 : f32
    %c2_i32 = arith.constant 2 : i32
    %15 = arith.addi %6, %c2_i32 : i32
    %16 = arith.index_cast %15 : i32 to index
    %17 = memref.load %arg2[%16] : memref<64xf32, #tpu.memory_space<smem>>
    %cst_4 = arith.constant 2.500000e-01 : f32
    %18 = arith.mulf %17, %cst_4 : f32
    %c3_i32 = arith.constant 3 : i32
    %19 = arith.addi %6, %c3_i32 : i32
    %20 = arith.index_cast %19 : i32 to index
    %21 = memref.load %arg2[%20] : memref<64xf32, #tpu.memory_space<smem>>
    %cst_5 = arith.constant 2.500000e-01 : f32
    %22 = arith.mulf %21, %cst_5 : f32
    %23 = arith.subf %18, %10 : f32
    %cst_6 = arith.constant 1.000000e+00 : f32
    %24 = arith.maximumf %23, %cst_6 : f32
    %cst_7 = arith.constant 0.142857149 : f32
    %25 = arith.mulf %24, %cst_7 : f32
    %26 = arith.subf %22, %14 : f32
    %cst_8 = arith.constant 1.000000e+00 : f32
    %27 = arith.maximumf %26, %cst_8 : f32
    %cst_9 = arith.constant 0.142857149 : f32
    %28 = arith.mulf %27, %cst_9 : f32
    %cst_10 = arith.constant 0.000000e+00 : f32
    %29 = vector.broadcast %cst_10 : f32 to vector<8x256xf32>
    %cst_11 = arith.constant 0.000000e+00 : f32
    %30 = vector.broadcast %cst_11 : f32 to vector<8x256xf32>
    %cst_12 = arith.constant 2.500000e-01 : f32
    %31 = vector.broadcast %cst_12 : f32 to vector<8x1xf32>
    %32 = arith.addf %3, %31 : vector<8x1xf32>
    %33 = vector.broadcast %28 : f32 to vector<8x1xf32>
    %34 = arith.mulf %32, %33 : vector<8x1xf32>
    %35 = vector.broadcast %14 : f32 to vector<8x1xf32>
    %36 = arith.addf %35, %34 : vector<8x1xf32>
    %cst_13 = arith.constant 2.500000e-01 : f32
    %37 = vector.broadcast %cst_13 : f32 to vector<8x1xf32>
    %38 = arith.addf %3, %37 : vector<8x1xf32>
    %39 = vector.broadcast %25 : f32 to vector<8x1xf32>
    %40 = arith.mulf %38, %39 : vector<8x1xf32>
    %41 = vector.broadcast %10 : f32 to vector<8x1xf32>
    %42 = arith.addf %41, %40 : vector<8x1xf32>
    %cst_14 = arith.constant -1.000000e+00 : f32
    %43 = vector.broadcast %cst_14 : f32 to vector<8x1xf32>
    %44 = arith.cmpf oge, %36, %43 : vector<8x1xf32>
    %cst_15 = arith.constant 1.600000e+01 : f32
    %45 = vector.broadcast %cst_15 : f32 to vector<8x1xf32>
    %46 = arith.cmpf ole, %36, %45 : vector<8x1xf32>
    %47 = arith.andi %44, %46 : vector<8x1xi1>
    %cst_16 = arith.constant -1.000000e+00 : f32
    %48 = vector.broadcast %cst_16 : f32 to vector<8x1xf32>
    %49 = arith.cmpf oge, %42, %48 : vector<8x1xf32>
    %cst_17 = arith.constant 1.600000e+01 : f32
    %50 = vector.broadcast %cst_17 : f32 to vector<8x1xf32>
    %51 = arith.cmpf ole, %42, %50 : vector<8x1xf32>
    %52 = arith.andi %49, %51 : vector<8x1xi1>
    %cst_18 = arith.constant 0.000000e+00 : f32
    %cst_19 = arith.constant 1.500000e+01 : f32
    %53 = vector.broadcast %cst_18 : f32 to vector<8x1xf32>
    %54 = arith.maximumf %53, %36 : vector<8x1xf32>
    %55 = vector.broadcast %cst_19 : f32 to vector<8x1xf32>
    %56 = arith.minimumf %55, %54 : vector<8x1xf32>
    %cst_20 = arith.constant 0.000000e+00 : f32
    %cst_21 = arith.constant 1.500000e+01 : f32
    %57 = vector.broadcast %cst_20 : f32 to vector<8x1xf32>
    %58 = arith.maximumf %57, %42 : vector<8x1xf32>
    %59 = vector.broadcast %cst_21 : f32 to vector<8x1xf32>
    %60 = arith.minimumf %59, %58 : vector<8x1xf32>
    %61 = vector.broadcast %56 : vector<8x1xf32> to vector<8x256xf32>
    %62 = vector.broadcast %0 : vector<1x256xf32> to vector<8x256xf32>
    %63 = arith.subf %61, %62 : vector<8x256xf32>
    %64 = math.absf %63 : vector<8x256xf32>
    %cst_22 = arith.constant 1.000000e+00 : f32
    %65 = vector.broadcast %cst_22 : f32 to vector<8x256xf32>
    %66 = arith.subf %65, %64 : vector<8x256xf32>
    %cst_23 = arith.constant 0.000000e+00 : f32
    %67 = vector.broadcast %cst_23 : f32 to vector<8x256xf32>
    %68 = arith.maximumf %66, %67 : vector<8x256xf32>
    %69 = vector.broadcast %60 : vector<8x1xf32> to vector<8x256xf32>
    %70 = vector.broadcast %1 : vector<1x256xf32> to vector<8x256xf32>
    %71 = arith.subf %69, %70 : vector<8x256xf32>
    %72 = math.absf %71 : vector<8x256xf32>
    %cst_24 = arith.constant 1.000000e+00 : f32
    %73 = vector.broadcast %cst_24 : f32 to vector<8x256xf32>
    %74 = arith.subf %73, %72 : vector<8x256xf32>
    %cst_25 = arith.constant 0.000000e+00 : f32
    %75 = vector.broadcast %cst_25 : f32 to vector<8x256xf32>
    %76 = arith.maximumf %74, %75 : vector<8x256xf32>
    %cst_26 = arith.constant 0.000000e+00 : f32
    %77 = vector.shape_cast %47 : vector<8x1xi1> to vector<8x1xi1>
    %78 = vector.broadcast %77 : vector<8x1xi1> to vector<8x256xi1>
    %79 = vector.broadcast %cst_26 : f32 to vector<8x256xf32>
    %80 = arith.select %78, %68, %79 : vector<8x256xi1>, vector<8x256xf32>
    %81 = arith.addf %29, %80 : vector<8x256xf32>
    %cst_27 = arith.constant 0.000000e+00 : f32
    %82 = vector.shape_cast %52 : vector<8x1xi1> to vector<8x1xi1>
    %83 = vector.broadcast %82 : vector<8x1xi1> to vector<8x256xi1>
    %84 = vector.broadcast %cst_27 : f32 to vector<8x256xf32>
    %85 = arith.select %83, %76, %84 : vector<8x256xi1>, vector<8x256xf32>
    %86 = arith.addf %30, %85 : vector<8x256xf32>
    %cst_28 = arith.constant 7.500000e-01 : f32
    %87 = vector.broadcast %cst_28 : f32 to vector<8x1xf32>
    %88 = arith.addf %3, %87 : vector<8x1xf32>
    %89 = vector.broadcast %28 : f32 to vector<8x1xf32>
    %90 = arith.mulf %88, %89 : vector<8x1xf32>
    %91 = vector.broadcast %14 : f32 to vector<8x1xf32>
    %92 = arith.addf %91, %90 : vector<8x1xf32>
    %cst_29 = arith.constant 7.500000e-01 : f32
    %93 = vector.broadcast %cst_29 : f32 to vector<8x1xf32>
    %94 = arith.addf %3, %93 : vector<8x1xf32>
    %95 = vector.broadcast %25 : f32 to vector<8x1xf32>
    %96 = arith.mulf %94, %95 : vector<8x1xf32>
    %97 = vector.broadcast %10 : f32 to vector<8x1xf32>
    %98 = arith.addf %97, %96 : vector<8x1xf32>
    %cst_30 = arith.constant -1.000000e+00 : f32
    %99 = vector.broadcast %cst_30 : f32 to vector<8x1xf32>
    %100 = arith.cmpf oge, %92, %99 : vector<8x1xf32>
    %cst_31 = arith.constant 1.600000e+01 : f32
    %101 = vector.broadcast %cst_31 : f32 to vector<8x1xf32>
    %102 = arith.cmpf ole, %92, %101 : vector<8x1xf32>
    %103 = arith.andi %100, %102 : vector<8x1xi1>
    %cst_32 = arith.constant -1.000000e+00 : f32
    %104 = vector.broadcast %cst_32 : f32 to vector<8x1xf32>
    %105 = arith.cmpf oge, %98, %104 : vector<8x1xf32>
    %cst_33 = arith.constant 1.600000e+01 : f32
    %106 = vector.broadcast %cst_33 : f32 to vector<8x1xf32>
    %107 = arith.cmpf ole, %98, %106 : vector<8x1xf32>
    %108 = arith.andi %105, %107 : vector<8x1xi1>
    %cst_34 = arith.constant 0.000000e+00 : f32
    %cst_35 = arith.constant 1.500000e+01 : f32
    %109 = vector.broadcast %cst_34 : f32 to vector<8x1xf32>
    %110 = arith.maximumf %109, %92 : vector<8x1xf32>
    %111 = vector.broadcast %cst_35 : f32 to vector<8x1xf32>
    %112 = arith.minimumf %111, %110 : vector<8x1xf32>
    %cst_36 = arith.constant 0.000000e+00 : f32
    %cst_37 = arith.constant 1.500000e+01 : f32
    %113 = vector.broadcast %cst_36 : f32 to vector<8x1xf32>
    %114 = arith.maximumf %113, %98 : vector<8x1xf32>
    %115 = vector.broadcast %cst_37 : f32 to vector<8x1xf32>
    %116 = arith.minimumf %115, %114 : vector<8x1xf32>
    %117 = vector.broadcast %112 : vector<8x1xf32> to vector<8x256xf32>
    %118 = vector.broadcast %0 : vector<1x256xf32> to vector<8x256xf32>
    %119 = arith.subf %117, %118 : vector<8x256xf32>
    %120 = math.absf %119 : vector<8x256xf32>
    %cst_38 = arith.constant 1.000000e+00 : f32
    %121 = vector.broadcast %cst_38 : f32 to vector<8x256xf32>
    %122 = arith.subf %121, %120 : vector<8x256xf32>
    %cst_39 = arith.constant 0.000000e+00 : f32
    %123 = vector.broadcast %cst_39 : f32 to vector<8x256xf32>
    %124 = arith.maximumf %122, %123 : vector<8x256xf32>
    %125 = vector.broadcast %116 : vector<8x1xf32> to vector<8x256xf32>
    %126 = vector.broadcast %1 : vector<1x256xf32> to vector<8x256xf32>
    %127 = arith.subf %125, %126 : vector<8x256xf32>
    %128 = math.absf %127 : vector<8x256xf32>
    %cst_40 = arith.constant 1.000000e+00 : f32
    %129 = vector.broadcast %cst_40 : f32 to vector<8x256xf32>
    %130 = arith.subf %129, %128 : vector<8x256xf32>
    %cst_41 = arith.constant 0.000000e+00 : f32
    %131 = vector.broadcast %cst_41 : f32 to vector<8x256xf32>
    %132 = arith.maximumf %130, %131 : vector<8x256xf32>
    %cst_42 = arith.constant 0.000000e+00 : f32
    %133 = vector.shape_cast %103 : vector<8x1xi1> to vector<8x1xi1>
    %134 = vector.broadcast %133 : vector<8x1xi1> to vector<8x256xi1>
    %135 = vector.broadcast %cst_42 : f32 to vector<8x256xf32>
    %136 = arith.select %134, %124, %135 : vector<8x256xi1>, vector<8x256xf32>
    %137 = arith.addf %81, %136 : vector<8x256xf32>
    %cst_43 = arith.constant 0.000000e+00 : f32
    %138 = vector.shape_cast %108 : vector<8x1xi1> to vector<8x1xi1>
    %139 = vector.broadcast %138 : vector<8x1xi1> to vector<8x256xi1>
    %140 = vector.broadcast %cst_43 : f32 to vector<8x256xf32>
    %141 = arith.select %139, %132, %140 : vector<8x256xi1>, vector<8x256xf32>
    %142 = arith.addf %86, %141 : vector<8x256xf32>
    %cst_44 = arith.constant 2.500000e-01 : f32
    %143 = vector.broadcast %cst_44 : f32 to vector<8x256xf32>
    %144 = arith.mulf %142, %143 : vector<8x256xf32>
    %145 = vector.extract_strided_slice %137 {offsets = [0, 0], sizes = [1, 256], strides = [1, 1]} : vector<8x256xf32> to vector<1x256xf32>
    %146 = vector.broadcast %145 : vector<1x256xf32> to vector<8x256xf32>
    %147 = arith.mulf %146, %144 : vector<8x256xf32>
    %148 = vector.extract_strided_slice %137 {offsets = [1, 0], sizes = [1, 256], strides = [1, 1]} : vector<8x256xf32> to vector<1x256xf32>
    %149 = vector.broadcast %148 : vector<1x256xf32> to vector<8x256xf32>
    %150 = arith.mulf %149, %144 : vector<8x256xf32>
    %151 = tpu.concatenate %147, %150 in 0 : vector<8x256xf32>, vector<8x256xf32> -> vector<16x256xf32>
    %152 = arith.truncf %151 : vector<16x256xf32> to vector<16x256xbf16>
    %c0_45 = arith.constant 0 : index
    %c0_46 = arith.constant 0 : index
    %153 = vector.load %arg6[%c0_45, %c0_46] : memref<512x256xbf16, #tpu.memory_space<vmem>>, vector<16x256xbf16>
    tpu.vector_store %arg6[%c0_45, %c0_46], %152 {strides = array<i32>} : memref<512x256xbf16, #tpu.memory_space<vmem>>, vector<16x256xbf16>,
    %154 = vector.extract_strided_slice %137 {offsets = [2, 0], sizes = [1, 256], strides = [1, 1]} : vector<8x256xf32> to vector<1x256xf32>
    %155 = vector.broadcast %154 : vector<1x256xf32> to vector<8x256xf32>
    %156 = arith.mulf %155, %144 : vector<8x256xf32>
    %157 = vector.extract_strided_slice %137 {offsets = [3, 0], sizes = [1, 256], strides = [1, 1]} : vector<8x256xf32> to vector<1x256xf32>
    %158 = vector.broadcast %157 : vector<1x256xf32> to vector<8x256xf32>
    %159 = arith.mulf %158, %144 : vector<8x256xf32>
    %160 = tpu.concatenate %156, %159 in 0 : vector<8x256xf32>, vector<8x256xf32> -> vector<16x256xf32>
    %161 = arith.truncf %160 : vector<16x256xf32> to vector<16x256xbf16>
    %c16 = arith.constant 16 : index
    %c0_47 = arith.constant 0 : index
    %162 = vector.load %arg6[%c16, %c0_47] : memref<512x256xbf16, #tpu.memory_space<vmem>>, vector<16x256xbf16>
    tpu.vector_store %arg6[%c16, %c0_47], %161 {strides = array<i32>} : memref<512x256xbf16, #tpu.memory_space<vmem>>, vector<16x256xbf16>,
    %163 = vector.extract_strided_slice %137 {offsets = [4, 0], sizes = [1, 256], strides = [1, 1]} : vector<8x256xf32> to vector<1x256xf32>
    %164 = vector.broadcast %163 : vector<1x256xf32> to vector<8x256xf32>
    %165 = arith.mulf %164, %144 : vector<8x256xf32>
    %166 = vector.extract_strided_slice %137 {offsets = [5, 0], sizes = [1, 256], strides = [1, 1]} : vector<8x256xf32> to vector<1x256xf32>
    %167 = vector.broadcast %166 : vector<1x256xf32> to vector<8x256xf32>
    %168 = arith.mulf %167, %144 : vector<8x256xf32>
    %169 = tpu.concatenate %165, %168 in 0 : vector<8x256xf32>, vector<8x256xf32> -> vector<16x256xf32>
    %170 = arith.truncf %169 : vector<16x256xf32> to vector<16x256xbf16>
    %c32 = arith.constant 32 : index
    %c0_48 = arith.constant 0 : index
    %171 = vector.load %arg6[%c32, %c0_48] : memref<512x256xbf16, #tpu.memory_space<vmem>>, vector<16x256xbf16>
    tpu.vector_store %arg6[%c32, %c0_48], %170 {strides = array<i32>} : memref<512x256xbf16, #tpu.memory_space<vmem>>, vector<16x256xbf16>,
    %172 = vector.extract_strided_slice %137 {offsets = [6, 0], sizes = [1, 256], strides = [1, 1]} : vector<8x256xf32> to vector<1x256xf32>
    %173 = vector.broadcast %172 : vector<1x256xf32> to vector<8x256xf32>
    %174 = arith.mulf %173, %144 : vector<8x256xf32>
    %175 = vector.extract_strided_slice %137 {offsets = [7, 0], sizes = [1, 256], strides = [1, 1]} : vector<8x256xf32> to vector<1x256xf32>
    %176 = vector.broadcast %175 : vector<1x256xf32> to vector<8x256xf32>
    %177 = arith.mulf %176, %144 : vector<8x256xf32>
    %178 = tpu.concatenate %174, %177 in 0 : vector<8x256xf32>, vector<8x256xf32> -> vector<16x256xf32>
    %179 = arith.truncf %178 : vector<16x256xf32> to vector<16x256xbf16>
    %c48 = arith.constant 48 : index
    %c0_49 = arith.constant 0 : index
    %180 = vector.load %arg6[%c48, %c0_49] : memref<512x256xbf16, #tpu.memory_space<vmem>>, vector<16x256xbf16>
    tpu.vector_store %arg6[%c48, %c0_49], %179 {strides = array<i32>} : memref<512x256xbf16, #tpu.memory_space<vmem>>, vector<16x256xbf16>,
    %c8_i32_50 = arith.constant 8 : i32
    %181 = arith.muli %arg0, %c8_i32_50 : i32
    %c1_i32_51 = arith.constant 1 : i32
    %182 = arith.addi %181, %c1_i32_51 : i32
    %c4_i32_52 = arith.constant 4 : i32
    %183 = arith.muli %182, %c4_i32_52 : i32
    %c0_i32_53 = arith.constant 0 : i32
    %184 = arith.addi %183, %c0_i32_53 : i32
    %185 = arith.index_cast %184 : i32 to index
    %186 = memref.load %arg2[%185] : memref<64xf32, #tpu.memory_space<smem>>
    %cst_54 = arith.constant 2.500000e-01 : f32
    %187 = arith.mulf %186, %cst_54 : f32
    %c1_i32_55 = arith.constant 1 : i32
    %188 = arith.addi %183, %c1_i32_55 : i32
    %189 = arith.index_cast %188 : i32 to index
    %190 = memref.load %arg2[%189] : memref<64xf32, #tpu.memory_space<smem>>
    %cst_56 = arith.constant 2.500000e-01 : f32
    %191 = arith.mulf %190, %cst_56 : f32
    %c2_i32_57 = arith.constant 2 : i32
    %192 = arith.addi %183, %c2_i32_57 : i32
    %193 = arith.index_cast %192 : i32 to index
    %194 = memref.load %arg2[%193] : memref<64xf32, #tpu.memory_space<smem>>
    %cst_58 = arith.constant 2.500000e-01 : f32
    %195 = arith.mulf %194, %cst_58 : f32
    %c3_i32_59 = arith.constant 3 : i32
    %196 = arith.addi %183, %c3_i32_59 : i32
    %197 = arith.index_cast %196 : i32 to index
    %198 = memref.load %arg2[%197] : memref<64xf32, #tpu.memory_space<smem>>
    %cst_60 = arith.constant 2.500000e-01 : f32
    %199 = arith.mulf %198, %cst_60 : f32
    %200 = arith.subf %195, %187 : f32
    %cst_61 = arith.constant 1.000000e+00 : f32
    %201 = arith.maximumf %200, %cst_61 : f32
    %cst_62 = arith.constant 0.142857149 : f32
    %202 = arith.mulf %201, %cst_62 : f32
    %203 = arith.subf %199, %191 : f32
    %cst_63 = arith.constant 1.000000e+00 : f32
    %204 = arith.maximumf %203, %cst_63 : f32
    %cst_64 = arith.constant 0.142857149 : f32
    %205 = arith.mulf %204, %cst_64 : f32
    %cst_65 = arith.constant 0.000000e+00 : f32
    %206 = vector.broadcast %cst_65 : f32 to vector<8x256xf32>
    %cst_66 = arith.constant 0.000000e+00 : f32
    %207 = vector.broadcast %cst_66 : f32 to vector<8x256xf32>
    %cst_67 = arith.constant 2.500000e-01 : f32
    %208 = vector.broadcast %cst_67 : f32 to vector<8x1xf32>
    %209 = arith.addf %3, %208 : vector<8x1xf32>
    %210 = vector.broadcast %205 : f32 to vector<8x1xf32>
    %211 = arith.mulf %209, %210 : vector<8x1xf32>
    %212 = vector.broadcast %191 : f32 to vector<8x1xf32>
    %213 = arith.addf %212, %211 : vector<8x1xf32>
    %cst_68 = arith.constant 2.500000e-01 : f32
    %214 = vector.broadcast %cst_68 : f32 to vector<8x1xf32>
    %215 = arith.addf %3, %214 : vector<8x1xf32>
    %216 = vector.broadcast %202 : f32 to vector<8x1xf32>
    %217 = arith.mulf %215, %216 : vector<8x1xf32>
    %218 = vector.broadcast %187 : f32 to vector<8x1xf32>
    %219 = arith.addf %218, %217 : vector<8x1xf32>
    %cst_69 = arith.constant -1.000000e+00 : f32
    %220 = vector.broadcast %cst_69 : f32 to vector<8x1xf32>
    %221 = arith.cmpf oge, %213, %220 : vector<8x1xf32>
    %cst_70 = arith.constant 1.600000e+01 : f32
    %222 = vector.broadcast %cst_70 : f32 to vector<8x1xf32>
    %223 = arith.cmpf ole, %213, %222 : vector<8x1xf32>
    %224 = arith.andi %221, %223 : vector<8x1xi1>
    %cst_71 = arith.constant -1.000000e+00 : f32
    %225 = vector.broadcast %cst_71 : f32 to vector<8x1xf32>
    %226 = arith.cmpf oge, %219, %225 : vector<8x1xf32>
    %cst_72 = arith.constant 1.600000e+01 : f32
    %227 = vector.broadcast %cst_72 : f32 to vector<8x1xf32>
    %228 = arith.cmpf ole, %219, %227 : vector<8x1xf32>
    %229 = arith.andi %226, %228 : vector<8x1xi1>
    %cst_73 = arith.constant 0.000000e+00 : f32
    %cst_74 = arith.constant 1.500000e+01 : f32
    %230 = vector.broadcast %cst_73 : f32 to vector<8x1xf32>
    %231 = arith.maximumf %230, %213 : vector<8x1xf32>
    %232 = vector.broadcast %cst_74 : f32 to vector<8x1xf32>
    %233 = arith.minimumf %232, %231 : vector<8x1xf32>
    %cst_75 = arith.constant 0.000000e+00 : f32
    %cst_76 = arith.constant 1.500000e+01 : f32
    %234 = vector.broadcast %cst_75 : f32 to vector<8x1xf32>
    %235 = arith.maximumf %234, %219 : vector<8x1xf32>
    %236 = vector.broadcast %cst_76 : f32 to vector<8x1xf32>
    %237 = arith.minimumf %236, %235 : vector<8x1xf32>
    %238 = vector.broadcast %233 : vector<8x1xf32> to vector<8x256xf32>
    %239 = vector.broadcast %0 : vector<1x256xf32> to vector<8x256xf32>
    %240 = arith.subf %238, %239 : vector<8x256xf32>
    %241 = math.absf %240 : vector<8x256xf32>
    %cst_77 = arith.constant 1.000000e+00 : f32
    %242 = vector.broadcast %cst_77 : f32 to vector<8x256xf32>
    %243 = arith.subf %242, %241 : vector<8x256xf32>
    %cst_78 = arith.constant 0.000000e+00 : f32
    %244 = vector.broadcast %cst_78 : f32 to vector<8x256xf32>
    %245 = arith.maximumf %243, %244 : vector<8x256xf32>
    %246 = vector.broadcast %237 : vector<8x1xf32> to vector<8x256xf32>
    %247 = vector.broadcast %1 : vector<1x256xf32> to vector<8x256xf32>
    %248 = arith.subf %246, %247 : vector<8x256xf32>
    %249 = math.absf %248 : vector<8x256xf32>
    %cst_79 = arith.constant 1.000000e+00 : f32
    %250 = vector.broadcast %cst_79 : f32 to vector<8x256xf32>
    %251 = arith.subf %250, %249 : vector<8x256xf32>
    %cst_80 = arith.constant 0.000000e+00 : f32
    %252 = vector.broadcast %cst_80 : f32 to vector<8x256xf32>
    %253 = arith.maximumf %251, %252 : vector<8x256xf32>
    %cst_81 = arith.constant 0.000000e+00 : f32
    %254 = vector.shape_cast %224 : vector<8x1xi1> to vector<8x1xi1>
    %255 = vector.broadcast %254 : vector<8x1xi1> to vector<8x256xi1>
    %256 = vector.broadcast %cst_81 : f32 to vector<8x256xf32>
    %257 = arith.select %255, %245, %256 : vector<8x256xi1>, vector<8x256xf32>
    %258 = arith.addf %206, %257 : vector<8x256xf32>
    %cst_82 = arith.constant 0.000000e+00 : f32
    %259 = vector.shape_cast %229 : vector<8x1xi1> to vector<8x1xi1>
    %260 = vector.broadcast %259 : vector<8x1xi1> to vector<8x256xi1>
    %261 = vector.broadcast %cst_82 : f32 to vector<8x256xf32>
    %262 = arith.select %260, %253, %261 : vector<8x256xi1>, vector<8x256xf32>
    %263 = arith.addf %207, %262 : vector<8x256xf32>
    %cst_83 = arith.constant 7.500000e-01 : f32
    %264 = vector.broadcast %cst_83 : f32 to vector<8x1xf32>
    %265 = arith.addf %3, %264 : vector<8x1xf32>
    %266 = vector.broadcast %205 : f32 to vector<8x1xf32>
    %267 = arith.mulf %265, %266 : vector<8x1xf32>
    %268 = vector.broadcast %191 : f32 to vector<8x1xf32>
    %269 = arith.addf %268, %267 : vector<8x1xf32>
    %cst_84 = arith.constant 7.500000e-01 : f32
    %270 = vector.broadcast %cst_84 : f32 to vector<8x1xf32>
    %271 = arith.addf %3, %270 : vector<8x1xf32>
    %272 = vector.broadcast %202 : f32 to vector<8x1xf32>
    %273 = arith.mulf %271, %272 : vector<8x1xf32>
    %274 = vector.broadcast %187 : f32 to vector<8x1xf32>
    %275 = arith.addf %274, %273 : vector<8x1xf32>
    %cst_85 = arith.constant -1.000000e+00 : f32
    %276 = vector.broadcast %cst_85 : f32 to vector<8x1xf32>
    %277 = arith.cmpf oge, %269, %276 : vector<8x1xf32>
    %cst_86 = arith.constant 1.600000e+01 : f32
    %278 = vector.broadcast %cst_86 : f32 to vector<8x1xf32>
    %279 = arith.cmpf ole, %269, %278 : vector<8x1xf32>
    %280 = arith.andi %277, %279 : vector<8x1xi1>
    %cst_87 = arith.constant -1.000000e+00 : f32
    %281 = vector.broadcast %cst_87 : f32 to vector<8x1xf32>
    %282 = arith.cmpf oge, %275, %281 : vector<8x1xf32>
    %cst_88 = arith.constant 1.600000e+01 : f32
    %283 = vector.broadcast %cst_88 : f32 to vector<8x1xf32>
    %284 = arith.cmpf ole, %275, %283 : vector<8x1xf32>
    %285 = arith.andi %282, %284 : vector<8x1xi1>
    %cst_89 = arith.constant 0.000000e+00 : f32
    %cst_90 = arith.constant 1.500000e+01 : f32
    %286 = vector.broadcast %cst_89 : f32 to vector<8x1xf32>
    %287 = arith.maximumf %286, %269 : vector<8x1xf32>
    %288 = vector.broadcast %cst_90 : f32 to vector<8x1xf32>
    %289 = arith.minimumf %288, %287 : vector<8x1xf32>
    %cst_91 = arith.constant 0.000000e+00 : f32
    %cst_92 = arith.constant 1.500000e+01 : f32
    %290 = vector.broadcast %cst_91 : f32 to vector<8x1xf32>
    %291 = arith.maximumf %290, %275 : vector<8x1xf32>
    %292 = vector.broadcast %cst_92 : f32 to vector<8x1xf32>
    %293 = arith.minimumf %292, %291 : vector<8x1xf32>
    %294 = vector.broadcast %289 : vector<8x1xf32> to vector<8x256xf32>
    %295 = vector.broadcast %0 : vector<1x256xf32> to vector<8x256xf32>
    %296 = arith.subf %294, %295 : vector<8x256xf32>
    %297 = math.absf %296 : vector<8x256xf32>
    %cst_93 = arith.constant 1.000000e+00 : f32
    %298 = vector.broadcast %cst_93 : f32 to vector<8x256xf32>
    %299 = arith.subf %298, %297 : vector<8x256xf32>
    %cst_94 = arith.constant 0.000000e+00 : f32
    %300 = vector.broadcast %cst_94 : f32 to vector<8x256xf32>
    %301 = arith.maximumf %299, %300 : vector<8x256xf32>
    %302 = vector.broadcast %293 : vector<8x1xf32> to vector<8x256xf32>
    %303 = vector.broadcast %1 : vector<1x256xf32> to vector<8x256xf32>
    %304 = arith.subf %302, %303 : vector<8x256xf32>
    %305 = math.absf %304 : vector<8x256xf32>
    %cst_95 = arith.constant 1.000000e+00 : f32
    %306 = vector.broadcast %cst_95 : f32 to vector<8x256xf32>
    %307 = arith.subf %306, %305 : vector<8x256xf32>
    %cst_96 = arith.constant 0.000000e+00 : f32
    %308 = vector.broadcast %cst_96 : f32 to vector<8x256xf32>
    %309 = arith.maximumf %307, %308 : vector<8x256xf32>
    %cst_97 = arith.constant 0.000000e+00 : f32
    %310 = vector.shape_cast %280 : vector<8x1xi1> to vector<8x1xi1>
    %311 = vector.broadcast %310 : vector<8x1xi1> to vector<8x256xi1>
    %312 = vector.broadcast %cst_97 : f32 to vector<8x256xf32>
    %313 = arith.select %311, %301, %312 : vector<8x256xi1>, vector<8x256xf32>
    %314 = arith.addf %258, %313 : vector<8x256xf32>
    %cst_98 = arith.constant 0.000000e+00 : f32
    %315 = vector.shape_cast %285 : vector<8x1xi1> to vector<8x1xi1>
    %316 = vector.broadcast %315 : vector<8x1xi1> to vector<8x256xi1>
    %317 = vector.broadcast %cst_98 : f32 to vector<8x256xf32>
    %318 = arith.select %316, %309, %317 : vector<8x256xi1>, vector<8x256xf32>
    %319 = arith.addf %263, %318 : vector<8x256xf32>
    %cst_99 = arith.constant 2.500000e-01 : f32
    %320 = vector.broadcast %cst_99 : f32 to vector<8x256xf32>
    %321 = arith.mulf %319, %320 : vector<8x256xf32>
    %322 = vector.extract_strided_slice %314 {offsets = [0, 0], sizes = [1, 256], strides = [1, 1]} : vector<8x256xf32> to vector<1x256xf32>
    %323 = vector.broadcast %322 : vector<1x256xf32> to vector<8x256xf32>
    %324 = arith.mulf %323, %321 : vector<8x256xf32>
    %325 = vector.extract_strided_slice %314 {offsets = [1, 0], sizes = [1, 256], strides = [1, 1]} : vector<8x256xf32> to vector<1x256xf32>
    %326 = vector.broadcast %325 : vector<1x256xf32> to vector<8x256xf32>
    %327 = arith.mulf %326, %321 : vector<8x256xf32>
    %328 = tpu.concatenate %324, %327 in 0 : vector<8x256xf32>, vector<8x256xf32> -> vector<16x256xf32>
    %329 = arith.truncf %328 : vector<16x256xf32> to vector<16x256xbf16>
    %c64 = arith.constant 64 : index
    %c0_100 = arith.constant 0 : index
    %330 = vector.load %arg6[%c64, %c0_100] : memref<512x256xbf16, #tpu.memory_space<vmem>>, vector<16x256xbf16>
    tpu.vector_store %arg6[%c64, %c0_100], %329 {strides = array<i32>} : memref<512x256xbf16, #tpu.memory_space<vmem>>, vector<16x256xbf16>,
    %331 = vector.extract_strided_slice %314 {offsets = [2, 0], sizes = [1, 256], strides = [1, 1]} : vector<8x256xf32> to vector<1x256xf32>
    %332 = vector.broadcast %331 : vector<1x256xf32> to vector<8x256xf32>
    %333 = arith.mulf %332, %321 : vector<8x256xf32>
    %334 = vector.extract_strided_slice %314 {offsets = [3, 0], sizes = [1, 256], strides = [1, 1]} : vector<8x256xf32> to vector<1x256xf32>
    %335 = vector.broadcast %334 : vector<1x256xf32> to vector<8x256xf32>
    %336 = arith.mulf %335, %321 : vector<8x256xf32>
    %337 = tpu.concatenate %333, %336 in 0 : vector<8x256xf32>, vector<8x256xf32> -> vector<16x256xf32>
    %338 = arith.truncf %337 : vector<16x256xf32> to vector<16x256xbf16>
    %c80 = arith.constant 80 : index
    %c0_101 = arith.constant 0 : index
    %339 = vector.load %arg6[%c80, %c0_101] : memref<512x256xbf16, #tpu.memory_space<vmem>>, vector<16x256xbf16>
    tpu.vector_store %arg6[%c80, %c0_101], %338 {strides = array<i32>} : memref<512x256xbf16, #tpu.memory_space<vmem>>, vector<16x256xbf16>,
    %340 = vector.extract_strided_slice %314 {offsets = [4, 0], sizes = [1, 256], strides = [1, 1]} : vector<8x256xf32> to vector<1x256xf32>
    %341 = vector.broadcast %340 : vector<1x256xf32> to vector<8x256xf32>
    %342 = arith.mulf %341, %321 : vector<8x256xf32>
    %343 = vector.extract_strided_slice %314 {offsets = [5, 0], sizes = [1, 256], strides = [1, 1]} : vector<8x256xf32> to vector<1x256xf32>
    %344 = vector.broadcast %343 : vector<1x256xf32> to vector<8x256xf32>
    %345 = arith.mulf %344, %321 : vector<8x256xf32>
    %346 = tpu.concatenate %342, %345 in 0 : vector<8x256xf32>, vector<8x256xf32> -> vector<16x256xf32>
    %347 = arith.truncf %346 : vector<16x256xf32> to vector<16x256xbf16>
    %c96 = arith.constant 96 : index
    %c0_102 = arith.constant 0 : index
    %348 = vector.load %arg6[%c96, %c0_102] : memref<512x256xbf16, #tpu.memory_space<vmem>>, vector<16x256xbf16>
    tpu.vector_store %arg6[%c96, %c0_102], %347 {strides = array<i32>} : memref<512x256xbf16, #tpu.memory_space<vmem>>, vector<16x256xbf16>,
    %349 = vector.extract_strided_slice %314 {offsets = [6, 0], sizes = [1, 256], strides = [1, 1]} : vector<8x256xf32> to vector<1x256xf32>
    %350 = vector.broadcast %349 : vector<1x256xf32> to vector<8x256xf32>
    %351 = arith.mulf %350, %321 : vector<8x256xf32>
    %352 = vector.extract_strided_slice %314 {offsets = [7, 0], sizes = [1, 256], strides = [1, 1]} : vector<8x256xf32> to vector<1x256xf32>
    %353 = vector.broadcast %352 : vector<1x256xf32> to vector<8x256xf32>
    %354 = arith.mulf %353, %321 : vector<8x256xf32>
    %355 = tpu.concatenate %351, %354 in 0 : vector<8x256xf32>, vector<8x256xf32> -> vector<16x256xf32>
    %356 = arith.truncf %355 : vector<16x256xf32> to vector<16x256xbf16>
    %c112 = arith.constant 112 : index
    %c0_103 = arith.constant 0 : index
    %357 = vector.load %arg6[%c112, %c0_103] : memref<512x256xbf16, #tpu.memory_space<vmem>>, vector<16x256xbf16>
    tpu.vector_store %arg6[%c112, %c0_103], %356 {strides = array<i32>} : memref<512x256xbf16, #tpu.memory_space<vmem>>, vector<16x256xbf16>,
    %c8_i32_104 = arith.constant 8 : i32
    %358 = arith.muli %arg0, %c8_i32_104 : i32
    %c2_i32_105 = arith.constant 2 : i32
    %359 = arith.addi %358, %c2_i32_105 : i32
    %c4_i32_106 = arith.constant 4 : i32
    %360 = arith.muli %359, %c4_i32_106 : i32
    %c0_i32_107 = arith.constant 0 : i32
    %361 = arith.addi %360, %c0_i32_107 : i32
    %362 = arith.index_cast %361 : i32 to index
    %363 = memref.load %arg2[%362] : memref<64xf32, #tpu.memory_space<smem>>
    %cst_108 = arith.constant 2.500000e-01 : f32
    %364 = arith.mulf %363, %cst_108 : f32
    %c1_i32_109 = arith.constant 1 : i32
    %365 = arith.addi %360, %c1_i32_109 : i32
    %366 = arith.index_cast %365 : i32 to index
    %367 = memref.load %arg2[%366] : memref<64xf32, #tpu.memory_space<smem>>
    %cst_110 = arith.constant 2.500000e-01 : f32
    %368 = arith.mulf %367, %cst_110 : f32
    %c2_i32_111 = arith.constant 2 : i32
    %369 = arith.addi %360, %c2_i32_111 : i32
    %370 = arith.index_cast %369 : i32 to index
    %371 = memref.load %arg2[%370] : memref<64xf32, #tpu.memory_space<smem>>
    %cst_112 = arith.constant 2.500000e-01 : f32
    %372 = arith.mulf %371, %cst_112 : f32
    %c3_i32_113 = arith.constant 3 : i32
    %373 = arith.addi %360, %c3_i32_113 : i32
    %374 = arith.index_cast %373 : i32 to index
    %375 = memref.load %arg2[%374] : memref<64xf32, #tpu.memory_space<smem>>
    %cst_114 = arith.constant 2.500000e-01 : f32
    %376 = arith.mulf %375, %cst_114 : f32
    %377 = arith.subf %372, %364 : f32
    %cst_115 = arith.constant 1.000000e+00 : f32
    %378 = arith.maximumf %377, %cst_115 : f32
    %cst_116 = arith.constant 0.142857149 : f32
    %379 = arith.mulf %378, %cst_116 : f32
    %380 = arith.subf %376, %368 : f32
    %cst_117 = arith.constant 1.000000e+00 : f32
    %381 = arith.maximumf %380, %cst_117 : f32
    %cst_118 = arith.constant 0.142857149 : f32
    %382 = arith.mulf %381, %cst_118 : f32
    %cst_119 = arith.constant 0.000000e+00 : f32
    %383 = vector.broadcast %cst_119 : f32 to vector<8x256xf32>
    %cst_120 = arith.constant 0.000000e+00 : f32
    %384 = vector.broadcast %cst_120 : f32 to vector<8x256xf32>
    %cst_121 = arith.constant 2.500000e-01 : f32
    %385 = vector.broadcast %cst_121 : f32 to vector<8x1xf32>
    %386 = arith.addf %3, %385 : vector<8x1xf32>
    %387 = vector.broadcast %382 : f32 to vector<8x1xf32>
    %388 = arith.mulf %386, %387 : vector<8x1xf32>
    %389 = vector.broadcast %368 : f32 to vector<8x1xf32>
    %390 = arith.addf %389, %388 : vector<8x1xf32>
    %cst_122 = arith.constant 2.500000e-01 : f32
    %391 = vector.broadcast %cst_122 : f32 to vector<8x1xf32>
    %392 = arith.addf %3, %391 : vector<8x1xf32>
    %393 = vector.broadcast %379 : f32 to vector<8x1xf32>
    %394 = arith.mulf %392, %393 : vector<8x1xf32>
    %395 = vector.broadcast %364 : f32 to vector<8x1xf32>
    %396 = arith.addf %395, %394 : vector<8x1xf32>
    %cst_123 = arith.constant -1.000000e+00 : f32
    %397 = vector.broadcast %cst_123 : f32 to vector<8x1xf32>
    %398 = arith.cmpf oge, %390, %397 : vector<8x1xf32>
    %cst_124 = arith.constant 1.600000e+01 : f32
    %399 = vector.broadcast %cst_124 : f32 to vector<8x1xf32>
    %400 = arith.cmpf ole, %390, %399 : vector<8x1xf32>
    %401 = arith.andi %398, %400 : vector<8x1xi1>
    %cst_125 = arith.constant -1.000000e+00 : f32
    %402 = vector.broadcast %cst_125 : f32 to vector<8x1xf32>
    %403 = arith.cmpf oge, %396, %402 : vector<8x1xf32>
    %cst_126 = arith.constant 1.600000e+01 : f32
    %404 = vector.broadcast %cst_126 : f32 to vector<8x1xf32>
    %405 = arith.cmpf ole, %396, %404 : vector<8x1xf32>
    %406 = arith.andi %403, %405 : vector<8x1xi1>
    %cst_127 = arith.constant 0.000000e+00 : f32
    %cst_128 = arith.constant 1.500000e+01 : f32
    %407 = vector.broadcast %cst_127 : f32 to vector<8x1xf32>
    %408 = arith.maximumf %407, %390 : vector<8x1xf32>
    %409 = vector.broadcast %cst_128 : f32 to vector<8x1xf32>
    %410 = arith.minimumf %409, %408 : vector<8x1xf32>
    %cst_129 = arith.constant 0.000000e+00 : f32
    %cst_130 = arith.constant 1.500000e+01 : f32
    %411 = vector.broadcast %cst_129 : f32 to vector<8x1xf32>
    %412 = arith.maximumf %411, %396 : vector<8x1xf32>
    %413 = vector.broadcast %cst_130 : f32 to vector<8x1xf32>
    %414 = arith.minimumf %413, %412 : vector<8x1xf32>
    %415 = vector.broadcast %410 : vector<8x1xf32> to vector<8x256xf32>
    %416 = vector.broadcast %0 : vector<1x256xf32> to vector<8x256xf32>
    %417 = arith.subf %415, %416 : vector<8x256xf32>
    %418 = math.absf %417 : vector<8x256xf32>
    %cst_131 = arith.constant 1.000000e+00 : f32
    %419 = vector.broadcast %cst_131 : f32 to vector<8x256xf32>
    %420 = arith.subf %419, %418 : vector<8x256xf32>
    %cst_132 = arith.constant 0.000000e+00 : f32
    %421 = vector.broadcast %cst_132 : f32 to vector<8x256xf32>
    %422 = arith.maximumf %420, %421 : vector<8x256xf32>
    %423 = vector.broadcast %414 : vector<8x1xf32> to vector<8x256xf32>
    %424 = vector.broadcast %1 : vector<1x256xf32> to vector<8x256xf32>
    %425 = arith.subf %423, %424 : vector<8x256xf32>
    %426 = math.absf %425 : vector<8x256xf32>
    %cst_133 = arith.constant 1.000000e+00 : f32
    %427 = vector.broadcast %cst_133 : f32 to vector<8x256xf32>
    %428 = arith.subf %427, %426 : vector<8x256xf32>
    %cst_134 = arith.constant 0.000000e+00 : f32
    %429 = vector.broadcast %cst_134 : f32 to vector<8x256xf32>
    %430 = arith.maximumf %428, %429 : vector<8x256xf32>
    %cst_135 = arith.constant 0.000000e+00 : f32
    %431 = vector.shape_cast %401 : vector<8x1xi1> to vector<8x1xi1>
    %432 = vector.broadcast %431 : vector<8x1xi1> to vector<8x256xi1>
    %433 = vector.broadcast %cst_135 : f32 to vector<8x256xf32>
    %434 = arith.select %432, %422, %433 : vector<8x256xi1>, vector<8x256xf32>
    %435 = arith.addf %383, %434 : vector<8x256xf32>
    %cst_136 = arith.constant 0.000000e+00 : f32
    %436 = vector.shape_cast %406 : vector<8x1xi1> to vector<8x1xi1>
    %437 = vector.broadcast %436 : vector<8x1xi1> to vector<8x256xi1>
    %438 = vector.broadcast %cst_136 : f32 to vector<8x256xf32>
    %439 = arith.select %437, %430, %438 : vector<8x256xi1>, vector<8x256xf32>
    %440 = arith.addf %384, %439 : vector<8x256xf32>
    %cst_137 = arith.constant 7.500000e-01 : f32
    %441 = vector.broadcast %cst_137 : f32 to vector<8x1xf32>
    %442 = arith.addf %3, %441 : vector<8x1xf32>
    %443 = vector.broadcast %382 : f32 to vector<8x1xf32>
    %444 = arith.mulf %442, %443 : vector<8x1xf32>
    %445 = vector.broadcast %368 : f32 to vector<8x1xf32>
    %446 = arith.addf %445, %444 : vector<8x1xf32>
    %cst_138 = arith.constant 7.500000e-01 : f32
    %447 = vector.broadcast %cst_138 : f32 to vector<8x1xf32>
    %448 = arith.addf %3, %447 : vector<8x1xf32>
    %449 = vector.broadcast %379 : f32 to vector<8x1xf32>
    %450 = arith.mulf %448, %449 : vector<8x1xf32>
    %451 = vector.broadcast %364 : f32 to vector<8x1xf32>
    %452 = arith.addf %451, %450 : vector<8x1xf32>
    %cst_139 = arith.constant -1.000000e+00 : f32
    %453 = vector.broadcast %cst_139 : f32 to vector<8x1xf32>
    %454 = arith.cmpf oge, %446, %453 : vector<8x1xf32>
    %cst_140 = arith.constant 1.600000e+01 : f32
    %455 = vector.broadcast %cst_140 : f32 to vector<8x1xf32>
    %456 = arith.cmpf ole, %446, %455 : vector<8x1xf32>
    %457 = arith.andi %454, %456 : vector<8x1xi1>
    %cst_141 = arith.constant -1.000000e+00 : f32
    %458 = vector.broadcast %cst_141 : f32 to vector<8x1xf32>
    %459 = arith.cmpf oge, %452, %458 : vector<8x1xf32>
    %cst_142 = arith.constant 1.600000e+01 : f32
    %460 = vector.broadcast %cst_142 : f32 to vector<8x1xf32>
    %461 = arith.cmpf ole, %452, %460 : vector<8x1xf32>
    %462 = arith.andi %459, %461 : vector<8x1xi1>
    %cst_143 = arith.constant 0.000000e+00 : f32
    %cst_144 = arith.constant 1.500000e+01 : f32
    %463 = vector.broadcast %cst_143 : f32 to vector<8x1xf32>
    %464 = arith.maximumf %463, %446 : vector<8x1xf32>
    %465 = vector.broadcast %cst_144 : f32 to vector<8x1xf32>
    %466 = arith.minimumf %465, %464 : vector<8x1xf32>
    %cst_145 = arith.constant 0.000000e+00 : f32
    %cst_146 = arith.constant 1.500000e+01 : f32
    %467 = vector.broadcast %cst_145 : f32 to vector<8x1xf32>
    %468 = arith.maximumf %467, %452 : vector<8x1xf32>
    %469 = vector.broadcast %cst_146 : f32 to vector<8x1xf32>
    %470 = arith.minimumf %469, %468 : vector<8x1xf32>
    %471 = vector.broadcast %466 : vector<8x1xf32> to vector<8x256xf32>
    %472 = vector.broadcast %0 : vector<1x256xf32> to vector<8x256xf32>
    %473 = arith.subf %471, %472 : vector<8x256xf32>
    %474 = math.absf %473 : vector<8x256xf32>
    %cst_147 = arith.constant 1.000000e+00 : f32
    %475 = vector.broadcast %cst_147 : f32 to vector<8x256xf32>
    %476 = arith.subf %475, %474 : vector<8x256xf32>
    %cst_148 = arith.constant 0.000000e+00 : f32
    %477 = vector.broadcast %cst_148 : f32 to vector<8x256xf32>
    %478 = arith.maximumf %476, %477 : vector<8x256xf32>
    %479 = vector.broadcast %470 : vector<8x1xf32> to vector<8x256xf32>
    %480 = vector.broadcast %1 : vector<1x256xf32> to vector<8x256xf32>
    %481 = arith.subf %479, %480 : vector<8x256xf32>
    %482 = math.absf %481 : vector<8x256xf32>
    %cst_149 = arith.constant 1.000000e+00 : f32
    %483 = vector.broadcast %cst_149 : f32 to vector<8x256xf32>
    %484 = arith.subf %483, %482 : vector<8x256xf32>
    %cst_150 = arith.constant 0.000000e+00 : f32
    %485 = vector.broadcast %cst_150 : f32 to vector<8x256xf32>
    %486 = arith.maximumf %484, %485 : vector<8x256xf32>
    %cst_151 = arith.constant 0.000000e+00 : f32
    %487 = vector.shape_cast %457 : vector<8x1xi1> to vector<8x1xi1>
    %488 = vector.broadcast %487 : vector<8x1xi1> to vector<8x256xi1>
    %489 = vector.broadcast %cst_151 : f32 to vector<8x256xf32>
    %490 = arith.select %488, %478, %489 : vector<8x256xi1>, vector<8x256xf32>
    %491 = arith.addf %435, %490 : vector<8x256xf32>
    %cst_152 = arith.constant 0.000000e+00 : f32
    %492 = vector.shape_cast %462 : vector<8x1xi1> to vector<8x1xi1>
    %493 = vector.broadcast %492 : vector<8x1xi1> to vector<8x256xi1>
    %494 = vector.broadcast %cst_152 : f32 to vector<8x256xf32>
    %495 = arith.select %493, %486, %494 : vector<8x256xi1>, vector<8x256xf32>
    %496 = arith.addf %440, %495 : vector<8x256xf32>
    %cst_153 = arith.constant 2.500000e-01 : f32
    %497 = vector.broadcast %cst_153 : f32 to vector<8x256xf32>
    %498 = arith.mulf %496, %497 : vector<8x256xf32>
    %499 = vector.extract_strided_slice %491 {offsets = [0, 0], sizes = [1, 256], strides = [1, 1]} : vector<8x256xf32> to vector<1x256xf32>
    %500 = vector.broadcast %499 : vector<1x256xf32> to vector<8x256xf32>
    %501 = arith.mulf %500, %498 : vector<8x256xf32>
    %502 = vector.extract_strided_slice %491 {offsets = [1, 0], sizes = [1, 256], strides = [1, 1]} : vector<8x256xf32> to vector<1x256xf32>
    %503 = vector.broadcast %502 : vector<1x256xf32> to vector<8x256xf32>
    %504 = arith.mulf %503, %498 : vector<8x256xf32>
    %505 = tpu.concatenate %501, %504 in 0 : vector<8x256xf32>, vector<8x256xf32> -> vector<16x256xf32>
    %506 = arith.truncf %505 : vector<16x256xf32> to vector<16x256xbf16>
    %c128 = arith.constant 128 : index
    %c0_154 = arith.constant 0 : index
    %507 = vector.load %arg6[%c128, %c0_154] : memref<512x256xbf16, #tpu.memory_space<vmem>>, vector<16x256xbf16>
    tpu.vector_store %arg6[%c128, %c0_154], %506 {strides = array<i32>} : memref<512x256xbf16, #tpu.memory_space<vmem>>, vector<16x256xbf16>,
    %508 = vector.extract_strided_slice %491 {offsets = [2, 0], sizes = [1, 256], strides = [1, 1]} : vector<8x256xf32> to vector<1x256xf32>
    %509 = vector.broadcast %508 : vector<1x256xf32> to vector<8x256xf32>
    %510 = arith.mulf %509, %498 : vector<8x256xf32>
    %511 = vector.extract_strided_slice %491 {offsets = [3, 0], sizes = [1, 256], strides = [1, 1]} : vector<8x256xf32> to vector<1x256xf32>
    %512 = vector.broadcast %511 : vector<1x256xf32> to vector<8x256xf32>
    %513 = arith.mulf %512, %498 : vector<8x256xf32>
    %514 = tpu.concatenate %510, %513 in 0 : vector<8x256xf32>, vector<8x256xf32> -> vector<16x256xf32>
    %515 = arith.truncf %514 : vector<16x256xf32> to vector<16x256xbf16>
    %c144 = arith.constant 144 : index
    %c0_155 = arith.constant 0 : index
    %516 = vector.load %arg6[%c144, %c0_155] : memref<512x256xbf16, #tpu.memory_space<vmem>>, vector<16x256xbf16>
    tpu.vector_store %arg6[%c144, %c0_155], %515 {strides = array<i32>} : memref<512x256xbf16, #tpu.memory_space<vmem>>, vector<16x256xbf16>,
    %517 = vector.extract_strided_slice %491 {offsets = [4, 0], sizes = [1, 256], strides = [1, 1]} : vector<8x256xf32> to vector<1x256xf32>
    %518 = vector.broadcast %517 : vector<1x256xf32> to vector<8x256xf32>
    %519 = arith.mulf %518, %498 : vector<8x256xf32>
    %520 = vector.extract_strided_slice %491 {offsets = [5, 0], sizes = [1, 256], strides = [1, 1]} : vector<8x256xf32> to vector<1x256xf32>
    %521 = vector.broadcast %520 : vector<1x256xf32> to vector<8x256xf32>
    %522 = arith.mulf %521, %498 : vector<8x256xf32>
    %523 = tpu.concatenate %519, %522 in 0 : vector<8x256xf32>, vector<8x256xf32> -> vector<16x256xf32>
    %524 = arith.truncf %523 : vector<16x256xf32> to vector<16x256xbf16>
    %c160 = arith.constant 160 : index
    %c0_156 = arith.constant 0 : index
    %525 = vector.load %arg6[%c160, %c0_156] : memref<512x256xbf16, #tpu.memory_space<vmem>>, vector<16x256xbf16>
    tpu.vector_store %arg6[%c160, %c0_156], %524 {strides = array<i32>} : memref<512x256xbf16, #tpu.memory_space<vmem>>, vector<16x256xbf16>,
    %526 = vector.extract_strided_slice %491 {offsets = [6, 0], sizes = [1, 256], strides = [1, 1]} : vector<8x256xf32> to vector<1x256xf32>
    %527 = vector.broadcast %526 : vector<1x256xf32> to vector<8x256xf32>
    %528 = arith.mulf %527, %498 : vector<8x256xf32>
    %529 = vector.extract_strided_slice %491 {offsets = [7, 0], sizes = [1, 256], strides = [1, 1]} : vector<8x256xf32> to vector<1x256xf32>
    %530 = vector.broadcast %529 : vector<1x256xf32> to vector<8x256xf32>
    %531 = arith.mulf %530, %498 : vector<8x256xf32>
    %532 = tpu.concatenate %528, %531 in 0 : vector<8x256xf32>, vector<8x256xf32> -> vector<16x256xf32>
    %533 = arith.truncf %532 : vector<16x256xf32> to vector<16x256xbf16>
    %c176 = arith.constant 176 : index
    %c0_157 = arith.constant 0 : index
    %534 = vector.load %arg6[%c176, %c0_157] : memref<512x256xbf16, #tpu.memory_space<vmem>>, vector<16x256xbf16>
    tpu.vector_store %arg6[%c176, %c0_157], %533 {strides = array<i32>} : memref<512x256xbf16, #tpu.memory_space<vmem>>, vector<16x256xbf16>,
    %c8_i32_158 = arith.constant 8 : i32
    %535 = arith.muli %arg0, %c8_i32_158 : i32
    %c3_i32_159 = arith.constant 3 : i32
    %536 = arith.addi %535, %c3_i32_159 : i32
    %c4_i32_160 = arith.constant 4 : i32
    %537 = arith.muli %536, %c4_i32_160 : i32
    %c0_i32_161 = arith.constant 0 : i32
    %538 = arith.addi %537, %c0_i32_161 : i32
    %539 = arith.index_cast %538 : i32 to index
    %540 = memref.load %arg2[%539] : memref<64xf32, #tpu.memory_space<smem>>
    %cst_162 = arith.constant 2.500000e-01 : f32
    %541 = arith.mulf %540, %cst_162 : f32
    %c1_i32_163 = arith.constant 1 : i32
    %542 = arith.addi %537, %c1_i32_163 : i32
    %543 = arith.index_cast %542 : i32 to index
    %544 = memref.load %arg2[%543] : memref<64xf32, #tpu.memory_space<smem>>
    %cst_164 = arith.constant 2.500000e-01 : f32
    %545 = arith.mulf %544, %cst_164 : f32
    %c2_i32_165 = arith.constant 2 : i32
    %546 = arith.addi %537, %c2_i32_165 : i32
    %547 = arith.index_cast %546 : i32 to index
    %548 = memref.load %arg2[%547] : memref<64xf32, #tpu.memory_space<smem>>
    %cst_166 = arith.constant 2.500000e-01 : f32
    %549 = arith.mulf %548, %cst_166 : f32
    %c3_i32_167 = arith.constant 3 : i32
    %550 = arith.addi %537, %c3_i32_167 : i32
    %551 = arith.index_cast %550 : i32 to index
    %552 = memref.load %arg2[%551] : memref<64xf32, #tpu.memory_space<smem>>
    %cst_168 = arith.constant 2.500000e-01 : f32
    %553 = arith.mulf %552, %cst_168 : f32
    %554 = arith.subf %549, %541 : f32
    %cst_169 = arith.constant 1.000000e+00 : f32
    %555 = arith.maximumf %554, %cst_169 : f32
    %cst_170 = arith.constant 0.142857149 : f32
    %556 = arith.mulf %555, %cst_170 : f32
    %557 = arith.subf %553, %545 : f32
    %cst_171 = arith.constant 1.000000e+00 : f32
    %558 = arith.maximumf %557, %cst_171 : f32
    %cst_172 = arith.constant 0.142857149 : f32
    %559 = arith.mulf %558, %cst_172 : f32
    %cst_173 = arith.constant 0.000000e+00 : f32
    %560 = vector.broadcast %cst_173 : f32 to vector<8x256xf32>
    %cst_174 = arith.constant 0.000000e+00 : f32
    %561 = vector.broadcast %cst_174 : f32 to vector<8x256xf32>
    %cst_175 = arith.constant 2.500000e-01 : f32
    %562 = vector.broadcast %cst_175 : f32 to vector<8x1xf32>
    %563 = arith.addf %3, %562 : vector<8x1xf32>
    %564 = vector.broadcast %559 : f32 to vector<8x1xf32>
    %565 = arith.mulf %563, %564 : vector<8x1xf32>
    %566 = vector.broadcast %545 : f32 to vector<8x1xf32>
    %567 = arith.addf %566, %565 : vector<8x1xf32>
    %cst_176 = arith.constant 2.500000e-01 : f32
    %568 = vector.broadcast %cst_176 : f32 to vector<8x1xf32>
    %569 = arith.addf %3, %568 : vector<8x1xf32>
    %570 = vector.broadcast %556 : f32 to vector<8x1xf32>
    %571 = arith.mulf %569, %570 : vector<8x1xf32>
    %572 = vector.broadcast %541 : f32 to vector<8x1xf32>
    %573 = arith.addf %572, %571 : vector<8x1xf32>
    %cst_177 = arith.constant -1.000000e+00 : f32
    %574 = vector.broadcast %cst_177 : f32 to vector<8x1xf32>
    %575 = arith.cmpf oge, %567, %574 : vector<8x1xf32>
    %cst_178 = arith.constant 1.600000e+01 : f32
    %576 = vector.broadcast %cst_178 : f32 to vector<8x1xf32>
    %577 = arith.cmpf ole, %567, %576 : vector<8x1xf32>
    %578 = arith.andi %575, %577 : vector<8x1xi1>
    %cst_179 = arith.constant -1.000000e+00 : f32
    %579 = vector.broadcast %cst_179 : f32 to vector<8x1xf32>
    %580 = arith.cmpf oge, %573, %579 : vector<8x1xf32>
    %cst_180 = arith.constant 1.600000e+01 : f32
    %581 = vector.broadcast %cst_180 : f32 to vector<8x1xf32>
    %582 = arith.cmpf ole, %573, %581 : vector<8x1xf32>
    %583 = arith.andi %580, %582 : vector<8x1xi1>
    %cst_181 = arith.constant 0.000000e+00 : f32
    %cst_182 = arith.constant 1.500000e+01 : f32
    %584 = vector.broadcast %cst_181 : f32 to vector<8x1xf32>
    %585 = arith.maximumf %584, %567 : vector<8x1xf32>
    %586 = vector.broadcast %cst_182 : f32 to vector<8x1xf32>
    %587 = arith.minimumf %586, %585 : vector<8x1xf32>
    %cst_183 = arith.constant 0.000000e+00 : f32
    %cst_184 = arith.constant 1.500000e+01 : f32
    %588 = vector.broadcast %cst_183 : f32 to vector<8x1xf32>
    %589 = arith.maximumf %588, %573 : vector<8x1xf32>
    %590 = vector.broadcast %cst_184 : f32 to vector<8x1xf32>
    %591 = arith.minimumf %590, %589 : vector<8x1xf32>
    %592 = vector.broadcast %587 : vector<8x1xf32> to vector<8x256xf32>
    %593 = vector.broadcast %0 : vector<1x256xf32> to vector<8x256xf32>
    %594 = arith.subf %592, %593 : vector<8x256xf32>
    %595 = math.absf %594 : vector<8x256xf32>
    %cst_185 = arith.constant 1.000000e+00 : f32
    %596 = vector.broadcast %cst_185 : f32 to vector<8x256xf32>
    %597 = arith.subf %596, %595 : vector<8x256xf32>
    %cst_186 = arith.constant 0.000000e+00 : f32
    %598 = vector.broadcast %cst_186 : f32 to vector<8x256xf32>
    %599 = arith.maximumf %597, %598 : vector<8x256xf32>
    %600 = vector.broadcast %591 : vector<8x1xf32> to vector<8x256xf32>
    %601 = vector.broadcast %1 : vector<1x256xf32> to vector<8x256xf32>
    %602 = arith.subf %600, %601 : vector<8x256xf32>
    %603 = math.absf %602 : vector<8x256xf32>
    %cst_187 = arith.constant 1.000000e+00 : f32
    %604 = vector.broadcast %cst_187 : f32 to vector<8x256xf32>
    %605 = arith.subf %604, %603 : vector<8x256xf32>
    %cst_188 = arith.constant 0.000000e+00 : f32
    %606 = vector.broadcast %cst_188 : f32 to vector<8x256xf32>
    %607 = arith.maximumf %605, %606 : vector<8x256xf32>
    %cst_189 = arith.constant 0.000000e+00 : f32
    %608 = vector.shape_cast %578 : vector<8x1xi1> to vector<8x1xi1>
    %609 = vector.broadcast %608 : vector<8x1xi1> to vector<8x256xi1>
    %610 = vector.broadcast %cst_189 : f32 to vector<8x256xf32>
    %611 = arith.select %609, %599, %610 : vector<8x256xi1>, vector<8x256xf32>
    %612 = arith.addf %560, %611 : vector<8x256xf32>
    %cst_190 = arith.constant 0.000000e+00 : f32
    %613 = vector.shape_cast %583 : vector<8x1xi1> to vector<8x1xi1>
    %614 = vector.broadcast %613 : vector<8x1xi1> to vector<8x256xi1>
    %615 = vector.broadcast %cst_190 : f32 to vector<8x256xf32>
    %616 = arith.select %614, %607, %615 : vector<8x256xi1>, vector<8x256xf32>
    %617 = arith.addf %561, %616 : vector<8x256xf32>
    %cst_191 = arith.constant 7.500000e-01 : f32
    %618 = vector.broadcast %cst_191 : f32 to vector<8x1xf32>
    %619 = arith.addf %3, %618 : vector<8x1xf32>
    %620 = vector.broadcast %559 : f32 to vector<8x1xf32>
    %621 = arith.mulf %619, %620 : vector<8x1xf32>
    %622 = vector.broadcast %545 : f32 to vector<8x1xf32>
    %623 = arith.addf %622, %621 : vector<8x1xf32>
    %cst_192 = arith.constant 7.500000e-01 : f32
    %624 = vector.broadcast %cst_192 : f32 to vector<8x1xf32>
    %625 = arith.addf %3, %624 : vector<8x1xf32>
    %626 = vector.broadcast %556 : f32 to vector<8x1xf32>
    %627 = arith.mulf %625, %626 : vector<8x1xf32>
    %628 = vector.broadcast %541 : f32 to vector<8x1xf32>
    %629 = arith.addf %628, %627 : vector<8x1xf32>
    %cst_193 = arith.constant -1.000000e+00 : f32
    %630 = vector.broadcast %cst_193 : f32 to vector<8x1xf32>
    %631 = arith.cmpf oge, %623, %630 : vector<8x1xf32>
    %cst_194 = arith.constant 1.600000e+01 : f32
    %632 = vector.broadcast %cst_194 : f32 to vector<8x1xf32>
    %633 = arith.cmpf ole, %623, %632 : vector<8x1xf32>
    %634 = arith.andi %631, %633 : vector<8x1xi1>
    %cst_195 = arith.constant -1.000000e+00 : f32
    %635 = vector.broadcast %cst_195 : f32 to vector<8x1xf32>
    %636 = arith.cmpf oge, %629, %635 : vector<8x1xf32>
    %cst_196 = arith.constant 1.600000e+01 : f32
    %637 = vector.broadcast %cst_196 : f32 to vector<8x1xf32>
    %638 = arith.cmpf ole, %629, %637 : vector<8x1xf32>
    %639 = arith.andi %636, %638 : vector<8x1xi1>
    %cst_197 = arith.constant 0.000000e+00 : f32
    %cst_198 = arith.constant 1.500000e+01 : f32
    %640 = vector.broadcast %cst_197 : f32 to vector<8x1xf32>
    %641 = arith.maximumf %640, %623 : vector<8x1xf32>
    %642 = vector.broadcast %cst_198 : f32 to vector<8x1xf32>
    %643 = arith.minimumf %642, %641 : vector<8x1xf32>
    %cst_199 = arith.constant 0.000000e+00 : f32
    %cst_200 = arith.constant 1.500000e+01 : f32
    %644 = vector.broadcast %cst_199 : f32 to vector<8x1xf32>
    %645 = arith.maximumf %644, %629 : vector<8x1xf32>
    %646 = vector.broadcast %cst_200 : f32 to vector<8x1xf32>
    %647 = arith.minimumf %646, %645 : vector<8x1xf32>
    %648 = vector.broadcast %643 : vector<8x1xf32> to vector<8x256xf32>
    %649 = vector.broadcast %0 : vector<1x256xf32> to vector<8x256xf32>
    %650 = arith.subf %648, %649 : vector<8x256xf32>
    %651 = math.absf %650 : vector<8x256xf32>
    %cst_201 = arith.constant 1.000000e+00 : f32
    %652 = vector.broadcast %cst_201 : f32 to vector<8x256xf32>
    %653 = arith.subf %652, %651 : vector<8x256xf32>
    %cst_202 = arith.constant 0.000000e+00 : f32
    %654 = vector.broadcast %cst_202 : f32 to vector<8x256xf32>
    %655 = arith.maximumf %653, %654 : vector<8x256xf32>
    %656 = vector.broadcast %647 : vector<8x1xf32> to vector<8x256xf32>
    %657 = vector.broadcast %1 : vector<1x256xf32> to vector<8x256xf32>
    %658 = arith.subf %656, %657 : vector<8x256xf32>
    %659 = math.absf %658 : vector<8x256xf32>
    %cst_203 = arith.constant 1.000000e+00 : f32
    %660 = vector.broadcast %cst_203 : f32 to vector<8x256xf32>
    %661 = arith.subf %660, %659 : vector<8x256xf32>
    %cst_204 = arith.constant 0.000000e+00 : f32
    %662 = vector.broadcast %cst_204 : f32 to vector<8x256xf32>
    %663 = arith.maximumf %661, %662 : vector<8x256xf32>
    %cst_205 = arith.constant 0.000000e+00 : f32
    %664 = vector.shape_cast %634 : vector<8x1xi1> to vector<8x1xi1>
    %665 = vector.broadcast %664 : vector<8x1xi1> to vector<8x256xi1>
    %666 = vector.broadcast %cst_205 : f32 to vector<8x256xf32>
    %667 = arith.select %665, %655, %666 : vector<8x256xi1>, vector<8x256xf32>
    %668 = arith.addf %612, %667 : vector<8x256xf32>
    %cst_206 = arith.constant 0.000000e+00 : f32
    %669 = vector.shape_cast %639 : vector<8x1xi1> to vector<8x1xi1>
    %670 = vector.broadcast %669 : vector<8x1xi1> to vector<8x256xi1>
    %671 = vector.broadcast %cst_206 : f32 to vector<8x256xf32>
    %672 = arith.select %670, %663, %671 : vector<8x256xi1>, vector<8x256xf32>
    %673 = arith.addf %617, %672 : vector<8x256xf32>
    %cst_207 = arith.constant 2.500000e-01 : f32
    %674 = vector.broadcast %cst_207 : f32 to vector<8x256xf32>
    %675 = arith.mulf %673, %674 : vector<8x256xf32>
    %676 = vector.extract_strided_slice %668 {offsets = [0, 0], sizes = [1, 256], strides = [1, 1]} : vector<8x256xf32> to vector<1x256xf32>
    %677 = vector.broadcast %676 : vector<1x256xf32> to vector<8x256xf32>
    %678 = arith.mulf %677, %675 : vector<8x256xf32>
    %679 = vector.extract_strided_slice %668 {offsets = [1, 0], sizes = [1, 256], strides = [1, 1]} : vector<8x256xf32> to vector<1x256xf32>
    %680 = vector.broadcast %679 : vector<1x256xf32> to vector<8x256xf32>
    %681 = arith.mulf %680, %675 : vector<8x256xf32>
    %682 = tpu.concatenate %678, %681 in 0 : vector<8x256xf32>, vector<8x256xf32> -> vector<16x256xf32>
    %683 = arith.truncf %682 : vector<16x256xf32> to vector<16x256xbf16>
    %c192 = arith.constant 192 : index
    %c0_208 = arith.constant 0 : index
    %684 = vector.load %arg6[%c192, %c0_208] : memref<512x256xbf16, #tpu.memory_space<vmem>>, vector<16x256xbf16>
    tpu.vector_store %arg6[%c192, %c0_208], %683 {strides = array<i32>} : memref<512x256xbf16, #tpu.memory_space<vmem>>, vector<16x256xbf16>,
    %685 = vector.extract_strided_slice %668 {offsets = [2, 0], sizes = [1, 256], strides = [1, 1]} : vector<8x256xf32> to vector<1x256xf32>
    %686 = vector.broadcast %685 : vector<1x256xf32> to vector<8x256xf32>
    %687 = arith.mulf %686, %675 : vector<8x256xf32>
    %688 = vector.extract_strided_slice %668 {offsets = [3, 0], sizes = [1, 256], strides = [1, 1]} : vector<8x256xf32> to vector<1x256xf32>
    %689 = vector.broadcast %688 : vector<1x256xf32> to vector<8x256xf32>
    %690 = arith.mulf %689, %675 : vector<8x256xf32>
    %691 = tpu.concatenate %687, %690 in 0 : vector<8x256xf32>, vector<8x256xf32> -> vector<16x256xf32>
    %692 = arith.truncf %691 : vector<16x256xf32> to vector<16x256xbf16>
    %c208 = arith.constant 208 : index
    %c0_209 = arith.constant 0 : index
    %693 = vector.load %arg6[%c208, %c0_209] : memref<512x256xbf16, #tpu.memory_space<vmem>>, vector<16x256xbf16>
    tpu.vector_store %arg6[%c208, %c0_209], %692 {strides = array<i32>} : memref<512x256xbf16, #tpu.memory_space<vmem>>, vector<16x256xbf16>,
    %694 = vector.extract_strided_slice %668 {offsets = [4, 0], sizes = [1, 256], strides = [1, 1]} : vector<8x256xf32> to vector<1x256xf32>
    %695 = vector.broadcast %694 : vector<1x256xf32> to vector<8x256xf32>
    %696 = arith.mulf %695, %675 : vector<8x256xf32>
    %697 = vector.extract_strided_slice %668 {offsets = [5, 0], sizes = [1, 256], strides = [1, 1]} : vector<8x256xf32> to vector<1x256xf32>
    %698 = vector.broadcast %697 : vector<1x256xf32> to vector<8x256xf32>
    %699 = arith.mulf %698, %675 : vector<8x256xf32>
    %700 = tpu.concatenate %696, %699 in 0 : vector<8x256xf32>, vector<8x256xf32> -> vector<16x256xf32>
    %701 = arith.truncf %700 : vector<16x256xf32> to vector<16x256xbf16>
    %c224 = arith.constant 224 : index
    %c0_210 = arith.constant 0 : index
    %702 = vector.load %arg6[%c224, %c0_210] : memref<512x256xbf16, #tpu.memory_space<vmem>>, vector<16x256xbf16>
    tpu.vector_store %arg6[%c224, %c0_210], %701 {strides = array<i32>} : memref<512x256xbf16, #tpu.memory_space<vmem>>, vector<16x256xbf16>,
    %703 = vector.extract_strided_slice %668 {offsets = [6, 0], sizes = [1, 256], strides = [1, 1]} : vector<8x256xf32> to vector<1x256xf32>
    %704 = vector.broadcast %703 : vector<1x256xf32> to vector<8x256xf32>
    %705 = arith.mulf %704, %675 : vector<8x256xf32>
    %706 = vector.extract_strided_slice %668 {offsets = [7, 0], sizes = [1, 256], strides = [1, 1]} : vector<8x256xf32> to vector<1x256xf32>
    %707 = vector.broadcast %706 : vector<1x256xf32> to vector<8x256xf32>
    %708 = arith.mulf %707, %675 : vector<8x256xf32>
    %709 = tpu.concatenate %705, %708 in 0 : vector<8x256xf32>, vector<8x256xf32> -> vector<16x256xf32>
    %710 = arith.truncf %709 : vector<16x256xf32> to vector<16x256xbf16>
    %c240 = arith.constant 240 : index
    %c0_211 = arith.constant 0 : index
    %711 = vector.load %arg6[%c240, %c0_211] : memref<512x256xbf16, #tpu.memory_space<vmem>>, vector<16x256xbf16>
    tpu.vector_store %arg6[%c240, %c0_211], %710 {strides = array<i32>} : memref<512x256xbf16, #tpu.memory_space<vmem>>, vector<16x256xbf16>,
    %c8_i32_212 = arith.constant 8 : i32
    %712 = arith.muli %arg0, %c8_i32_212 : i32
    %c4_i32_213 = arith.constant 4 : i32
    %713 = arith.addi %712, %c4_i32_213 : i32
    %c4_i32_214 = arith.constant 4 : i32
    %714 = arith.muli %713, %c4_i32_214 : i32
    %c0_i32_215 = arith.constant 0 : i32
    %715 = arith.addi %714, %c0_i32_215 : i32
    %716 = arith.index_cast %715 : i32 to index
    %717 = memref.load %arg2[%716] : memref<64xf32, #tpu.memory_space<smem>>
    %cst_216 = arith.constant 2.500000e-01 : f32
    %718 = arith.mulf %717, %cst_216 : f32
    %c1_i32_217 = arith.constant 1 : i32
    %719 = arith.addi %714, %c1_i32_217 : i32
    %720 = arith.index_cast %719 : i32 to index
    %721 = memref.load %arg2[%720] : memref<64xf32, #tpu.memory_space<smem>>
    %cst_218 = arith.constant 2.500000e-01 : f32
    %722 = arith.mulf %721, %cst_218 : f32
    %c2_i32_219 = arith.constant 2 : i32
    %723 = arith.addi %714, %c2_i32_219 : i32
    %724 = arith.index_cast %723 : i32 to index
    %725 = memref.load %arg2[%724] : memref<64xf32, #tpu.memory_space<smem>>
    %cst_220 = arith.constant 2.500000e-01 : f32
    %726 = arith.mulf %725, %cst_220 : f32
    %c3_i32_221 = arith.constant 3 : i32
    %727 = arith.addi %714, %c3_i32_221 : i32
    %728 = arith.index_cast %727 : i32 to index
    %729 = memref.load %arg2[%728] : memref<64xf32, #tpu.memory_space<smem>>
    %cst_222 = arith.constant 2.500000e-01 : f32
    %730 = arith.mulf %729, %cst_222 : f32
    %731 = arith.subf %726, %718 : f32
    %cst_223 = arith.constant 1.000000e+00 : f32
    %732 = arith.maximumf %731, %cst_223 : f32
    %cst_224 = arith.constant 0.142857149 : f32
    %733 = arith.mulf %732, %cst_224 : f32
    %734 = arith.subf %730, %722 : f32
    %cst_225 = arith.constant 1.000000e+00 : f32
    %735 = arith.maximumf %734, %cst_225 : f32
    %cst_226 = arith.constant 0.142857149 : f32
    %736 = arith.mulf %735, %cst_226 : f32
    %cst_227 = arith.constant 0.000000e+00 : f32
    %737 = vector.broadcast %cst_227 : f32 to vector<8x256xf32>
    %cst_228 = arith.constant 0.000000e+00 : f32
    %738 = vector.broadcast %cst_228 : f32 to vector<8x256xf32>
    %cst_229 = arith.constant 2.500000e-01 : f32
    %739 = vector.broadcast %cst_229 : f32 to vector<8x1xf32>
    %740 = arith.addf %3, %739 : vector<8x1xf32>
    %741 = vector.broadcast %736 : f32 to vector<8x1xf32>
    %742 = arith.mulf %740, %741 : vector<8x1xf32>
    %743 = vector.broadcast %722 : f32 to vector<8x1xf32>
    %744 = arith.addf %743, %742 : vector<8x1xf32>
    %cst_230 = arith.constant 2.500000e-01 : f32
    %745 = vector.broadcast %cst_230 : f32 to vector<8x1xf32>
    %746 = arith.addf %3, %745 : vector<8x1xf32>
    %747 = vector.broadcast %733 : f32 to vector<8x1xf32>
    %748 = arith.mulf %746, %747 : vector<8x1xf32>
    %749 = vector.broadcast %718 : f32 to vector<8x1xf32>
    %750 = arith.addf %749, %748 : vector<8x1xf32>
    %cst_231 = arith.constant -1.000000e+00 : f32
    %751 = vector.broadcast %cst_231 : f32 to vector<8x1xf32>
    %752 = arith.cmpf oge, %744, %751 : vector<8x1xf32>
    %cst_232 = arith.constant 1.600000e+01 : f32
    %753 = vector.broadcast %cst_232 : f32 to vector<8x1xf32>
    %754 = arith.cmpf ole, %744, %753 : vector<8x1xf32>
    %755 = arith.andi %752, %754 : vector<8x1xi1>
    %cst_233 = arith.constant -1.000000e+00 : f32
    %756 = vector.broadcast %cst_233 : f32 to vector<8x1xf32>
    %757 = arith.cmpf oge, %750, %756 : vector<8x1xf32>
    %cst_234 = arith.constant 1.600000e+01 : f32
    %758 = vector.broadcast %cst_234 : f32 to vector<8x1xf32>
    %759 = arith.cmpf ole, %750, %758 : vector<8x1xf32>
    %760 = arith.andi %757, %759 : vector<8x1xi1>
    %cst_235 = arith.constant 0.000000e+00 : f32
    %cst_236 = arith.constant 1.500000e+01 : f32
    %761 = vector.broadcast %cst_235 : f32 to vector<8x1xf32>
    %762 = arith.maximumf %761, %744 : vector<8x1xf32>
    %763 = vector.broadcast %cst_236 : f32 to vector<8x1xf32>
    %764 = arith.minimumf %763, %762 : vector<8x1xf32>
    %cst_237 = arith.constant 0.000000e+00 : f32
    %cst_238 = arith.constant 1.500000e+01 : f32
    %765 = vector.broadcast %cst_237 : f32 to vector<8x1xf32>
    %766 = arith.maximumf %765, %750 : vector<8x1xf32>
    %767 = vector.broadcast %cst_238 : f32 to vector<8x1xf32>
    %768 = arith.minimumf %767, %766 : vector<8x1xf32>
    %769 = vector.broadcast %764 : vector<8x1xf32> to vector<8x256xf32>
    %770 = vector.broadcast %0 : vector<1x256xf32> to vector<8x256xf32>
    %771 = arith.subf %769, %770 : vector<8x256xf32>
    %772 = math.absf %771 : vector<8x256xf32>
    %cst_239 = arith.constant 1.000000e+00 : f32
    %773 = vector.broadcast %cst_239 : f32 to vector<8x256xf32>
    %774 = arith.subf %773, %772 : vector<8x256xf32>
    %cst_240 = arith.constant 0.000000e+00 : f32
    %775 = vector.broadcast %cst_240 : f32 to vector<8x256xf32>
    %776 = arith.maximumf %774, %775 : vector<8x256xf32>
    %777 = vector.broadcast %768 : vector<8x1xf32> to vector<8x256xf32>
    %778 = vector.broadcast %1 : vector<1x256xf32> to vector<8x256xf32>
    %779 = arith.subf %777, %778 : vector<8x256xf32>
    %780 = math.absf %779 : vector<8x256xf32>
    %cst_241 = arith.constant 1.000000e+00 : f32
    %781 = vector.broadcast %cst_241 : f32 to vector<8x256xf32>
    %782 = arith.subf %781, %780 : vector<8x256xf32>
    %cst_242 = arith.constant 0.000000e+00 : f32
    %783 = vector.broadcast %cst_242 : f32 to vector<8x256xf32>
    %784 = arith.maximumf %782, %783 : vector<8x256xf32>
    %cst_243 = arith.constant 0.000000e+00 : f32
    %785 = vector.shape_cast %755 : vector<8x1xi1> to vector<8x1xi1>
    %786 = vector.broadcast %785 : vector<8x1xi1> to vector<8x256xi1>
    %787 = vector.broadcast %cst_243 : f32 to vector<8x256xf32>
    %788 = arith.select %786, %776, %787 : vector<8x256xi1>, vector<8x256xf32>
    %789 = arith.addf %737, %788 : vector<8x256xf32>
    %cst_244 = arith.constant 0.000000e+00 : f32
    %790 = vector.shape_cast %760 : vector<8x1xi1> to vector<8x1xi1>
    %791 = vector.broadcast %790 : vector<8x1xi1> to vector<8x256xi1>
    %792 = vector.broadcast %cst_244 : f32 to vector<8x256xf32>
    %793 = arith.select %791, %784, %792 : vector<8x256xi1>, vector<8x256xf32>
    %794 = arith.addf %738, %793 : vector<8x256xf32>
    %cst_245 = arith.constant 7.500000e-01 : f32
    %795 = vector.broadcast %cst_245 : f32 to vector<8x1xf32>
    %796 = arith.addf %3, %795 : vector<8x1xf32>
    %797 = vector.broadcast %736 : f32 to vector<8x1xf32>
    %798 = arith.mulf %796, %797 : vector<8x1xf32>
    %799 = vector.broadcast %722 : f32 to vector<8x1xf32>
    %800 = arith.addf %799, %798 : vector<8x1xf32>
    %cst_246 = arith.constant 7.500000e-01 : f32
    %801 = vector.broadcast %cst_246 : f32 to vector<8x1xf32>
    %802 = arith.addf %3, %801 : vector<8x1xf32>
    %803 = vector.broadcast %733 : f32 to vector<8x1xf32>
    %804 = arith.mulf %802, %803 : vector<8x1xf32>
    %805 = vector.broadcast %718 : f32 to vector<8x1xf32>
    %806 = arith.addf %805, %804 : vector<8x1xf32>
    %cst_247 = arith.constant -1.000000e+00 : f32
    %807 = vector.broadcast %cst_247 : f32 to vector<8x1xf32>
    %808 = arith.cmpf oge, %800, %807 : vector<8x1xf32>
    %cst_248 = arith.constant 1.600000e+01 : f32
    %809 = vector.broadcast %cst_248 : f32 to vector<8x1xf32>
    %810 = arith.cmpf ole, %800, %809 : vector<8x1xf32>
    %811 = arith.andi %808, %810 : vector<8x1xi1>
    %cst_249 = arith.constant -1.000000e+00 : f32
    %812 = vector.broadcast %cst_249 : f32 to vector<8x1xf32>
    %813 = arith.cmpf oge, %806, %812 : vector<8x1xf32>
    %cst_250 = arith.constant 1.600000e+01 : f32
    %814 = vector.broadcast %cst_250 : f32 to vector<8x1xf32>
    %815 = arith.cmpf ole, %806, %814 : vector<8x1xf32>
    %816 = arith.andi %813, %815 : vector<8x1xi1>
    %cst_251 = arith.constant 0.000000e+00 : f32
    %cst_252 = arith.constant 1.500000e+01 : f32
    %817 = vector.broadcast %cst_251 : f32 to vector<8x1xf32>
    %818 = arith.maximumf %817, %800 : vector<8x1xf32>
    %819 = vector.broadcast %cst_252 : f32 to vector<8x1xf32>
    %820 = arith.minimumf %819, %818 : vector<8x1xf32>
    %cst_253 = arith.constant 0.000000e+00 : f32
    %cst_254 = arith.constant 1.500000e+01 : f32
    %821 = vector.broadcast %cst_253 : f32 to vector<8x1xf32>
    %822 = arith.maximumf %821, %806 : vector<8x1xf32>
    %823 = vector.broadcast %cst_254 : f32 to vector<8x1xf32>
    %824 = arith.minimumf %823, %822 : vector<8x1xf32>
    %825 = vector.broadcast %820 : vector<8x1xf32> to vector<8x256xf32>
    %826 = vector.broadcast %0 : vector<1x256xf32> to vector<8x256xf32>
    %827 = arith.subf %825, %826 : vector<8x256xf32>
    %828 = math.absf %827 : vector<8x256xf32>
    %cst_255 = arith.constant 1.000000e+00 : f32
    %829 = vector.broadcast %cst_255 : f32 to vector<8x256xf32>
    %830 = arith.subf %829, %828 : vector<8x256xf32>
    %cst_256 = arith.constant 0.000000e+00 : f32
    %831 = vector.broadcast %cst_256 : f32 to vector<8x256xf32>
    %832 = arith.maximumf %830, %831 : vector<8x256xf32>
    %833 = vector.broadcast %824 : vector<8x1xf32> to vector<8x256xf32>
    %834 = vector.broadcast %1 : vector<1x256xf32> to vector<8x256xf32>
    %835 = arith.subf %833, %834 : vector<8x256xf32>
    %836 = math.absf %835 : vector<8x256xf32>
    %cst_257 = arith.constant 1.000000e+00 : f32
    %837 = vector.broadcast %cst_257 : f32 to vector<8x256xf32>
    %838 = arith.subf %837, %836 : vector<8x256xf32>
    %cst_258 = arith.constant 0.000000e+00 : f32
    %839 = vector.broadcast %cst_258 : f32 to vector<8x256xf32>
    %840 = arith.maximumf %838, %839 : vector<8x256xf32>
    %cst_259 = arith.constant 0.000000e+00 : f32
    %841 = vector.shape_cast %811 : vector<8x1xi1> to vector<8x1xi1>
    %842 = vector.broadcast %841 : vector<8x1xi1> to vector<8x256xi1>
    %843 = vector.broadcast %cst_259 : f32 to vector<8x256xf32>
    %844 = arith.select %842, %832, %843 : vector<8x256xi1>, vector<8x256xf32>
    %845 = arith.addf %789, %844 : vector<8x256xf32>
    %cst_260 = arith.constant 0.000000e+00 : f32
    %846 = vector.shape_cast %816 : vector<8x1xi1> to vector<8x1xi1>
    %847 = vector.broadcast %846 : vector<8x1xi1> to vector<8x256xi1>
    %848 = vector.broadcast %cst_260 : f32 to vector<8x256xf32>
    %849 = arith.select %847, %840, %848 : vector<8x256xi1>, vector<8x256xf32>
    %850 = arith.addf %794, %849 : vector<8x256xf32>
    %cst_261 = arith.constant 2.500000e-01 : f32
    %851 = vector.broadcast %cst_261 : f32 to vector<8x256xf32>
    %852 = arith.mulf %850, %851 : vector<8x256xf32>
    %853 = vector.extract_strided_slice %845 {offsets = [0, 0], sizes = [1, 256], strides = [1, 1]} : vector<8x256xf32> to vector<1x256xf32>
    %854 = vector.broadcast %853 : vector<1x256xf32> to vector<8x256xf32>
    %855 = arith.mulf %854, %852 : vector<8x256xf32>
    %856 = vector.extract_strided_slice %845 {offsets = [1, 0], sizes = [1, 256], strides = [1, 1]} : vector<8x256xf32> to vector<1x256xf32>
    %857 = vector.broadcast %856 : vector<1x256xf32> to vector<8x256xf32>
    %858 = arith.mulf %857, %852 : vector<8x256xf32>
    %859 = tpu.concatenate %855, %858 in 0 : vector<8x256xf32>, vector<8x256xf32> -> vector<16x256xf32>
    %860 = arith.truncf %859 : vector<16x256xf32> to vector<16x256xbf16>
    %c256 = arith.constant 256 : index
    %c0_262 = arith.constant 0 : index
    %861 = vector.load %arg6[%c256, %c0_262] : memref<512x256xbf16, #tpu.memory_space<vmem>>, vector<16x256xbf16>
    tpu.vector_store %arg6[%c256, %c0_262], %860 {strides = array<i32>} : memref<512x256xbf16, #tpu.memory_space<vmem>>, vector<16x256xbf16>,
    %862 = vector.extract_strided_slice %845 {offsets = [2, 0], sizes = [1, 256], strides = [1, 1]} : vector<8x256xf32> to vector<1x256xf32>
    %863 = vector.broadcast %862 : vector<1x256xf32> to vector<8x256xf32>
    %864 = arith.mulf %863, %852 : vector<8x256xf32>
    %865 = vector.extract_strided_slice %845 {offsets = [3, 0], sizes = [1, 256], strides = [1, 1]} : vector<8x256xf32> to vector<1x256xf32>
    %866 = vector.broadcast %865 : vector<1x256xf32> to vector<8x256xf32>
    %867 = arith.mulf %866, %852 : vector<8x256xf32>
    %868 = tpu.concatenate %864, %867 in 0 : vector<8x256xf32>, vector<8x256xf32> -> vector<16x256xf32>
    %869 = arith.truncf %868 : vector<16x256xf32> to vector<16x256xbf16>
    %c272 = arith.constant 272 : index
    %c0_263 = arith.constant 0 : index
    %870 = vector.load %arg6[%c272, %c0_263] : memref<512x256xbf16, #tpu.memory_space<vmem>>, vector<16x256xbf16>
    tpu.vector_store %arg6[%c272, %c0_263], %869 {strides = array<i32>} : memref<512x256xbf16, #tpu.memory_space<vmem>>, vector<16x256xbf16>,
    %871 = vector.extract_strided_slice %845 {offsets = [4, 0], sizes = [1, 256], strides = [1, 1]} : vector<8x256xf32> to vector<1x256xf32>
    %872 = vector.broadcast %871 : vector<1x256xf32> to vector<8x256xf32>
    %873 = arith.mulf %872, %852 : vector<8x256xf32>
    %874 = vector.extract_strided_slice %845 {offsets = [5, 0], sizes = [1, 256], strides = [1, 1]} : vector<8x256xf32> to vector<1x256xf32>
    %875 = vector.broadcast %874 : vector<1x256xf32> to vector<8x256xf32>
    %876 = arith.mulf %875, %852 : vector<8x256xf32>
    %877 = tpu.concatenate %873, %876 in 0 : vector<8x256xf32>, vector<8x256xf32> -> vector<16x256xf32>
    %878 = arith.truncf %877 : vector<16x256xf32> to vector<16x256xbf16>
    %c288 = arith.constant 288 : index
    %c0_264 = arith.constant 0 : index
    %879 = vector.load %arg6[%c288, %c0_264] : memref<512x256xbf16, #tpu.memory_space<vmem>>, vector<16x256xbf16>
    tpu.vector_store %arg6[%c288, %c0_264], %878 {strides = array<i32>} : memref<512x256xbf16, #tpu.memory_space<vmem>>, vector<16x256xbf16>,
    %880 = vector.extract_strided_slice %845 {offsets = [6, 0], sizes = [1, 256], strides = [1, 1]} : vector<8x256xf32> to vector<1x256xf32>
    %881 = vector.broadcast %880 : vector<1x256xf32> to vector<8x256xf32>
    %882 = arith.mulf %881, %852 : vector<8x256xf32>
    %883 = vector.extract_strided_slice %845 {offsets = [7, 0], sizes = [1, 256], strides = [1, 1]} : vector<8x256xf32> to vector<1x256xf32>
    %884 = vector.broadcast %883 : vector<1x256xf32> to vector<8x256xf32>
    %885 = arith.mulf %884, %852 : vector<8x256xf32>
    %886 = tpu.concatenate %882, %885 in 0 : vector<8x256xf32>, vector<8x256xf32> -> vector<16x256xf32>
    %887 = arith.truncf %886 : vector<16x256xf32> to vector<16x256xbf16>
    %c304 = arith.constant 304 : index
    %c0_265 = arith.constant 0 : index
    %888 = vector.load %arg6[%c304, %c0_265] : memref<512x256xbf16, #tpu.memory_space<vmem>>, vector<16x256xbf16>
    tpu.vector_store %arg6[%c304, %c0_265], %887 {strides = array<i32>} : memref<512x256xbf16, #tpu.memory_space<vmem>>, vector<16x256xbf16>,
    %c8_i32_266 = arith.constant 8 : i32
    %889 = arith.muli %arg0, %c8_i32_266 : i32
    %c5_i32 = arith.constant 5 : i32
    %890 = arith.addi %889, %c5_i32 : i32
    %c4_i32_267 = arith.constant 4 : i32
    %891 = arith.muli %890, %c4_i32_267 : i32
    %c0_i32_268 = arith.constant 0 : i32
    %892 = arith.addi %891, %c0_i32_268 : i32
    %893 = arith.index_cast %892 : i32 to index
    %894 = memref.load %arg2[%893] : memref<64xf32, #tpu.memory_space<smem>>
    %cst_269 = arith.constant 2.500000e-01 : f32
    %895 = arith.mulf %894, %cst_269 : f32
    %c1_i32_270 = arith.constant 1 : i32
    %896 = arith.addi %891, %c1_i32_270 : i32
    %897 = arith.index_cast %896 : i32 to index
    %898 = memref.load %arg2[%897] : memref<64xf32, #tpu.memory_space<smem>>
    %cst_271 = arith.constant 2.500000e-01 : f32
    %899 = arith.mulf %898, %cst_271 : f32
    %c2_i32_272 = arith.constant 2 : i32
    %900 = arith.addi %891, %c2_i32_272 : i32
    %901 = arith.index_cast %900 : i32 to index
    %902 = memref.load %arg2[%901] : memref<64xf32, #tpu.memory_space<smem>>
    %cst_273 = arith.constant 2.500000e-01 : f32
    %903 = arith.mulf %902, %cst_273 : f32
    %c3_i32_274 = arith.constant 3 : i32
    %904 = arith.addi %891, %c3_i32_274 : i32
    %905 = arith.index_cast %904 : i32 to index
    %906 = memref.load %arg2[%905] : memref<64xf32, #tpu.memory_space<smem>>
    %cst_275 = arith.constant 2.500000e-01 : f32
    %907 = arith.mulf %906, %cst_275 : f32
    %908 = arith.subf %903, %895 : f32
    %cst_276 = arith.constant 1.000000e+00 : f32
    %909 = arith.maximumf %908, %cst_276 : f32
    %cst_277 = arith.constant 0.142857149 : f32
    %910 = arith.mulf %909, %cst_277 : f32
    %911 = arith.subf %907, %899 : f32
    %cst_278 = arith.constant 1.000000e+00 : f32
    %912 = arith.maximumf %911, %cst_278 : f32
    %cst_279 = arith.constant 0.142857149 : f32
    %913 = arith.mulf %912, %cst_279 : f32
    %cst_280 = arith.constant 0.000000e+00 : f32
    %914 = vector.broadcast %cst_280 : f32 to vector<8x256xf32>
    %cst_281 = arith.constant 0.000000e+00 : f32
    %915 = vector.broadcast %cst_281 : f32 to vector<8x256xf32>
    %cst_282 = arith.constant 2.500000e-01 : f32
    %916 = vector.broadcast %cst_282 : f32 to vector<8x1xf32>
    %917 = arith.addf %3, %916 : vector<8x1xf32>
    %918 = vector.broadcast %913 : f32 to vector<8x1xf32>
    %919 = arith.mulf %917, %918 : vector<8x1xf32>
    %920 = vector.broadcast %899 : f32 to vector<8x1xf32>
    %921 = arith.addf %920, %919 : vector<8x1xf32>
    %cst_283 = arith.constant 2.500000e-01 : f32
    %922 = vector.broadcast %cst_283 : f32 to vector<8x1xf32>
    %923 = arith.addf %3, %922 : vector<8x1xf32>
    %924 = vector.broadcast %910 : f32 to vector<8x1xf32>
    %925 = arith.mulf %923, %924 : vector<8x1xf32>
    %926 = vector.broadcast %895 : f32 to vector<8x1xf32>
    %927 = arith.addf %926, %925 : vector<8x1xf32>
    %cst_284 = arith.constant -1.000000e+00 : f32
    %928 = vector.broadcast %cst_284 : f32 to vector<8x1xf32>
    %929 = arith.cmpf oge, %921, %928 : vector<8x1xf32>
    %cst_285 = arith.constant 1.600000e+01 : f32
    %930 = vector.broadcast %cst_285 : f32 to vector<8x1xf32>
    %931 = arith.cmpf ole, %921, %930 : vector<8x1xf32>
    %932 = arith.andi %929, %931 : vector<8x1xi1>
    %cst_286 = arith.constant -1.000000e+00 : f32
    %933 = vector.broadcast %cst_286 : f32 to vector<8x1xf32>
    %934 = arith.cmpf oge, %927, %933 : vector<8x1xf32>
    %cst_287 = arith.constant 1.600000e+01 : f32
    %935 = vector.broadcast %cst_287 : f32 to vector<8x1xf32>
    %936 = arith.cmpf ole, %927, %935 : vector<8x1xf32>
    %937 = arith.andi %934, %936 : vector<8x1xi1>
    %cst_288 = arith.constant 0.000000e+00 : f32
    %cst_289 = arith.constant 1.500000e+01 : f32
    %938 = vector.broadcast %cst_288 : f32 to vector<8x1xf32>
    %939 = arith.maximumf %938, %921 : vector<8x1xf32>
    %940 = vector.broadcast %cst_289 : f32 to vector<8x1xf32>
    %941 = arith.minimumf %940, %939 : vector<8x1xf32>
    %cst_290 = arith.constant 0.000000e+00 : f32
    %cst_291 = arith.constant 1.500000e+01 : f32
    %942 = vector.broadcast %cst_290 : f32 to vector<8x1xf32>
    %943 = arith.maximumf %942, %927 : vector<8x1xf32>
    %944 = vector.broadcast %cst_291 : f32 to vector<8x1xf32>
    %945 = arith.minimumf %944, %943 : vector<8x1xf32>
    %946 = vector.broadcast %941 : vector<8x1xf32> to vector<8x256xf32>
    %947 = vector.broadcast %0 : vector<1x256xf32> to vector<8x256xf32>
    %948 = arith.subf %946, %947 : vector<8x256xf32>
    %949 = math.absf %948 : vector<8x256xf32>
    %cst_292 = arith.constant 1.000000e+00 : f32
    %950 = vector.broadcast %cst_292 : f32 to vector<8x256xf32>
    %951 = arith.subf %950, %949 : vector<8x256xf32>
    %cst_293 = arith.constant 0.000000e+00 : f32
    %952 = vector.broadcast %cst_293 : f32 to vector<8x256xf32>
    %953 = arith.maximumf %951, %952 : vector<8x256xf32>
    %954 = vector.broadcast %945 : vector<8x1xf32> to vector<8x256xf32>
    %955 = vector.broadcast %1 : vector<1x256xf32> to vector<8x256xf32>
    %956 = arith.subf %954, %955 : vector<8x256xf32>
    %957 = math.absf %956 : vector<8x256xf32>
    %cst_294 = arith.constant 1.000000e+00 : f32
    %958 = vector.broadcast %cst_294 : f32 to vector<8x256xf32>
    %959 = arith.subf %958, %957 : vector<8x256xf32>
    %cst_295 = arith.constant 0.000000e+00 : f32
    %960 = vector.broadcast %cst_295 : f32 to vector<8x256xf32>
    %961 = arith.maximumf %959, %960 : vector<8x256xf32>
    %cst_296 = arith.constant 0.000000e+00 : f32
    %962 = vector.shape_cast %932 : vector<8x1xi1> to vector<8x1xi1>
    %963 = vector.broadcast %962 : vector<8x1xi1> to vector<8x256xi1>
    %964 = vector.broadcast %cst_296 : f32 to vector<8x256xf32>
    %965 = arith.select %963, %953, %964 : vector<8x256xi1>, vector<8x256xf32>
    %966 = arith.addf %914, %965 : vector<8x256xf32>
    %cst_297 = arith.constant 0.000000e+00 : f32
    %967 = vector.shape_cast %937 : vector<8x1xi1> to vector<8x1xi1>
    %968 = vector.broadcast %967 : vector<8x1xi1> to vector<8x256xi1>
    %969 = vector.broadcast %cst_297 : f32 to vector<8x256xf32>
    %970 = arith.select %968, %961, %969 : vector<8x256xi1>, vector<8x256xf32>
    %971 = arith.addf %915, %970 : vector<8x256xf32>
    %cst_298 = arith.constant 7.500000e-01 : f32
    %972 = vector.broadcast %cst_298 : f32 to vector<8x1xf32>
    %973 = arith.addf %3, %972 : vector<8x1xf32>
    %974 = vector.broadcast %913 : f32 to vector<8x1xf32>
    %975 = arith.mulf %973, %974 : vector<8x1xf32>
    %976 = vector.broadcast %899 : f32 to vector<8x1xf32>
    %977 = arith.addf %976, %975 : vector<8x1xf32>
    %cst_299 = arith.constant 7.500000e-01 : f32
    %978 = vector.broadcast %cst_299 : f32 to vector<8x1xf32>
    %979 = arith.addf %3, %978 : vector<8x1xf32>
    %980 = vector.broadcast %910 : f32 to vector<8x1xf32>
    %981 = arith.mulf %979, %980 : vector<8x1xf32>
    %982 = vector.broadcast %895 : f32 to vector<8x1xf32>
    %983 = arith.addf %982, %981 : vector<8x1xf32>
    %cst_300 = arith.constant -1.000000e+00 : f32
    %984 = vector.broadcast %cst_300 : f32 to vector<8x1xf32>
    %985 = arith.cmpf oge, %977, %984 : vector<8x1xf32>
    %cst_301 = arith.constant 1.600000e+01 : f32
    %986 = vector.broadcast %cst_301 : f32 to vector<8x1xf32>
    %987 = arith.cmpf ole, %977, %986 : vector<8x1xf32>
    %988 = arith.andi %985, %987 : vector<8x1xi1>
    %cst_302 = arith.constant -1.000000e+00 : f32
    %989 = vector.broadcast %cst_302 : f32 to vector<8x1xf32>
    %990 = arith.cmpf oge, %983, %989 : vector<8x1xf32>
    %cst_303 = arith.constant 1.600000e+01 : f32
    %991 = vector.broadcast %cst_303 : f32 to vector<8x1xf32>
    %992 = arith.cmpf ole, %983, %991 : vector<8x1xf32>
    %993 = arith.andi %990, %992 : vector<8x1xi1>
    %cst_304 = arith.constant 0.000000e+00 : f32
    %cst_305 = arith.constant 1.500000e+01 : f32
    %994 = vector.broadcast %cst_304 : f32 to vector<8x1xf32>
    %995 = arith.maximumf %994, %977 : vector<8x1xf32>
    %996 = vector.broadcast %cst_305 : f32 to vector<8x1xf32>
    %997 = arith.minimumf %996, %995 : vector<8x1xf32>
    %cst_306 = arith.constant 0.000000e+00 : f32
    %cst_307 = arith.constant 1.500000e+01 : f32
    %998 = vector.broadcast %cst_306 : f32 to vector<8x1xf32>
    %999 = arith.maximumf %998, %983 : vector<8x1xf32>
    %1000 = vector.broadcast %cst_307 : f32 to vector<8x1xf32>
    %1001 = arith.minimumf %1000, %999 : vector<8x1xf32>
    %1002 = vector.broadcast %997 : vector<8x1xf32> to vector<8x256xf32>
    %1003 = vector.broadcast %0 : vector<1x256xf32> to vector<8x256xf32>
    %1004 = arith.subf %1002, %1003 : vector<8x256xf32>
    %1005 = math.absf %1004 : vector<8x256xf32>
    %cst_308 = arith.constant 1.000000e+00 : f32
    %1006 = vector.broadcast %cst_308 : f32 to vector<8x256xf32>
    %1007 = arith.subf %1006, %1005 : vector<8x256xf32>
    %cst_309 = arith.constant 0.000000e+00 : f32
    %1008 = vector.broadcast %cst_309 : f32 to vector<8x256xf32>
    %1009 = arith.maximumf %1007, %1008 : vector<8x256xf32>
    %1010 = vector.broadcast %1001 : vector<8x1xf32> to vector<8x256xf32>
    %1011 = vector.broadcast %1 : vector<1x256xf32> to vector<8x256xf32>
    %1012 = arith.subf %1010, %1011 : vector<8x256xf32>
    %1013 = math.absf %1012 : vector<8x256xf32>
    %cst_310 = arith.constant 1.000000e+00 : f32
    %1014 = vector.broadcast %cst_310 : f32 to vector<8x256xf32>
    %1015 = arith.subf %1014, %1013 : vector<8x256xf32>
    %cst_311 = arith.constant 0.000000e+00 : f32
    %1016 = vector.broadcast %cst_311 : f32 to vector<8x256xf32>
    %1017 = arith.maximumf %1015, %1016 : vector<8x256xf32>
    %cst_312 = arith.constant 0.000000e+00 : f32
    %1018 = vector.shape_cast %988 : vector<8x1xi1> to vector<8x1xi1>
    %1019 = vector.broadcast %1018 : vector<8x1xi1> to vector<8x256xi1>
    %1020 = vector.broadcast %cst_312 : f32 to vector<8x256xf32>
    %1021 = arith.select %1019, %1009, %1020 : vector<8x256xi1>, vector<8x256xf32>
    %1022 = arith.addf %966, %1021 : vector<8x256xf32>
    %cst_313 = arith.constant 0.000000e+00 : f32
    %1023 = vector.shape_cast %993 : vector<8x1xi1> to vector<8x1xi1>
    %1024 = vector.broadcast %1023 : vector<8x1xi1> to vector<8x256xi1>
    %1025 = vector.broadcast %cst_313 : f32 to vector<8x256xf32>
    %1026 = arith.select %1024, %1017, %1025 : vector<8x256xi1>, vector<8x256xf32>
    %1027 = arith.addf %971, %1026 : vector<8x256xf32>
    %cst_314 = arith.constant 2.500000e-01 : f32
    %1028 = vector.broadcast %cst_314 : f32 to vector<8x256xf32>
    %1029 = arith.mulf %1027, %1028 : vector<8x256xf32>
    %1030 = vector.extract_strided_slice %1022 {offsets = [0, 0], sizes = [1, 256], strides = [1, 1]} : vector<8x256xf32> to vector<1x256xf32>
    %1031 = vector.broadcast %1030 : vector<1x256xf32> to vector<8x256xf32>
    %1032 = arith.mulf %1031, %1029 : vector<8x256xf32>
    %1033 = vector.extract_strided_slice %1022 {offsets = [1, 0], sizes = [1, 256], strides = [1, 1]} : vector<8x256xf32> to vector<1x256xf32>
    %1034 = vector.broadcast %1033 : vector<1x256xf32> to vector<8x256xf32>
    %1035 = arith.mulf %1034, %1029 : vector<8x256xf32>
    %1036 = tpu.concatenate %1032, %1035 in 0 : vector<8x256xf32>, vector<8x256xf32> -> vector<16x256xf32>
    %1037 = arith.truncf %1036 : vector<16x256xf32> to vector<16x256xbf16>
    %c320 = arith.constant 320 : index
    %c0_315 = arith.constant 0 : index
    %1038 = vector.load %arg6[%c320, %c0_315] : memref<512x256xbf16, #tpu.memory_space<vmem>>, vector<16x256xbf16>
    tpu.vector_store %arg6[%c320, %c0_315], %1037 {strides = array<i32>} : memref<512x256xbf16, #tpu.memory_space<vmem>>, vector<16x256xbf16>,
    %1039 = vector.extract_strided_slice %1022 {offsets = [2, 0], sizes = [1, 256], strides = [1, 1]} : vector<8x256xf32> to vector<1x256xf32>
    %1040 = vector.broadcast %1039 : vector<1x256xf32> to vector<8x256xf32>
    %1041 = arith.mulf %1040, %1029 : vector<8x256xf32>
    %1042 = vector.extract_strided_slice %1022 {offsets = [3, 0], sizes = [1, 256], strides = [1, 1]} : vector<8x256xf32> to vector<1x256xf32>
    %1043 = vector.broadcast %1042 : vector<1x256xf32> to vector<8x256xf32>
    %1044 = arith.mulf %1043, %1029 : vector<8x256xf32>
    %1045 = tpu.concatenate %1041, %1044 in 0 : vector<8x256xf32>, vector<8x256xf32> -> vector<16x256xf32>
    %1046 = arith.truncf %1045 : vector<16x256xf32> to vector<16x256xbf16>
    %c336 = arith.constant 336 : index
    %c0_316 = arith.constant 0 : index
    %1047 = vector.load %arg6[%c336, %c0_316] : memref<512x256xbf16, #tpu.memory_space<vmem>>, vector<16x256xbf16>
    tpu.vector_store %arg6[%c336, %c0_316], %1046 {strides = array<i32>} : memref<512x256xbf16, #tpu.memory_space<vmem>>, vector<16x256xbf16>,
    %1048 = vector.extract_strided_slice %1022 {offsets = [4, 0], sizes = [1, 256], strides = [1, 1]} : vector<8x256xf32> to vector<1x256xf32>
    %1049 = vector.broadcast %1048 : vector<1x256xf32> to vector<8x256xf32>
    %1050 = arith.mulf %1049, %1029 : vector<8x256xf32>
    %1051 = vector.extract_strided_slice %1022 {offsets = [5, 0], sizes = [1, 256], strides = [1, 1]} : vector<8x256xf32> to vector<1x256xf32>
    %1052 = vector.broadcast %1051 : vector<1x256xf32> to vector<8x256xf32>
    %1053 = arith.mulf %1052, %1029 : vector<8x256xf32>
    %1054 = tpu.concatenate %1050, %1053 in 0 : vector<8x256xf32>, vector<8x256xf32> -> vector<16x256xf32>
    %1055 = arith.truncf %1054 : vector<16x256xf32> to vector<16x256xbf16>
    %c352 = arith.constant 352 : index
    %c0_317 = arith.constant 0 : index
    %1056 = vector.load %arg6[%c352, %c0_317] : memref<512x256xbf16, #tpu.memory_space<vmem>>, vector<16x256xbf16>
    tpu.vector_store %arg6[%c352, %c0_317], %1055 {strides = array<i32>} : memref<512x256xbf16, #tpu.memory_space<vmem>>, vector<16x256xbf16>,
    %1057 = vector.extract_strided_slice %1022 {offsets = [6, 0], sizes = [1, 256], strides = [1, 1]} : vector<8x256xf32> to vector<1x256xf32>
    %1058 = vector.broadcast %1057 : vector<1x256xf32> to vector<8x256xf32>
    %1059 = arith.mulf %1058, %1029 : vector<8x256xf32>
    %1060 = vector.extract_strided_slice %1022 {offsets = [7, 0], sizes = [1, 256], strides = [1, 1]} : vector<8x256xf32> to vector<1x256xf32>
    %1061 = vector.broadcast %1060 : vector<1x256xf32> to vector<8x256xf32>
    %1062 = arith.mulf %1061, %1029 : vector<8x256xf32>
    %1063 = tpu.concatenate %1059, %1062 in 0 : vector<8x256xf32>, vector<8x256xf32> -> vector<16x256xf32>
    %1064 = arith.truncf %1063 : vector<16x256xf32> to vector<16x256xbf16>
    %c368 = arith.constant 368 : index
    %c0_318 = arith.constant 0 : index
    %1065 = vector.load %arg6[%c368, %c0_318] : memref<512x256xbf16, #tpu.memory_space<vmem>>, vector<16x256xbf16>
    tpu.vector_store %arg6[%c368, %c0_318], %1064 {strides = array<i32>} : memref<512x256xbf16, #tpu.memory_space<vmem>>, vector<16x256xbf16>,
    %c8_i32_319 = arith.constant 8 : i32
    %1066 = arith.muli %arg0, %c8_i32_319 : i32
    %c6_i32 = arith.constant 6 : i32
    %1067 = arith.addi %1066, %c6_i32 : i32
    %c4_i32_320 = arith.constant 4 : i32
    %1068 = arith.muli %1067, %c4_i32_320 : i32
    %c0_i32_321 = arith.constant 0 : i32
    %1069 = arith.addi %1068, %c0_i32_321 : i32
    %1070 = arith.index_cast %1069 : i32 to index
    %1071 = memref.load %arg2[%1070] : memref<64xf32, #tpu.memory_space<smem>>
    %cst_322 = arith.constant 2.500000e-01 : f32
    %1072 = arith.mulf %1071, %cst_322 : f32
    %c1_i32_323 = arith.constant 1 : i32
    %1073 = arith.addi %1068, %c1_i32_323 : i32
    %1074 = arith.index_cast %1073 : i32 to index
    %1075 = memref.load %arg2[%1074] : memref<64xf32, #tpu.memory_space<smem>>
    %cst_324 = arith.constant 2.500000e-01 : f32
    %1076 = arith.mulf %1075, %cst_324 : f32
    %c2_i32_325 = arith.constant 2 : i32
    %1077 = arith.addi %1068, %c2_i32_325 : i32
    %1078 = arith.index_cast %1077 : i32 to index
    %1079 = memref.load %arg2[%1078] : memref<64xf32, #tpu.memory_space<smem>>
    %cst_326 = arith.constant 2.500000e-01 : f32
    %1080 = arith.mulf %1079, %cst_326 : f32
    %c3_i32_327 = arith.constant 3 : i32
    %1081 = arith.addi %1068, %c3_i32_327 : i32
    %1082 = arith.index_cast %1081 : i32 to index
    %1083 = memref.load %arg2[%1082] : memref<64xf32, #tpu.memory_space<smem>>
    %cst_328 = arith.constant 2.500000e-01 : f32
    %1084 = arith.mulf %1083, %cst_328 : f32
    %1085 = arith.subf %1080, %1072 : f32
    %cst_329 = arith.constant 1.000000e+00 : f32
    %1086 = arith.maximumf %1085, %cst_329 : f32
    %cst_330 = arith.constant 0.142857149 : f32
    %1087 = arith.mulf %1086, %cst_330 : f32
    %1088 = arith.subf %1084, %1076 : f32
    %cst_331 = arith.constant 1.000000e+00 : f32
    %1089 = arith.maximumf %1088, %cst_331 : f32
    %cst_332 = arith.constant 0.142857149 : f32
    %1090 = arith.mulf %1089, %cst_332 : f32
    %cst_333 = arith.constant 0.000000e+00 : f32
    %1091 = vector.broadcast %cst_333 : f32 to vector<8x256xf32>
    %cst_334 = arith.constant 0.000000e+00 : f32
    %1092 = vector.broadcast %cst_334 : f32 to vector<8x256xf32>
    %cst_335 = arith.constant 2.500000e-01 : f32
    %1093 = vector.broadcast %cst_335 : f32 to vector<8x1xf32>
    %1094 = arith.addf %3, %1093 : vector<8x1xf32>
    %1095 = vector.broadcast %1090 : f32 to vector<8x1xf32>
    %1096 = arith.mulf %1094, %1095 : vector<8x1xf32>
    %1097 = vector.broadcast %1076 : f32 to vector<8x1xf32>
    %1098 = arith.addf %1097, %1096 : vector<8x1xf32>
    %cst_336 = arith.constant 2.500000e-01 : f32
    %1099 = vector.broadcast %cst_336 : f32 to vector<8x1xf32>
    %1100 = arith.addf %3, %1099 : vector<8x1xf32>
    %1101 = vector.broadcast %1087 : f32 to vector<8x1xf32>
    %1102 = arith.mulf %1100, %1101 : vector<8x1xf32>
    %1103 = vector.broadcast %1072 : f32 to vector<8x1xf32>
    %1104 = arith.addf %1103, %1102 : vector<8x1xf32>
    %cst_337 = arith.constant -1.000000e+00 : f32
    %1105 = vector.broadcast %cst_337 : f32 to vector<8x1xf32>
    %1106 = arith.cmpf oge, %1098, %1105 : vector<8x1xf32>
    %cst_338 = arith.constant 1.600000e+01 : f32
    %1107 = vector.broadcast %cst_338 : f32 to vector<8x1xf32>
    %1108 = arith.cmpf ole, %1098, %1107 : vector<8x1xf32>
    %1109 = arith.andi %1106, %1108 : vector<8x1xi1>
    %cst_339 = arith.constant -1.000000e+00 : f32
    %1110 = vector.broadcast %cst_339 : f32 to vector<8x1xf32>
    %1111 = arith.cmpf oge, %1104, %1110 : vector<8x1xf32>
    %cst_340 = arith.constant 1.600000e+01 : f32
    %1112 = vector.broadcast %cst_340 : f32 to vector<8x1xf32>
    %1113 = arith.cmpf ole, %1104, %1112 : vector<8x1xf32>
    %1114 = arith.andi %1111, %1113 : vector<8x1xi1>
    %cst_341 = arith.constant 0.000000e+00 : f32
    %cst_342 = arith.constant 1.500000e+01 : f32
    %1115 = vector.broadcast %cst_341 : f32 to vector<8x1xf32>
    %1116 = arith.maximumf %1115, %1098 : vector<8x1xf32>
    %1117 = vector.broadcast %cst_342 : f32 to vector<8x1xf32>
    %1118 = arith.minimumf %1117, %1116 : vector<8x1xf32>
    %cst_343 = arith.constant 0.000000e+00 : f32
    %cst_344 = arith.constant 1.500000e+01 : f32
    %1119 = vector.broadcast %cst_343 : f32 to vector<8x1xf32>
    %1120 = arith.maximumf %1119, %1104 : vector<8x1xf32>
    %1121 = vector.broadcast %cst_344 : f32 to vector<8x1xf32>
    %1122 = arith.minimumf %1121, %1120 : vector<8x1xf32>
    %1123 = vector.broadcast %1118 : vector<8x1xf32> to vector<8x256xf32>
    %1124 = vector.broadcast %0 : vector<1x256xf32> to vector<8x256xf32>
    %1125 = arith.subf %1123, %1124 : vector<8x256xf32>
    %1126 = math.absf %1125 : vector<8x256xf32>
    %cst_345 = arith.constant 1.000000e+00 : f32
    %1127 = vector.broadcast %cst_345 : f32 to vector<8x256xf32>
    %1128 = arith.subf %1127, %1126 : vector<8x256xf32>
    %cst_346 = arith.constant 0.000000e+00 : f32
    %1129 = vector.broadcast %cst_346 : f32 to vector<8x256xf32>
    %1130 = arith.maximumf %1128, %1129 : vector<8x256xf32>
    %1131 = vector.broadcast %1122 : vector<8x1xf32> to vector<8x256xf32>
    %1132 = vector.broadcast %1 : vector<1x256xf32> to vector<8x256xf32>
    %1133 = arith.subf %1131, %1132 : vector<8x256xf32>
    %1134 = math.absf %1133 : vector<8x256xf32>
    %cst_347 = arith.constant 1.000000e+00 : f32
    %1135 = vector.broadcast %cst_347 : f32 to vector<8x256xf32>
    %1136 = arith.subf %1135, %1134 : vector<8x256xf32>
    %cst_348 = arith.constant 0.000000e+00 : f32
    %1137 = vector.broadcast %cst_348 : f32 to vector<8x256xf32>
    %1138 = arith.maximumf %1136, %1137 : vector<8x256xf32>
    %cst_349 = arith.constant 0.000000e+00 : f32
    %1139 = vector.shape_cast %1109 : vector<8x1xi1> to vector<8x1xi1>
    %1140 = vector.broadcast %1139 : vector<8x1xi1> to vector<8x256xi1>
    %1141 = vector.broadcast %cst_349 : f32 to vector<8x256xf32>
    %1142 = arith.select %1140, %1130, %1141 : vector<8x256xi1>, vector<8x256xf32>
    %1143 = arith.addf %1091, %1142 : vector<8x256xf32>
    %cst_350 = arith.constant 0.000000e+00 : f32
    %1144 = vector.shape_cast %1114 : vector<8x1xi1> to vector<8x1xi1>
    %1145 = vector.broadcast %1144 : vector<8x1xi1> to vector<8x256xi1>
    %1146 = vector.broadcast %cst_350 : f32 to vector<8x256xf32>
    %1147 = arith.select %1145, %1138, %1146 : vector<8x256xi1>, vector<8x256xf32>
    %1148 = arith.addf %1092, %1147 : vector<8x256xf32>
    %cst_351 = arith.constant 7.500000e-01 : f32
    %1149 = vector.broadcast %cst_351 : f32 to vector<8x1xf32>
    %1150 = arith.addf %3, %1149 : vector<8x1xf32>
    %1151 = vector.broadcast %1090 : f32 to vector<8x1xf32>
    %1152 = arith.mulf %1150, %1151 : vector<8x1xf32>
    %1153 = vector.broadcast %1076 : f32 to vector<8x1xf32>
    %1154 = arith.addf %1153, %1152 : vector<8x1xf32>
    %cst_352 = arith.constant 7.500000e-01 : f32
    %1155 = vector.broadcast %cst_352 : f32 to vector<8x1xf32>
    %1156 = arith.addf %3, %1155 : vector<8x1xf32>
    %1157 = vector.broadcast %1087 : f32 to vector<8x1xf32>
    %1158 = arith.mulf %1156, %1157 : vector<8x1xf32>
    %1159 = vector.broadcast %1072 : f32 to vector<8x1xf32>
    %1160 = arith.addf %1159, %1158 : vector<8x1xf32>
    %cst_353 = arith.constant -1.000000e+00 : f32
    %1161 = vector.broadcast %cst_353 : f32 to vector<8x1xf32>
    %1162 = arith.cmpf oge, %1154, %1161 : vector<8x1xf32>
    %cst_354 = arith.constant 1.600000e+01 : f32
    %1163 = vector.broadcast %cst_354 : f32 to vector<8x1xf32>
    %1164 = arith.cmpf ole, %1154, %1163 : vector<8x1xf32>
    %1165 = arith.andi %1162, %1164 : vector<8x1xi1>
    %cst_355 = arith.constant -1.000000e+00 : f32
    %1166 = vector.broadcast %cst_355 : f32 to vector<8x1xf32>
    %1167 = arith.cmpf oge, %1160, %1166 : vector<8x1xf32>
    %cst_356 = arith.constant 1.600000e+01 : f32
    %1168 = vector.broadcast %cst_356 : f32 to vector<8x1xf32>
    %1169 = arith.cmpf ole, %1160, %1168 : vector<8x1xf32>
    %1170 = arith.andi %1167, %1169 : vector<8x1xi1>
    %cst_357 = arith.constant 0.000000e+00 : f32
    %cst_358 = arith.constant 1.500000e+01 : f32
    %1171 = vector.broadcast %cst_357 : f32 to vector<8x1xf32>
    %1172 = arith.maximumf %1171, %1154 : vector<8x1xf32>
    %1173 = vector.broadcast %cst_358 : f32 to vector<8x1xf32>
    %1174 = arith.minimumf %1173, %1172 : vector<8x1xf32>
    %cst_359 = arith.constant 0.000000e+00 : f32
    %cst_360 = arith.constant 1.500000e+01 : f32
    %1175 = vector.broadcast %cst_359 : f32 to vector<8x1xf32>
    %1176 = arith.maximumf %1175, %1160 : vector<8x1xf32>
    %1177 = vector.broadcast %cst_360 : f32 to vector<8x1xf32>
    %1178 = arith.minimumf %1177, %1176 : vector<8x1xf32>
    %1179 = vector.broadcast %1174 : vector<8x1xf32> to vector<8x256xf32>
    %1180 = vector.broadcast %0 : vector<1x256xf32> to vector<8x256xf32>
    %1181 = arith.subf %1179, %1180 : vector<8x256xf32>
    %1182 = math.absf %1181 : vector<8x256xf32>
    %cst_361 = arith.constant 1.000000e+00 : f32
    %1183 = vector.broadcast %cst_361 : f32 to vector<8x256xf32>
    %1184 = arith.subf %1183, %1182 : vector<8x256xf32>
    %cst_362 = arith.constant 0.000000e+00 : f32
    %1185 = vector.broadcast %cst_362 : f32 to vector<8x256xf32>
    %1186 = arith.maximumf %1184, %1185 : vector<8x256xf32>
    %1187 = vector.broadcast %1178 : vector<8x1xf32> to vector<8x256xf32>
    %1188 = vector.broadcast %1 : vector<1x256xf32> to vector<8x256xf32>
    %1189 = arith.subf %1187, %1188 : vector<8x256xf32>
    %1190 = math.absf %1189 : vector<8x256xf32>
    %cst_363 = arith.constant 1.000000e+00 : f32
    %1191 = vector.broadcast %cst_363 : f32 to vector<8x256xf32>
    %1192 = arith.subf %1191, %1190 : vector<8x256xf32>
    %cst_364 = arith.constant 0.000000e+00 : f32
    %1193 = vector.broadcast %cst_364 : f32 to vector<8x256xf32>
    %1194 = arith.maximumf %1192, %1193 : vector<8x256xf32>
    %cst_365 = arith.constant 0.000000e+00 : f32
    %1195 = vector.shape_cast %1165 : vector<8x1xi1> to vector<8x1xi1>
    %1196 = vector.broadcast %1195 : vector<8x1xi1> to vector<8x256xi1>
    %1197 = vector.broadcast %cst_365 : f32 to vector<8x256xf32>
    %1198 = arith.select %1196, %1186, %1197 : vector<8x256xi1>, vector<8x256xf32>
    %1199 = arith.addf %1143, %1198 : vector<8x256xf32>
    %cst_366 = arith.constant 0.000000e+00 : f32
    %1200 = vector.shape_cast %1170 : vector<8x1xi1> to vector<8x1xi1>
    %1201 = vector.broadcast %1200 : vector<8x1xi1> to vector<8x256xi1>
    %1202 = vector.broadcast %cst_366 : f32 to vector<8x256xf32>
    %1203 = arith.select %1201, %1194, %1202 : vector<8x256xi1>, vector<8x256xf32>
    %1204 = arith.addf %1148, %1203 : vector<8x256xf32>
    %cst_367 = arith.constant 2.500000e-01 : f32
    %1205 = vector.broadcast %cst_367 : f32 to vector<8x256xf32>
    %1206 = arith.mulf %1204, %1205 : vector<8x256xf32>
    %1207 = vector.extract_strided_slice %1199 {offsets = [0, 0], sizes = [1, 256], strides = [1, 1]} : vector<8x256xf32> to vector<1x256xf32>
    %1208 = vector.broadcast %1207 : vector<1x256xf32> to vector<8x256xf32>
    %1209 = arith.mulf %1208, %1206 : vector<8x256xf32>
    %1210 = vector.extract_strided_slice %1199 {offsets = [1, 0], sizes = [1, 256], strides = [1, 1]} : vector<8x256xf32> to vector<1x256xf32>
    %1211 = vector.broadcast %1210 : vector<1x256xf32> to vector<8x256xf32>
    %1212 = arith.mulf %1211, %1206 : vector<8x256xf32>
    %1213 = tpu.concatenate %1209, %1212 in 0 : vector<8x256xf32>, vector<8x256xf32> -> vector<16x256xf32>
    %1214 = arith.truncf %1213 : vector<16x256xf32> to vector<16x256xbf16>
    %c384 = arith.constant 384 : index
    %c0_368 = arith.constant 0 : index
    %1215 = vector.load %arg6[%c384, %c0_368] : memref<512x256xbf16, #tpu.memory_space<vmem>>, vector<16x256xbf16>
    tpu.vector_store %arg6[%c384, %c0_368], %1214 {strides = array<i32>} : memref<512x256xbf16, #tpu.memory_space<vmem>>, vector<16x256xbf16>,
    %1216 = vector.extract_strided_slice %1199 {offsets = [2, 0], sizes = [1, 256], strides = [1, 1]} : vector<8x256xf32> to vector<1x256xf32>
    %1217 = vector.broadcast %1216 : vector<1x256xf32> to vector<8x256xf32>
    %1218 = arith.mulf %1217, %1206 : vector<8x256xf32>
    %1219 = vector.extract_strided_slice %1199 {offsets = [3, 0], sizes = [1, 256], strides = [1, 1]} : vector<8x256xf32> to vector<1x256xf32>
    %1220 = vector.broadcast %1219 : vector<1x256xf32> to vector<8x256xf32>
    %1221 = arith.mulf %1220, %1206 : vector<8x256xf32>
    %1222 = tpu.concatenate %1218, %1221 in 0 : vector<8x256xf32>, vector<8x256xf32> -> vector<16x256xf32>
    %1223 = arith.truncf %1222 : vector<16x256xf32> to vector<16x256xbf16>
    %c400 = arith.constant 400 : index
    %c0_369 = arith.constant 0 : index
    %1224 = vector.load %arg6[%c400, %c0_369] : memref<512x256xbf16, #tpu.memory_space<vmem>>, vector<16x256xbf16>
    tpu.vector_store %arg6[%c400, %c0_369], %1223 {strides = array<i32>} : memref<512x256xbf16, #tpu.memory_space<vmem>>, vector<16x256xbf16>,
    %1225 = vector.extract_strided_slice %1199 {offsets = [4, 0], sizes = [1, 256], strides = [1, 1]} : vector<8x256xf32> to vector<1x256xf32>
    %1226 = vector.broadcast %1225 : vector<1x256xf32> to vector<8x256xf32>
    %1227 = arith.mulf %1226, %1206 : vector<8x256xf32>
    %1228 = vector.extract_strided_slice %1199 {offsets = [5, 0], sizes = [1, 256], strides = [1, 1]} : vector<8x256xf32> to vector<1x256xf32>
    %1229 = vector.broadcast %1228 : vector<1x256xf32> to vector<8x256xf32>
    %1230 = arith.mulf %1229, %1206 : vector<8x256xf32>
    %1231 = tpu.concatenate %1227, %1230 in 0 : vector<8x256xf32>, vector<8x256xf32> -> vector<16x256xf32>
    %1232 = arith.truncf %1231 : vector<16x256xf32> to vector<16x256xbf16>
    %c416 = arith.constant 416 : index
    %c0_370 = arith.constant 0 : index
    %1233 = vector.load %arg6[%c416, %c0_370] : memref<512x256xbf16, #tpu.memory_space<vmem>>, vector<16x256xbf16>
    tpu.vector_store %arg6[%c416, %c0_370], %1232 {strides = array<i32>} : memref<512x256xbf16, #tpu.memory_space<vmem>>, vector<16x256xbf16>,
    %1234 = vector.extract_strided_slice %1199 {offsets = [6, 0], sizes = [1, 256], strides = [1, 1]} : vector<8x256xf32> to vector<1x256xf32>
    %1235 = vector.broadcast %1234 : vector<1x256xf32> to vector<8x256xf32>
    %1236 = arith.mulf %1235, %1206 : vector<8x256xf32>
    %1237 = vector.extract_strided_slice %1199 {offsets = [7, 0], sizes = [1, 256], strides = [1, 1]} : vector<8x256xf32> to vector<1x256xf32>
    %1238 = vector.broadcast %1237 : vector<1x256xf32> to vector<8x256xf32>
    %1239 = arith.mulf %1238, %1206 : vector<8x256xf32>
    %1240 = tpu.concatenate %1236, %1239 in 0 : vector<8x256xf32>, vector<8x256xf32> -> vector<16x256xf32>
    %1241 = arith.truncf %1240 : vector<16x256xf32> to vector<16x256xbf16>
    %c432 = arith.constant 432 : index
    %c0_371 = arith.constant 0 : index
    %1242 = vector.load %arg6[%c432, %c0_371] : memref<512x256xbf16, #tpu.memory_space<vmem>>, vector<16x256xbf16>
    tpu.vector_store %arg6[%c432, %c0_371], %1241 {strides = array<i32>} : memref<512x256xbf16, #tpu.memory_space<vmem>>, vector<16x256xbf16>,
    %c8_i32_372 = arith.constant 8 : i32
    %1243 = arith.muli %arg0, %c8_i32_372 : i32
    %c7_i32 = arith.constant 7 : i32
    %1244 = arith.addi %1243, %c7_i32 : i32
    %c4_i32_373 = arith.constant 4 : i32
    %1245 = arith.muli %1244, %c4_i32_373 : i32
    %c0_i32_374 = arith.constant 0 : i32
    %1246 = arith.addi %1245, %c0_i32_374 : i32
    %1247 = arith.index_cast %1246 : i32 to index
    %1248 = memref.load %arg2[%1247] : memref<64xf32, #tpu.memory_space<smem>>
    %cst_375 = arith.constant 2.500000e-01 : f32
    %1249 = arith.mulf %1248, %cst_375 : f32
    %c1_i32_376 = arith.constant 1 : i32
    %1250 = arith.addi %1245, %c1_i32_376 : i32
    %1251 = arith.index_cast %1250 : i32 to index
    %1252 = memref.load %arg2[%1251] : memref<64xf32, #tpu.memory_space<smem>>
    %cst_377 = arith.constant 2.500000e-01 : f32
    %1253 = arith.mulf %1252, %cst_377 : f32
    %c2_i32_378 = arith.constant 2 : i32
    %1254 = arith.addi %1245, %c2_i32_378 : i32
    %1255 = arith.index_cast %1254 : i32 to index
    %1256 = memref.load %arg2[%1255] : memref<64xf32, #tpu.memory_space<smem>>
    %cst_379 = arith.constant 2.500000e-01 : f32
    %1257 = arith.mulf %1256, %cst_379 : f32
    %c3_i32_380 = arith.constant 3 : i32
    %1258 = arith.addi %1245, %c3_i32_380 : i32
    %1259 = arith.index_cast %1258 : i32 to index
    %1260 = memref.load %arg2[%1259] : memref<64xf32, #tpu.memory_space<smem>>
    %cst_381 = arith.constant 2.500000e-01 : f32
    %1261 = arith.mulf %1260, %cst_381 : f32
    %1262 = arith.subf %1257, %1249 : f32
    %cst_382 = arith.constant 1.000000e+00 : f32
    %1263 = arith.maximumf %1262, %cst_382 : f32
    %cst_383 = arith.constant 0.142857149 : f32
    %1264 = arith.mulf %1263, %cst_383 : f32
    %1265 = arith.subf %1261, %1253 : f32
    %cst_384 = arith.constant 1.000000e+00 : f32
    %1266 = arith.maximumf %1265, %cst_384 : f32
    %cst_385 = arith.constant 0.142857149 : f32
    %1267 = arith.mulf %1266, %cst_385 : f32
    %cst_386 = arith.constant 0.000000e+00 : f32
    %1268 = vector.broadcast %cst_386 : f32 to vector<8x256xf32>
    %cst_387 = arith.constant 0.000000e+00 : f32
    %1269 = vector.broadcast %cst_387 : f32 to vector<8x256xf32>
    %cst_388 = arith.constant 2.500000e-01 : f32
    %1270 = vector.broadcast %cst_388 : f32 to vector<8x1xf32>
    %1271 = arith.addf %3, %1270 : vector<8x1xf32>
    %1272 = vector.broadcast %1267 : f32 to vector<8x1xf32>
    %1273 = arith.mulf %1271, %1272 : vector<8x1xf32>
    %1274 = vector.broadcast %1253 : f32 to vector<8x1xf32>
    %1275 = arith.addf %1274, %1273 : vector<8x1xf32>
    %cst_389 = arith.constant 2.500000e-01 : f32
    %1276 = vector.broadcast %cst_389 : f32 to vector<8x1xf32>
    %1277 = arith.addf %3, %1276 : vector<8x1xf32>
    %1278 = vector.broadcast %1264 : f32 to vector<8x1xf32>
    %1279 = arith.mulf %1277, %1278 : vector<8x1xf32>
    %1280 = vector.broadcast %1249 : f32 to vector<8x1xf32>
    %1281 = arith.addf %1280, %1279 : vector<8x1xf32>
    %cst_390 = arith.constant -1.000000e+00 : f32
    %1282 = vector.broadcast %cst_390 : f32 to vector<8x1xf32>
    %1283 = arith.cmpf oge, %1275, %1282 : vector<8x1xf32>
    %cst_391 = arith.constant 1.600000e+01 : f32
    %1284 = vector.broadcast %cst_391 : f32 to vector<8x1xf32>
    %1285 = arith.cmpf ole, %1275, %1284 : vector<8x1xf32>
    %1286 = arith.andi %1283, %1285 : vector<8x1xi1>
    %cst_392 = arith.constant -1.000000e+00 : f32
    %1287 = vector.broadcast %cst_392 : f32 to vector<8x1xf32>
    %1288 = arith.cmpf oge, %1281, %1287 : vector<8x1xf32>
    %cst_393 = arith.constant 1.600000e+01 : f32
    %1289 = vector.broadcast %cst_393 : f32 to vector<8x1xf32>
    %1290 = arith.cmpf ole, %1281, %1289 : vector<8x1xf32>
    %1291 = arith.andi %1288, %1290 : vector<8x1xi1>
    %cst_394 = arith.constant 0.000000e+00 : f32
    %cst_395 = arith.constant 1.500000e+01 : f32
    %1292 = vector.broadcast %cst_394 : f32 to vector<8x1xf32>
    %1293 = arith.maximumf %1292, %1275 : vector<8x1xf32>
    %1294 = vector.broadcast %cst_395 : f32 to vector<8x1xf32>
    %1295 = arith.minimumf %1294, %1293 : vector<8x1xf32>
    %cst_396 = arith.constant 0.000000e+00 : f32
    %cst_397 = arith.constant 1.500000e+01 : f32
    %1296 = vector.broadcast %cst_396 : f32 to vector<8x1xf32>
    %1297 = arith.maximumf %1296, %1281 : vector<8x1xf32>
    %1298 = vector.broadcast %cst_397 : f32 to vector<8x1xf32>
    %1299 = arith.minimumf %1298, %1297 : vector<8x1xf32>
    %1300 = vector.broadcast %1295 : vector<8x1xf32> to vector<8x256xf32>
    %1301 = vector.broadcast %0 : vector<1x256xf32> to vector<8x256xf32>
    %1302 = arith.subf %1300, %1301 : vector<8x256xf32>
    %1303 = math.absf %1302 : vector<8x256xf32>
    %cst_398 = arith.constant 1.000000e+00 : f32
    %1304 = vector.broadcast %cst_398 : f32 to vector<8x256xf32>
    %1305 = arith.subf %1304, %1303 : vector<8x256xf32>
    %cst_399 = arith.constant 0.000000e+00 : f32
    %1306 = vector.broadcast %cst_399 : f32 to vector<8x256xf32>
    %1307 = arith.maximumf %1305, %1306 : vector<8x256xf32>
    %1308 = vector.broadcast %1299 : vector<8x1xf32> to vector<8x256xf32>
    %1309 = vector.broadcast %1 : vector<1x256xf32> to vector<8x256xf32>
    %1310 = arith.subf %1308, %1309 : vector<8x256xf32>
    %1311 = math.absf %1310 : vector<8x256xf32>
    %cst_400 = arith.constant 1.000000e+00 : f32
    %1312 = vector.broadcast %cst_400 : f32 to vector<8x256xf32>
    %1313 = arith.subf %1312, %1311 : vector<8x256xf32>
    %cst_401 = arith.constant 0.000000e+00 : f32
    %1314 = vector.broadcast %cst_401 : f32 to vector<8x256xf32>
    %1315 = arith.maximumf %1313, %1314 : vector<8x256xf32>
    %cst_402 = arith.constant 0.000000e+00 : f32
    %1316 = vector.shape_cast %1286 : vector<8x1xi1> to vector<8x1xi1>
    %1317 = vector.broadcast %1316 : vector<8x1xi1> to vector<8x256xi1>
    %1318 = vector.broadcast %cst_402 : f32 to vector<8x256xf32>
    %1319 = arith.select %1317, %1307, %1318 : vector<8x256xi1>, vector<8x256xf32>
    %1320 = arith.addf %1268, %1319 : vector<8x256xf32>
    %cst_403 = arith.constant 0.000000e+00 : f32
    %1321 = vector.shape_cast %1291 : vector<8x1xi1> to vector<8x1xi1>
    %1322 = vector.broadcast %1321 : vector<8x1xi1> to vector<8x256xi1>
    %1323 = vector.broadcast %cst_403 : f32 to vector<8x256xf32>
    %1324 = arith.select %1322, %1315, %1323 : vector<8x256xi1>, vector<8x256xf32>
    %1325 = arith.addf %1269, %1324 : vector<8x256xf32>
    %cst_404 = arith.constant 7.500000e-01 : f32
    %1326 = vector.broadcast %cst_404 : f32 to vector<8x1xf32>
    %1327 = arith.addf %3, %1326 : vector<8x1xf32>
    %1328 = vector.broadcast %1267 : f32 to vector<8x1xf32>
    %1329 = arith.mulf %1327, %1328 : vector<8x1xf32>
    %1330 = vector.broadcast %1253 : f32 to vector<8x1xf32>
    %1331 = arith.addf %1330, %1329 : vector<8x1xf32>
    %cst_405 = arith.constant 7.500000e-01 : f32
    %1332 = vector.broadcast %cst_405 : f32 to vector<8x1xf32>
    %1333 = arith.addf %3, %1332 : vector<8x1xf32>
    %1334 = vector.broadcast %1264 : f32 to vector<8x1xf32>
    %1335 = arith.mulf %1333, %1334 : vector<8x1xf32>
    %1336 = vector.broadcast %1249 : f32 to vector<8x1xf32>
    %1337 = arith.addf %1336, %1335 : vector<8x1xf32>
    %cst_406 = arith.constant -1.000000e+00 : f32
    %1338 = vector.broadcast %cst_406 : f32 to vector<8x1xf32>
    %1339 = arith.cmpf oge, %1331, %1338 : vector<8x1xf32>
    %cst_407 = arith.constant 1.600000e+01 : f32
    %1340 = vector.broadcast %cst_407 : f32 to vector<8x1xf32>
    %1341 = arith.cmpf ole, %1331, %1340 : vector<8x1xf32>
    %1342 = arith.andi %1339, %1341 : vector<8x1xi1>
    %cst_408 = arith.constant -1.000000e+00 : f32
    %1343 = vector.broadcast %cst_408 : f32 to vector<8x1xf32>
    %1344 = arith.cmpf oge, %1337, %1343 : vector<8x1xf32>
    %cst_409 = arith.constant 1.600000e+01 : f32
    %1345 = vector.broadcast %cst_409 : f32 to vector<8x1xf32>
    %1346 = arith.cmpf ole, %1337, %1345 : vector<8x1xf32>
    %1347 = arith.andi %1344, %1346 : vector<8x1xi1>
    %cst_410 = arith.constant 0.000000e+00 : f32
    %cst_411 = arith.constant 1.500000e+01 : f32
    %1348 = vector.broadcast %cst_410 : f32 to vector<8x1xf32>
    %1349 = arith.maximumf %1348, %1331 : vector<8x1xf32>
    %1350 = vector.broadcast %cst_411 : f32 to vector<8x1xf32>
    %1351 = arith.minimumf %1350, %1349 : vector<8x1xf32>
    %cst_412 = arith.constant 0.000000e+00 : f32
    %cst_413 = arith.constant 1.500000e+01 : f32
    %1352 = vector.broadcast %cst_412 : f32 to vector<8x1xf32>
    %1353 = arith.maximumf %1352, %1337 : vector<8x1xf32>
    %1354 = vector.broadcast %cst_413 : f32 to vector<8x1xf32>
    %1355 = arith.minimumf %1354, %1353 : vector<8x1xf32>
    %1356 = vector.broadcast %1351 : vector<8x1xf32> to vector<8x256xf32>
    %1357 = vector.broadcast %0 : vector<1x256xf32> to vector<8x256xf32>
    %1358 = arith.subf %1356, %1357 : vector<8x256xf32>
    %1359 = math.absf %1358 : vector<8x256xf32>
    %cst_414 = arith.constant 1.000000e+00 : f32
    %1360 = vector.broadcast %cst_414 : f32 to vector<8x256xf32>
    %1361 = arith.subf %1360, %1359 : vector<8x256xf32>
    %cst_415 = arith.constant 0.000000e+00 : f32
    %1362 = vector.broadcast %cst_415 : f32 to vector<8x256xf32>
    %1363 = arith.maximumf %1361, %1362 : vector<8x256xf32>
    %1364 = vector.broadcast %1355 : vector<8x1xf32> to vector<8x256xf32>
    %1365 = vector.broadcast %1 : vector<1x256xf32> to vector<8x256xf32>
    %1366 = arith.subf %1364, %1365 : vector<8x256xf32>
    %1367 = math.absf %1366 : vector<8x256xf32>
    %cst_416 = arith.constant 1.000000e+00 : f32
    %1368 = vector.broadcast %cst_416 : f32 to vector<8x256xf32>
    %1369 = arith.subf %1368, %1367 : vector<8x256xf32>
    %cst_417 = arith.constant 0.000000e+00 : f32
    %1370 = vector.broadcast %cst_417 : f32 to vector<8x256xf32>
    %1371 = arith.maximumf %1369, %1370 : vector<8x256xf32>
    %cst_418 = arith.constant 0.000000e+00 : f32
    %1372 = vector.shape_cast %1342 : vector<8x1xi1> to vector<8x1xi1>
    %1373 = vector.broadcast %1372 : vector<8x1xi1> to vector<8x256xi1>
    %1374 = vector.broadcast %cst_418 : f32 to vector<8x256xf32>
    %1375 = arith.select %1373, %1363, %1374 : vector<8x256xi1>, vector<8x256xf32>
    %1376 = arith.addf %1320, %1375 : vector<8x256xf32>
    %cst_419 = arith.constant 0.000000e+00 : f32
    %1377 = vector.shape_cast %1347 : vector<8x1xi1> to vector<8x1xi1>
    %1378 = vector.broadcast %1377 : vector<8x1xi1> to vector<8x256xi1>
    %1379 = vector.broadcast %cst_419 : f32 to vector<8x256xf32>
    %1380 = arith.select %1378, %1371, %1379 : vector<8x256xi1>, vector<8x256xf32>
    %1381 = arith.addf %1325, %1380 : vector<8x256xf32>
    %cst_420 = arith.constant 2.500000e-01 : f32
    %1382 = vector.broadcast %cst_420 : f32 to vector<8x256xf32>
    %1383 = arith.mulf %1381, %1382 : vector<8x256xf32>
    %1384 = vector.extract_strided_slice %1376 {offsets = [0, 0], sizes = [1, 256], strides = [1, 1]} : vector<8x256xf32> to vector<1x256xf32>
    %1385 = vector.broadcast %1384 : vector<1x256xf32> to vector<8x256xf32>
    %1386 = arith.mulf %1385, %1383 : vector<8x256xf32>
    %1387 = vector.extract_strided_slice %1376 {offsets = [1, 0], sizes = [1, 256], strides = [1, 1]} : vector<8x256xf32> to vector<1x256xf32>
    %1388 = vector.broadcast %1387 : vector<1x256xf32> to vector<8x256xf32>
    %1389 = arith.mulf %1388, %1383 : vector<8x256xf32>
    %1390 = tpu.concatenate %1386, %1389 in 0 : vector<8x256xf32>, vector<8x256xf32> -> vector<16x256xf32>
    %1391 = arith.truncf %1390 : vector<16x256xf32> to vector<16x256xbf16>
    %c448 = arith.constant 448 : index
    %c0_421 = arith.constant 0 : index
    %1392 = vector.load %arg6[%c448, %c0_421] : memref<512x256xbf16, #tpu.memory_space<vmem>>, vector<16x256xbf16>
    tpu.vector_store %arg6[%c448, %c0_421], %1391 {strides = array<i32>} : memref<512x256xbf16, #tpu.memory_space<vmem>>, vector<16x256xbf16>,
    %1393 = vector.extract_strided_slice %1376 {offsets = [2, 0], sizes = [1, 256], strides = [1, 1]} : vector<8x256xf32> to vector<1x256xf32>
    %1394 = vector.broadcast %1393 : vector<1x256xf32> to vector<8x256xf32>
    %1395 = arith.mulf %1394, %1383 : vector<8x256xf32>
    %1396 = vector.extract_strided_slice %1376 {offsets = [3, 0], sizes = [1, 256], strides = [1, 1]} : vector<8x256xf32> to vector<1x256xf32>
    %1397 = vector.broadcast %1396 : vector<1x256xf32> to vector<8x256xf32>
    %1398 = arith.mulf %1397, %1383 : vector<8x256xf32>
    %1399 = tpu.concatenate %1395, %1398 in 0 : vector<8x256xf32>, vector<8x256xf32> -> vector<16x256xf32>
    %1400 = arith.truncf %1399 : vector<16x256xf32> to vector<16x256xbf16>
    %c464 = arith.constant 464 : index
    %c0_422 = arith.constant 0 : index
    %1401 = vector.load %arg6[%c464, %c0_422] : memref<512x256xbf16, #tpu.memory_space<vmem>>, vector<16x256xbf16>
    tpu.vector_store %arg6[%c464, %c0_422], %1400 {strides = array<i32>} : memref<512x256xbf16, #tpu.memory_space<vmem>>, vector<16x256xbf16>,
    %1402 = vector.extract_strided_slice %1376 {offsets = [4, 0], sizes = [1, 256], strides = [1, 1]} : vector<8x256xf32> to vector<1x256xf32>
    %1403 = vector.broadcast %1402 : vector<1x256xf32> to vector<8x256xf32>
    %1404 = arith.mulf %1403, %1383 : vector<8x256xf32>
    %1405 = vector.extract_strided_slice %1376 {offsets = [5, 0], sizes = [1, 256], strides = [1, 1]} : vector<8x256xf32> to vector<1x256xf32>
    %1406 = vector.broadcast %1405 : vector<1x256xf32> to vector<8x256xf32>
    %1407 = arith.mulf %1406, %1383 : vector<8x256xf32>
    %1408 = tpu.concatenate %1404, %1407 in 0 : vector<8x256xf32>, vector<8x256xf32> -> vector<16x256xf32>
    %1409 = arith.truncf %1408 : vector<16x256xf32> to vector<16x256xbf16>
    %c480 = arith.constant 480 : index
    %c0_423 = arith.constant 0 : index
    %1410 = vector.load %arg6[%c480, %c0_423] : memref<512x256xbf16, #tpu.memory_space<vmem>>, vector<16x256xbf16>
    tpu.vector_store %arg6[%c480, %c0_423], %1409 {strides = array<i32>} : memref<512x256xbf16, #tpu.memory_space<vmem>>, vector<16x256xbf16>,
    %1411 = vector.extract_strided_slice %1376 {offsets = [6, 0], sizes = [1, 256], strides = [1, 1]} : vector<8x256xf32> to vector<1x256xf32>
    %1412 = vector.broadcast %1411 : vector<1x256xf32> to vector<8x256xf32>
    %1413 = arith.mulf %1412, %1383 : vector<8x256xf32>
    %1414 = vector.extract_strided_slice %1376 {offsets = [7, 0], sizes = [1, 256], strides = [1, 1]} : vector<8x256xf32> to vector<1x256xf32>
    %1415 = vector.broadcast %1414 : vector<1x256xf32> to vector<8x256xf32>
    %1416 = arith.mulf %1415, %1383 : vector<8x256xf32>
    %1417 = tpu.concatenate %1413, %1416 in 0 : vector<8x256xf32>, vector<8x256xf32> -> vector<16x256xf32>
    %1418 = arith.truncf %1417 : vector<16x256xf32> to vector<16x256xbf16>
    %c496 = arith.constant 496 : index
    %c0_424 = arith.constant 0 : index
    %1419 = vector.load %arg6[%c496, %c0_424] : memref<512x256xbf16, #tpu.memory_space<vmem>>, vector<16x256xbf16>
    tpu.vector_store %arg6[%c496, %c0_424], %1418 {strides = array<i32>} : memref<512x256xbf16, #tpu.memory_space<vmem>>, vector<16x256xbf16>,
    %c0_425 = arith.constant 0 : index
    %c0_426 = arith.constant 0 : index
    %c0_427 = arith.constant 0 : index
    %1420 = vector.load %arg3[%c0_425, %c0_426, %c0_427] : memref<1x32x256xbf16, #tpu.memory_space<vmem>>, vector<1x32x256xbf16>
    %1421 = vector.shape_cast %1420 : vector<1x32x256xbf16> to vector<32x256xbf16>
    %c0_428 = arith.constant 0 : index
    %c0_429 = arith.constant 0 : index
    %1422 = vector.load %arg6[%c0_428, %c0_429] : memref<512x256xbf16, #tpu.memory_space<vmem>>, vector<512x256xbf16>
    %cst_430 = arith.constant dense<0.000000e+00> : vector<32x512xf32>
    %1423 = tpu.matmul %1421, %1422, %cst_430 {dimension_numbers = #tpu.dot_dimension_numbers<[1], [1], [0], [0], [0, 0, 1, 0], [], []>} : vector<32x256xbf16>, vector<512x256xbf16>, vector<32x512xf32> -> vector<32x512xf32>
    %c0_431 = arith.constant 0 : index
    %c0_432 = arith.constant 0 : index
    %c0_433 = arith.constant 0 : index
    %1424 = vector.load %arg5[%c0_431, %c0_432, %c0_433] : memref<1x32x512xf32, #tpu.memory_space<vmem>>, vector<1x32x512xf32>
    %1425 = vector.shape_cast %1424 : vector<1x32x512xf32> to vector<32x512xf32>
    %1426 = vector.shape_cast %1423 : vector<32x512xf32> to vector<1x32x512xf32>
    tpu.vector_store %arg5[%c0_431, %c0_432, %c0_433], %1426 {strides = array<i32>} : memref<1x32x512xf32, #tpu.memory_space<vmem>>, vector<1x32x512xf32>,
    return
  }
  func.func @transform_0(%arg0: i32, %arg1: memref<2xi32, #tpu.memory_space<smem>>) -> i32 {
    %c0_i32 = arith.constant 0 : i32
    %c0_i32_0 = arith.constant 0 : i32
    return %c0_i32 : i32
  }
  func.func @transform_1(%arg0: i32, %arg1: memref<2xi32, #tpu.memory_space<smem>>) -> (i32, i32, i32) {
    %0 = arith.index_cast %arg0 : i32 to index
    %1 = memref.load %arg1[%0] : memref<2xi32, #tpu.memory_space<smem>>
    %c0_i32 = arith.constant 0 : i32
    %c0_i32_0 = arith.constant 0 : i32
    %c0_i32_1 = arith.constant 0 : i32
    return %1, %c0_i32, %c0_i32_0 : i32, i32, i32
  }
  func.func @transform_2(%arg0: i32, %arg1: memref<2xi32, #tpu.memory_space<smem>>) -> (i32, i32) {
    %c0_i32 = arith.constant 0 : i32
    %c0_i32_0 = arith.constant 0 : i32
    %c0_i32_1 = arith.constant 0 : i32
    return %c0_i32, %c0_i32_0 : i32, i32
  }
  func.func @transform_3(%arg0: i32, %arg1: memref<2xi32, #tpu.memory_space<smem>>) -> (i32, i32, i32) {
    %c0_i32 = arith.constant 0 : i32
    %c0_i32_0 = arith.constant 0 : i32
    %c0_i32_1 = arith.constant 0 : i32
    return %arg0, %c0_i32, %c0_i32_0 : i32, i32, i32
  }
}

</mosaic_0001>

<llo_original>
// kernel: tpu_custom_call.1
$region0: #{tpu_custom_call.1}
  #allocation0 [shape = 'u32[]', space=smem, size = 0x4, offset = 0x4, fixed_abs, tag = 'smem constant byte address 0x4 - core index']
  #allocation1 [shape = 'u32[72,128]{1,0:T(1,128)}', space=vmem, size = 0x9000, scoped, tag = 'internal scratch']
  #allocation2 [shape = 'bf16[512,256]{1,0:T(8,128)(2,1)}', space=vmem, size = 0x40000, scoped, tag = 'scratch operand']
  #allocation3 [shape = 's32[1]{0}', space=sflag, size = 0x4, scoped, tag = 'scoped memory for tpu_custom_call.1']
  #allocation4 [shape = 'u8[512]{0}', space=smem, size = 0x200, scoped, tag = 'prefetched SMEM operand 0']
  %s0 = inlined_call_operand.hbm [shape: s32[2], index: 0, kind: input, shape index: {}]
  %s1 = inlined_call_operand.hbm [shape: f32[64], index: 1, kind: input, shape index: {}]
  %s2 = inlined_call_operand.hbm [shape: bf16[2,32,256], index: 2, kind: input, shape index: {}]
  %s3 = inlined_call_operand.hbm [shape: f32[8,256], index: 3, kind: input, shape index: {}]
  %s4 = inlined_call_operand.hbm [shape: f32[2,32,512], index: 4, kind: output, shape index: {}]
  %s5 = sld [smem:[#allocation0]]
  $region57: #{tpu_custom_call.1} parent=0
    _
  %s7 = ssub.s32 1, %s5
  %s8 = scalar_select 0, %s7, %s5
  %s10 = sshll.u32 %s0, 4
  %s11 = int_to_ptr.hbm [resolvable:$true] %s10
  %13 = dma.hbm_to_smem %s11, 16, [#allocation4], [#allocation3]
  %15 = dma.done [#allocation3], 16
  %16 = sfence
  $region1: #{tpu_custom_call.1} parent=0
    #allocation5 [shape = 'u8[512]{0}', space=smem, size = 0x200, scoped, tag = 'input window, operand 1, single buffered']
    #allocation6 [shape = 's32[2]{0}', space=sflag, size = 0x8, scoped, tag = 'scoped memory for tpu_custom_call.1']
    #allocation7 [shape = 's32[2]{0}', space=sflag, size = 0x8, scoped, tag = 'scoped memory for tpu_custom_call.1']
    #allocation8 [shape = 's32[2]{0}', space=sflag, size = 0x8, scoped, tag = 'scoped memory for tpu_custom_call.1']
    #allocation9 [shape = 'u8[32768]{0}', space=vmem, size = 0x8000, scoped, tag = 'input window, operand 2']
    #allocation10 [shape = 'u8[8192]{0}', space=vmem, size = 0x2000, scoped, tag = 'input window, operand 3, single buffered']
    #allocation11 [shape = 's32[1]{0}', space=sflag, size = 0x4, scoped, tag = 'scoped memory for tpu_custom_call.1']
    #allocation12 [shape = 'u8[131072]{0}', space=vmem, size = 0x20000, scoped, tag = 'output window, operand 0']
    %17 = vsyncpa [#allocation8], 0
    %18 = vsyncpa [#allocation6], 0
    %s19 = scalar_lea.sflag [#allocation6], 1
    %20 = vsyncpa %s19, 0
    %21 = vsyncpa [#allocation11], 0
    %22 = vsyncpa [#allocation7], 0
    %s23 = scalar_lea.sflag [#allocation7], 1
    %24 = vsyncpa %s23, 0
    loop: start=0, step=1, limit=4
    $region2: #{tpu_custom_call.1} parent=1 // loop_pre_header
      _
    $region3: #{tpu_custom_call.1} parent=1 // loop_header
      %s26 = sphi 0, %s30
      %p27 = scmp.ge.s32.totalorder %s26, 4
      %s34 = sphi 0, %s34
      %s36 = sphi 0, %s34
      %s37 = sphi 0, %s36
      %s51 = sphi 0, %s37
      %s59 = sphi 0, %s61
      %s62 = sphi 0, %s59
      %s63 = sphi 0, %s62
      %s79 = sphi 0, %s63
      %s83 = sphi 0, %s83
      %s85 = sphi 0, %s83
      %s86 = sphi 0, %s85
      %s100 = sphi 0, %s86
      %s106 = sphi 0, %s108
      %s109 = sphi 0, %s106
      %s110 = sphi 0, %s109
      %s126 = sphi 0, %s110
    $region4: #{tpu_custom_call.1} parent=1 // loop_header_branch
      %29 = sbr.rel (%p27) target = $region8
    $region5: #{tpu_custom_call.1} parent=1 // loop_body
      %s31 = ssub.s32 %s26, 1
      %s32 = ssub.s32 %s26, 2
      %s33 = sadd.s32 %s26, 1
      %s35 = sadd.s32 %s34, 1
      %p38 = scmp.eq.s32.totalorder %s26, 1
      %p39 = scmp.ne.s32.totalorder %s34, %s36
      %p40 = scmp.eq.s32.totalorder %s26, 0
      %p41 = por %p39, %p40
      %p42 = scmp.ne.s32.totalorder %s34, %s36
      %p43 = scmp.eq.s32.totalorder %s31, 1
      %p44 = por %p42, %p43
      %p45 = scmp.ne.s32.totalorder %s36, %s37
      %p46 = scmp.eq.s32.totalorder %s31, 0
      %p47 = por %p45, %p46
      %p48 = scmp.ne.s32.totalorder %s36, %s37
      %p49 = scmp.eq.s32.totalorder %s32, 1
      %p50 = por %p48, %p49
      %p52 = scmp.ne.s32.totalorder %s37, %s51
      %p53 = scmp.eq.s32.totalorder %s32, 0
      %p54 = por %p52, %p53
      %s55 = sld [smem:[#allocation4 + %s26]]
      %s56 = sld [smem:[#allocation4 + %s33]]
      %s57 = ssub.s32 %s55, %s56
      %p58 = scmp.eq.s32.totalorder %s57, 0
      %s60 = sadd.s32 %s59, 1
      %s61 = scalar_select %p58, %s59, %s60
      %p64 = pneg %p58
      %p65 = scmp.eq.s32.totalorder %s26, 1
      %p66 = por %p64, %p65
      %p67 = scmp.ne.s32.totalorder %s59, %s62
      %p68 = scmp.eq.s32.totalorder %s26, 0
      %p69 = por %p67, %p68
      %p70 = scmp.ne.s32.totalorder %s59, %s62
      %p71 = scmp.eq.s32.totalorder %s31, 1
      %p72 = por %p70, %p71
      %p73 = scmp.ne.s32.totalorder %s62, %s63
      %p74 = scmp.eq.s32.totalorder %s31, 0
      %p75 = por %p73, %p74
      %p76 = scmp.ne.s32.totalorder %s62, %s63
      %p77 = scmp.eq.s32.totalorder %s32, 1
      %p78 = por %p76, %p77
      %p80 = scmp.ne.s32.totalorder %s63, %s79
      %p81 = scmp.eq.s32.totalorder %s32, 0
      %p82 = por %p80, %p81
      %s84 = sadd.s32 %s83, 1
      %p87 = scmp.eq.s32.totalorder %s26, 1
      %p88 = scmp.ne.s32.totalorder %s83, %s85
      %p89 = scmp.eq.s32.totalorder %s26, 0
      %p90 = por %p88, %p89
      %p91 = scmp.ne.s32.totalorder %s83, %s85
      %p92 = scmp.eq.s32.totalorder %s31, 1
      %p93 = por %p91, %p92
      %p94 = scmp.ne.s32.totalorder %s85, %s86
      %p95 = scmp.eq.s32.totalorder %s31, 0
      %p96 = por %p94, %p95
      %p97 = scmp.ne.s32.totalorder %s85, %s86
      %p98 = scmp.eq.s32.totalorder %s32, 1
      %p99 = por %p97, %p98
      %p101 = scmp.ne.s32.totalorder %s86, %s100
      %p102 = scmp.eq.s32.totalorder %s32, 0
      %p103 = por %p101, %p102
      %s104 = ssub.s32 %s26, %s33
      %p105 = scmp.eq.s32.totalorder %s104, 0
      %s107 = sadd.s32 %s106, 1
      %s108 = scalar_select %p105, %s106, %s107
      %p111 = pneg %p105
      %p112 = scmp.eq.s32.totalorder %s26, 1
      %p113 = por %p111, %p112
      %p114 = scmp.ne.s32.totalorder %s106, %s109
      %p115 = scmp.eq.s32.totalorder %s26, 0
      %p116 = por %p114, %p115
      %p117 = scmp.ne.s32.totalorder %s106, %s109
      %p118 = scmp.eq.s32.totalorder %s31, 1
      %p119 = por %p117, %p118
      %p120 = scmp.ne.s32.totalorder %s109, %s110
      %p121 = scmp.eq.s32.totalorder %s31, 0
      %p122 = por %p120, %p121
      %p123 = scmp.ne.s32.totalorder %s109, %s110
      %p124 = scmp.eq.s32.totalorder %s32, 1
      %p125 = por %p123, %p124
      %p127 = scmp.ne.s32.totalorder %s110, %s126
      %p128 = scmp.eq.s32.totalorder %s32, 0
      %p129 = por %p127, %p128
      %p130 = scmp.le.s32.totalorder 1, %s26
      %p131 = scmp.lt.s32.totalorder %s26, 3
      %p132 = pnand %p130, %p131
      %p133 = pneg %p132
      // Predicated region
      $region9: #{tpu_custom_call.1} parent=5 // pred_check
        _
      $region10: #{tpu_custom_call.1} parent=5 // pred_check_branch
        %135 = sbr.rel (%p132) target = $region12
      $region11: #{tpu_custom_call.1} parent=5 // pred_region
        %s136 = ssub.s32 %s26, 1
        // Predicated region
        $region13: #{tpu_custom_call.1} parent=11 // pred_check
          %p137 = pneg %p47
        $region14: #{tpu_custom_call.1} parent=11 // pred_check_branch
          %139 = sbr.rel (%p137) target = $region16
        $region15: #{tpu_custom_call.1} parent=11 // pred_region
          %141 = vsyncadd [#allocation8], 0
          %s143 = sshll.u32 %s1, 4
          %s144 = int_to_ptr.hbm [resolvable:$true] %s143
          %146 = dma.hbm_to_smem %s144, 16, [#allocation5], [#allocation8]
        $region16: #{tpu_custom_call.1} parent=11 // pred_fallthru
          _
        // Predicated region
        $region17: #{tpu_custom_call.1} parent=11 // pred_check
          %p147 = pneg %p96
        $region18: #{tpu_custom_call.1} parent=11 // pred_check_branch
          %149 = sbr.rel (%p147) target = $region20
        $region19: #{tpu_custom_call.1} parent=11 // pred_region
          %151 = vsyncadd [#allocation11], 0
          %s153 = sshll.u32 %s3, 4
          %s154 = int_to_ptr.hbm [resolvable:$true] %s153
          %s155 = sshll.u32 [#allocation10], 4
          %s156 = int_to_ptr.vmem [resolvable:$true] %s155
          %158 = dma.hbm_to_vmem [thread:$0]  %s154, 256, %s156, [#allocation11]
        $region20: #{tpu_custom_call.1} parent=11 // pred_fallthru
          _
      $region12: #{tpu_custom_call.1} parent=5 // pred_fallthru
        _
      %p159 = scmp.lt.s32.totalorder %s26, 2
      // Predicated region
      $region21: #{tpu_custom_call.1} parent=5 // pred_check
        %p160 = pneg %p159
      $region22: #{tpu_custom_call.1} parent=5 // pred_check_branch
        %162 = sbr.rel (%p160) target = $region24
      $region23: #{tpu_custom_call.1} parent=5 // pred_region
        // Predicated region
        $region25: #{tpu_custom_call.1} parent=23 // pred_check
          %p163 = pneg %p69
        $region26: #{tpu_custom_call.1} parent=23 // pred_check_branch
          %165 = sbr.rel (%p163) target = $region28
        $region27: #{tpu_custom_call.1} parent=23 // pred_region
          %s166 = sand.u32 %s59, 1
          %s167 = scalar_lea.sflag [#allocation6], %s166
          %s168 = sand.u32 %s59, 1
          %s169 = smul.addr %s168, 32
          %s170 = scalar_lea.vmem [#allocation9], %s169
          %s171 = sld [smem:[#allocation4 + %s26]]
          %173 = vsyncadd %s167, 0
          %s174 = smul.addr %s171, 8
          %s175 = smul.addr %s174, 4
          %s176 = scalar_lea.hbm %s2, %s175
          %s177 = sshll.u32 %s176, 4
          %s178 = int_to_ptr.hbm [resolvable:$true] %s177
          %s179 = sshll.u32 %s170, 4
          %s180 = int_to_ptr.vmem [resolvable:$true] %s179
          %185 = dma.hbm_to_vmem [thread:$0]  %s178, 512, %s180, %s167, 128, 128, 8
        $region28: #{tpu_custom_call.1} parent=23 // pred_fallthru
          _
      $region24: #{tpu_custom_call.1} parent=5 // pred_fallthru
        _
      %p186 = scmp.le.s32.totalorder 1, %s26
      %p187 = scmp.lt.s32.totalorder %s26, 3
      %p188 = pnand %p186, %p187
      %p189 = pneg %p188
      // Predicated region
      $region29: #{tpu_custom_call.1} parent=5 // pred_check
        _
      $region30: #{tpu_custom_call.1} parent=5 // pred_check_branch
        %191 = sbr.rel (%p188) target = $region32
      $region31: #{tpu_custom_call.1} parent=5 // pred_region
        %s192 = ssub.s32 %s26, 1
        // Predicated region
        $region33: #{tpu_custom_call.1} parent=31 // pred_check
          %p193 = pneg %p47
        $region34: #{tpu_custom_call.1} parent=31 // pred_check_branch
          %195 = sbr.rel (%p193) target = $region36
        $region35: #{tpu_custom_call.1} parent=31 // pred_region
          %197 = dma.done [#allocation8], 16
        $region36: #{tpu_custom_call.1} parent=31 // pred_fallthru
          _
        %s198 = sand.u32 %s62, 1
        %s199 = scalar_lea.sflag [#allocation6], %s198
        %s200 = sand.u32 %s62, 1
        %s201 = smul.addr %s200, 32
        %s202 = scalar_lea.vmem [#allocation9], %s201
        // Predicated region
        $region37: #{tpu_custom_call.1} parent=31 // pred_check
          %p203 = pneg %p75
        $region38: #{tpu_custom_call.1} parent=31 // pred_check_branch
          %205 = sbr.rel (%p203) target = $region40
        $region39: #{tpu_custom_call.1} parent=31 // pred_region
          %207 = dma.done %s199, 512
        $region40: #{tpu_custom_call.1} parent=31 // pred_fallthru
          _
        // Predicated region
        $region41: #{tpu_custom_call.1} parent=31 // pred_check
          %p208 = pneg %p96
        $region42: #{tpu_custom_call.1} parent=31 // pred_check_branch
          %210 = sbr.rel (%p208) target = $region44
        $region43: #{tpu_custom_call.1} parent=31 // pred_region
          %212 = dma.done [#allocation11], 256
        $region44: #{tpu_custom_call.1} parent=31 // pred_fallthru
          _
        %213 = sfence
        %p214 = pneg %p47
        %p215 = pneg %p44
        %s216 = sand.u32 %s62, 1
        %s217 = scalar_lea.sflag [#allocation6], %s216
        %s218 = sand.u32 %s62, 1
        %s219 = smul.addr %s218, 32
        %s220 = scalar_lea.vmem [#allocation9], %s219
        %p221 = pneg %p75
        %p222 = pneg %p72
        %p223 = pneg %p96
        %p224 = pneg %p93
        %p225 = pneg %p122
        %p226 = pneg %p119
        %s227 = sand.u32 %s109, 1
        %s228 = scalar_lea.sflag [#allocation7], %s227
        %s229 = sand.u32 %s109, 1
        %s230 = smul.addr %s229, 128
        %s231 = scalar_lea.vmem [#allocation12], %s230
        %s232 = sld [smem:[#allocation4 + %s31]]
        %v233 = vld [vmem:[#allocation10] ss:$8 sm:$0x3]
        %s234 = scalar_lea.vmem [#allocation10], 1
        %v235 = vld [vmem:[%s234] ss:$8 sm:$0x3]
        %v236 = vlaneseq
        %v237 = vshrl.u32 %v236, 7
        %v238 = vcvt.s32.f32 %v237
        %s239 = smul.u32 %s31, 32
        %s240 = sld [smem:[#allocation5 + %s239]]
        %s241 = smul.f32 %s240, 0.25
        %s242 = sadd.s32 %s239, 1
        %s243 = sld [smem:[#allocation5 + %s242]]
        %s244 = smul.f32 %s243, 0.25
        %s245 = sadd.s32 %s239, 2
        %s246 = sld [smem:[#allocation5 + %s245]]
        %s247 = smul.f32 %s246, 0.25
        %s248 = sadd.s32 %s239, 3
        %s249 = sld [smem:[#allocation5 + %s248]]
        %s250 = smul.f32 %s249, 0.25
        %s251 = ssub.f32 %s247, %s241
        %s252 = smax.f32 %s251, 1.0
        %s253 = smul.f32 %s252, 0.14285715
        %s254 = ssub.f32 %s250, %s244
        %s255 = smax.f32 %s254, 1.0
        %s256 = smul.f32 %s255, 0.14285715
        %v257 = vadd.f32 %v238, 0.25
        %v258 = vstv %s256
        %v259 = vmul.f32 %v257, %v258
        %v260 = vstv %s244
        %v261 = vadd.f32 %v260, %v259
        %v262 = vstv %s253
        %v263 = vmul.f32 %v257, %v262
        %v264 = vstv %s241
        %v265 = vadd.f32 %v264, %v263
        %vm266 = vcmp.ge.f32.partialorder %v261, -1.0
        %vm267 = vcmp.le.f32.partialorder %v261, 16.0
        %vm268 = vmand %vm266, %vm267
        %vm269 = vcmp.ge.f32.partialorder %v265, -1.0
        %vm270 = vcmp.le.f32.partialorder %v265, 16.0
        %vm271 = vmand %vm269, %vm270
        %v272 = vmax.f32 %v261, 0.0
        %v273 = vmin.f32 %v272, 15.0
        %v274 = vmax.f32 %v265, 0.0
        %v275 = vmin.f32 %v274, 15.0
        %v277 = vperm.slane %v233, 0
        %v278 = vperm.slane %v233, 1
        %v281 = vsub.f32 %v273, %v277
        %v282 = vsub.f32 %v273, %v278
        %v283 = vand.u32 2147483647, %v281
        %v284 = vand.u32 2147483647, %v282
        %v285 = vsub.f32 1.0, %v283
        %v286 = vsub.f32 1.0, %v284
        %v287 = vmax.f32 %v285, 0.0
        %v288 = vmax.f32 %v286, 0.0
        %v290 = vperm.slane %v235, 0
        %v291 = vperm.slane %v235, 1
        %v294 = vsub.f32 %v275, %v290
        %v295 = vsub.f32 %v275, %v291
        %v296 = vand.u32 2147483647, %v294
        %v297 = vand.u32 2147483647, %v295
        %v298 = vsub.f32 1.0, %v296
        %v299 = vsub.f32 1.0, %v297
        %v300 = vmax.f32 %v298, 0.0
        %v301 = vmax.f32 %v299, 0.0
        %v302 = vsel %vm268, 1, 0
        %vm303 = vcmp.eq.s32.totalorder %v302, 1
        %v304 = vsel %vm303, %v287, 0.0
        %v305 = vsel %vm303, %v288, 0.0
        %v306 = vadd.f32 %v304, 0.0
        %v307 = vadd.f32 %v305, 0.0
        %v308 = vsel %vm271, 1, 0
        %vm309 = vcmp.eq.s32.totalorder %v308, 1
        %v310 = vsel %vm309, %v300, 0.0
        %v311 = vsel %vm309, %v301, 0.0
        %v312 = vadd.f32 %v310, 0.0
        %v313 = vadd.f32 %v311, 0.0
        %v314 = vadd.f32 %v238, 0.75
        %v315 = vmul.f32 %v314, %v258
        %v316 = vadd.f32 %v260, %v315
        %v317 = vmul.f32 %v314, %v262
        %v318 = vadd.f32 %v264, %v317
        %vm319 = vcmp.ge.f32.partialorder %v316, -1.0
        %vm320 = vcmp.le.f32.partialorder %v316, 16.0
        %vm321 = vmand %vm319, %vm320
        %vm322 = vcmp.ge.f32.partialorder %v318, -1.0
        %vm323 = vcmp.le.f32.partialorder %v318, 16.0
        %vm324 = vmand %vm322, %vm323
        %v325 = vmax.f32 %v316, 0.0
        %v326 = vmin.f32 %v325, 15.0
        %v327 = vmax.f32 %v318, 0.0
        %v328 = vmin.f32 %v327, 15.0
        %v329 = vsub.f32 %v326, %v277
        %v330 = vsub.f32 %v326, %v278
        %v331 = vand.u32 2147483647, %v329
        %v332 = vand.u32 2147483647, %v330
        %v333 = vsub.f32 1.0, %v331
        %v334 = vsub.f32 1.0, %v332
        %v335 = vmax.f32 %v333, 0.0
        %v336 = vmax.f32 %v334, 0.0
        %v337 = vsub.f32 %v328, %v290
        %v338 = vsub.f32 %v328, %v291
        %v339 = vand.u32 2147483647, %v337
        %v340 = vand.u32 2147483647, %v338
        %v341 = vsub.f32 1.0, %v339
        %v342 = vsub.f32 1.0, %v340
        %v343 = vmax.f32 %v341, 0.0
        %v344 = vmax.f32 %v342, 0.0
        %v345 = vsel %vm321, 1, 0
        %vm346 = vcmp.eq.s32.totalorder %v345, 1
        %v347 = vsel %vm346, %v335, 0.0
        %v348 = vsel %vm346, %v336, 0.0
        %v349 = vadd.f32 %v306, %v347
        %v350 = vadd.f32 %v307, %v348
        %v351 = vsel %vm324, 1, 0
        %vm352 = vcmp.eq.s32.totalorder %v351, 1
        %v353 = vsel %vm352, %v343, 0.0
        %v354 = vsel %vm352, %v344, 0.0
        %v355 = vadd.f32 %v312, %v353
        %v356 = vadd.f32 %v313, %v354
        %v357 = vmul.f32 %v355, 0.25
        %v358 = vmul.f32 %v356, 0.25
        %v359 = vperm.slane %v349, 0
        %v360 = vperm.slane %v350, 0
        %v361 = vmul.f32 %v359, %v357
        %v362 = vmul.f32 %v360, %v358
        %v363 = vperm.slane %v349, 1
        %v364 = vperm.slane %v350, 1
        %v365 = vmul.f32 %v363, %v357
        %v366 = vmul.f32 %v364, %v358
        %v367 = vpack.c.bf16 %v362, %v361
        %v368 = vpack.c.bf16 %v366, %v365
        %369 = vst [vmem:[#allocation2] sm:$0xff] %v367
        %370 = vst [vmem:[#allocation2 + $0x8] sm:$0xff] %v368
        %v371 = vperm.slane %v349, 2
        %v372 = vperm.slane %v350, 2
        %v373 = vmul.f32 %v371, %v357
        %v374 = vmul.f32 %v372, %v358
        %v375 = vperm.slane %v349, 3
        %v376 = vperm.slane %v350, 3
        %v377 = vmul.f32 %v375, %v357
        %v378 = vmul.f32 %v376, %v358
        %v379 = vpack.c.bf16 %v374, %v373
        %v380 = vpack.c.bf16 %v378, %v377
        %381 = vst [vmem:[#allocation2 + $0x10] sm:$0xff] %v379
        %382 = vst [vmem:[#allocation2 + $0x18] sm:$0xff] %v380
        %v383 = vperm.slane %v349, 4
        %v384 = vperm.slane %v350, 4
        %v385 = vmul.f32 %v383, %v357
        %v386 = vmul.f32 %v384, %v358
        %v387 = vperm.slane %v349, 5
        %v388 = vperm.slane %v350, 5
        %v389 = vmul.f32 %v387, %v357
        %v390 = vmul.f32 %v388, %v358
        %v391 = vpack.c.bf16 %v386, %v385
        %v392 = vpack.c.bf16 %v390, %v389
        %393 = vst [vmem:[#allocation2 + $0x20] sm:$0xff] %v391
        %394 = vst [vmem:[#allocation2 + $0x28] sm:$0xff] %v392
        %v395 = vperm.slane %v349, 6
        %v396 = vperm.slane %v350, 6
        %v397 = vmul.f32 %v395, %v357
        %v398 = vmul.f32 %v396, %v358
        %v399 = vperm.slane %v349, 7
        %v400 = vperm.slane %v350, 7
        %v401 = vmul.f32 %v399, %v357
        %v402 = vmul.f32 %v400, %v358
        %v403 = vpack.c.bf16 %v398, %v397
        %v404 = vpack.c.bf16 %v402, %v401
        %405 = vst [vmem:[#allocation2 + $0x30] sm:$0xff] %v403
        %406 = vst [vmem:[#allocation2 + $0x38] sm:$0xff] %v404
        %s407 = smul.u32 %s31, 8
        %s408 = sadd.s32 %s407, 1
        %s409 = smul.u32 %s408, 4
        %s410 = sld [smem:[#allocation5 + %s409]]
        %s411 = smul.f32 %s410, 0.25
        %s412 = sadd.s32 %s409, 1
        %s413 = sld [smem:[#allocation5 + %s412]]
        %s414 = smul.f32 %s413, 0.25
        %s415 = sadd.s32 %s409, 2
        %s416 = sld [smem:[#allocation5 + %s415]]
        %s417 = smul.f32 %s416, 0.25
        %s418 = sadd.s32 %s409, 3
        %s419 = sld [smem:[#allocation5 + %s418]]
        %s420 = smul.f32 %s419, 0.25
        %s421 = ssub.f32 %s417, %s411
        %s422 = smax.f32 %s421, 1.0
        %s423 = smul.f32 %s422, 0.14285715
        %s424 = ssub.f32 %s420, %s414
        %s425 = smax.f32 %s424, 1.0
        %s426 = smul.f32 %s425, 0.14285715
        %v427 = vstv %s426
        %v428 = vmul.f32 %v257, %v427
        %v429 = vstv %s414
        %v430 = vadd.f32 %v429, %v428
        %v431 = vstv %s423
        %v432 = vmul.f32 %v257, %v431
        %v433 = vstv %s411
        %v434 = vadd.f32 %v433, %v432
        %vm435 = vcmp.ge.f32.partialorder %v430, -1.0
        %vm436 = vcmp.le.f32.partialorder %v430, 16.0
        %vm437 = vmand %vm435, %vm436
        %vm438 = vcmp.ge.f32.partialorder %v434, -1.0
        %vm439 = vcmp.le.f32.partialorder %v434, 16.0
        %vm440 = vmand %vm438, %vm439
        %v441 = vmax.f32 %v430, 0.0
        %v442 = vmin.f32 %v441, 15.0
        %v443 = vmax.f32 %v434, 0.0
        %v444 = vmin.f32 %v443, 15.0
        %v445 = vsub.f32 %v442, %v277
        %v446 = vsub.f32 %v442, %v278
        %v447 = vand.u32 2147483647, %v445
        %v448 = vand.u32 2147483647, %v446
        %v449 = vsub.f32 1.0, %v447
        %v450 = vsub.f32 1.0, %v448
        %v451 = vmax.f32 %v449, 0.0
        %v452 = vmax.f32 %v450, 0.0
        %v453 = vsub.f32 %v444, %v290
        %v454 = vsub.f32 %v444, %v291
        %v455 = vand.u32 2147483647, %v453
        %v456 = vand.u32 2147483647, %v454
        %v457 = vsub.f32 1.0, %v455
        %v458 = vsub.f32 1.0, %v456
        %v459 = vmax.f32 %v457, 0.0
        %v460 = vmax.f32 %v458, 0.0
        %v461 = vsel %vm437, 1, 0
        %vm462 = vcmp.eq.s32.totalorder %v461, 1
        %v463 = vsel %vm462, %v451, 0.0
        %v464 = vsel %vm462, %v452, 0.0
        %v465 = vadd.f32 %v463, 0.0
        %v466 = vadd.f32 %v464, 0.0
        %v467 = vsel %vm440, 1, 0
        %vm468 = vcmp.eq.s32.totalorder %v467, 1
        %v469 = vsel %vm468, %v459, 0.0
        %v470 = vsel %vm468, %v460, 0.0
        %v471 = vadd.f32 %v469, 0.0
        %v472 = vadd.f32 %v470, 0.0
        %v473 = vmul.f32 %v314, %v427
        %v474 = vadd.f32 %v429, %v473
        %v475 = vmul.f32 %v314, %v431
        %v476 = vadd.f32 %v433, %v475
        %vm477 = vcmp.ge.f32.partialorder %v474, -1.0
        %vm478 = vcmp.le.f32.partialorder %v474, 16.0
        %vm479 = vmand %vm477, %vm478
        %vm480 = vcmp.ge.f32.partialorder %v476, -1.0
        %vm481 = vcmp.le.f32.partialorder %v476, 16.0
        %vm482 = vmand %vm480, %vm481
        %v483 = vmax.f32 %v474, 0.0
        %v484 = vmin.f32 %v483, 15.0
        %v485 = vmax.f32 %v476, 0.0
        %v486 = vmin.f32 %v485, 15.0
        %v487 = vsub.f32 %v484, %v277
        %v488 = vsub.f32 %v484, %v278
        %v489 = vand.u32 2147483647, %v487
        %v490 = vand.u32 2147483647, %v488
        %v491 = vsub.f32 1.0, %v489
        %v492 = vsub.f32 1.0, %v490
        %v493 = vmax.f32 %v491, 0.0
        %v494 = vmax.f32 %v492, 0.0
        %v495 = vsub.f32 %v486, %v290
        %v496 = vsub.f32 %v486, %v291
        %v497 = vand.u32 2147483647, %v495
        %v498 = vand.u32 2147483647, %v496
        %v499 = vsub.f32 1.0, %v497
        %v500 = vsub.f32 1.0, %v498
        %v501 = vmax.f32 %v499, 0.0
        %v502 = vmax.f32 %v500, 0.0
        %v503 = vsel %vm479, 1, 0
        %vm504 = vcmp.eq.s32.totalorder %v503, 1
        %v505 = vsel %vm504, %v493, 0.0
        %v506 = vsel %vm504, %v494, 0.0
        %v507 = vadd.f32 %v465, %v505
        %v508 = vadd.f32 %v466, %v506
        %v509 = vsel %vm482, 1, 0
        %vm510 = vcmp.eq.s32.totalorder %v509, 1
        %v511 = vsel %vm510, %v501, 0.0
        %v512 = vsel %vm510, %v502, 0.0
        %v513 = vadd.f32 %v471, %v511
        %v514 = vadd.f32 %v472, %v512
        %v515 = vmul.f32 %v513, 0.25
        %v516 = vmul.f32 %v514, 0.25
        %v517 = vperm.slane %v507, 0
        %v518 = vperm.slane %v508, 0
        %v519 = vmul.f32 %v517, %v515
        %v520 = vmul.f32 %v518, %v516
        %v521 = vperm.slane %v507, 1
        %v522 = vperm.slane %v508, 1
        %v523 = vmul.f32 %v521, %v515
        %v524 = vmul.f32 %v522, %v516
        %v525 = vpack.c.bf16 %v520, %v519
        %v526 = vpack.c.bf16 %v524, %v523
        %527 = vst [vmem:[#allocation2 + $0x40] sm:$0xff] %v525
        %528 = vst [vmem:[#allocation2 + $0x48] sm:$0xff] %v526
        %v529 = vperm.slane %v507, 2
        %v530 = vperm.slane %v508, 2
        %v531 = vmul.f32 %v529, %v515
        %v532 = vmul.f32 %v530, %v516
        %v533 = vperm.slane %v507, 3
        %v534 = vperm.slane %v508, 3
        %v535 = vmul.f32 %v533, %v515
        %v536 = vmul.f32 %v534, %v516
        %v537 = vpack.c.bf16 %v532, %v531
        %v538 = vpack.c.bf16 %v536, %v535
        %539 = vst [vmem:[#allocation2 + $0x50] sm:$0xff] %v537
        %540 = vst [vmem:[#allocation2 + $0x58] sm:$0xff] %v538
        %v541 = vperm.slane %v507, 4
        %v542 = vperm.slane %v508, 4
        %v543 = vmul.f32 %v541, %v515
        %v544 = vmul.f32 %v542, %v516
        %v545 = vperm.slane %v507, 5
        %v546 = vperm.slane %v508, 5
        %v547 = vmul.f32 %v545, %v515
        %v548 = vmul.f32 %v546, %v516
        %v549 = vpack.c.bf16 %v544, %v543
        %v550 = vpack.c.bf16 %v548, %v547
        %551 = vst [vmem:[#allocation2 + $0x60] sm:$0xff] %v549
        %552 = vst [vmem:[#allocation2 + $0x68] sm:$0xff] %v550
        %v553 = vperm.slane %v507, 6
        %v554 = vperm.slane %v508, 6
        %v555 = vmul.f32 %v553, %v515
        %v556 = vmul.f32 %v554, %v516
        %v557 = vperm.slane %v507, 7
        %v558 = vperm.slane %v508, 7
        %v559 = vmul.f32 %v557, %v515
        %v560 = vmul.f32 %v558, %v516
        %v561 = vpack.c.bf16 %v556, %v555
        %v562 = vpack.c.bf16 %v560, %v559
        %563 = vst [vmem:[#allocation2 + $0x70] sm:$0xff] %v561
        %564 = vst [vmem:[#allocation2 + $0x78] sm:$0xff] %v562
        %s565 = sadd.s32 %s407, 2
        %s566 = smul.u32 %s565, 4
        %s567 = sld [smem:[#allocation5 + %s566]]
        %s568 = smul.f32 %s567, 0.25
        %s569 = sadd.s32 %s566, 1
        %s570 = sld [smem:[#allocation5 + %s569]]
        %s571 = smul.f32 %s570, 0.25
        %s572 = sadd.s32 %s566, 2
        %s573 = sld [smem:[#allocation5 + %s572]]
        %s574 = smul.f32 %s573, 0.25
        %s575 = sadd.s32 %s566, 3
        %s576 = sld [smem:[#allocation5 + %s575]]
        %s577 = smul.f32 %s576, 0.25
        %s578 = ssub.f32 %s574, %s568
        %s579 = smax.f32 %s578, 1.0
        %s580 = smul.f32 %s579, 0.14285715
        %s581 = ssub.f32 %s577, %s571
        %s582 = smax.f32 %s581, 1.0
        %s583 = smul.f32 %s582, 0.14285715
        %v584 = vstv %s583
        %v585 = vmul.f32 %v257, %v584
        %v586 = vstv %s571
        %v587 = vadd.f32 %v586, %v585
        %v588 = vstv %s580
        %v589 = vmul.f32 %v257, %v588
        %v590 = vstv %s568
        %v591 = vadd.f32 %v590, %v589
        %vm592 = vcmp.ge.f32.partialorder %v587, -1.0
        %vm593 = vcmp.le.f32.partialorder %v587, 16.0
        %vm594 = vmand %vm592, %vm593
        %vm595 = vcmp.ge.f32.partialorder %v591, -1.0
        %vm596 = vcmp.le.f32.partialorder %v591, 16.0
        %vm597 = vmand %vm595, %vm596
        %v598 = vmax.f32 %v587, 0.0
        %v599 = vmin.f32 %v598, 15.0
        %v600 = vmax.f32 %v591, 0.0
        %v601 = vmin.f32 %v600, 15.0
        %v602 = vsub.f32 %v599, %v277
        %v603 = vsub.f32 %v599, %v278
        %v604 = vand.u32 2147483647, %v602
        %v605 = vand.u32 2147483647, %v603
        %v606 = vsub.f32 1.0, %v604
        %v607 = vsub.f32 1.0, %v605
        %v608 = vmax.f32 %v606, 0.0
        %v609 = vmax.f32 %v607, 0.0
        %v610 = vsub.f32 %v601, %v290
        %v611 = vsub.f32 %v601, %v291
        %v612 = vand.u32 2147483647, %v610
        %v613 = vand.u32 2147483647, %v611
        %v614 = vsub.f32 1.0, %v612
        %v615 = vsub.f32 1.0, %v613
        %v616 = vmax.f32 %v614, 0.0
        %v617 = vmax.f32 %v615, 0.0
        %v618 = vsel %vm594, 1, 0
        %vm619 = vcmp.eq.s32.totalorder %v618, 1
        %v620 = vsel %vm619, %v608, 0.0
        %v621 = vsel %vm619, %v609, 0.0
        %v622 = vadd.f32 %v620, 0.0
        %v623 = vadd.f32 %v621, 0.0
        %v624 = vsel %vm597, 1, 0
        %vm625 = vcmp.eq.s32.totalorder %v624, 1
        %v626 = vsel %vm625, %v616, 0.0
        %v627 = vsel %vm625, %v617, 0.0
        %v628 = vadd.f32 %v626, 0.0
        %v629 = vadd.f32 %v627, 0.0
        %v630 = vmul.f32 %v314, %v584
        %v631 = vadd.f32 %v586, %v630
        %v632 = vmul.f32 %v314, %v588
        %v633 = vadd.f32 %v590, %v632
        %vm634 = vcmp.ge.f32.partialorder %v631, -1.0
        %vm635 = vcmp.le.f32.partialorder %v631, 16.0
        %vm636 = vmand %vm634, %vm635
        %vm637 = vcmp.ge.f32.partialorder %v633, -1.0
        %vm638 = vcmp.le.f32.partialorder %v633, 16.0
        %vm639 = vmand %vm637, %vm638
        %v640 = vmax.f32 %v631, 0.0
        %v641 = vmin.f32 %v640, 15.0
        %v642 = vmax.f32 %v633, 0.0
        %v643 = vmin.f32 %v642, 15.0
        %v644 = vsub.f32 %v641, %v277
        %v645 = vsub.f32 %v641, %v278
        %v646 = vand.u32 2147483647, %v644
        %v647 = vand.u32 2147483647, %v645
        %v648 = vsub.f32 1.0, %v646
        %v649 = vsub.f32 1.0, %v647
        %v650 = vmax.f32 %v648, 0.0
        %v651 = vmax.f32 %v649, 0.0
        %v652 = vsub.f32 %v643, %v290
        %v653 = vsub.f32 %v643, %v291
        %v654 = vand.u32 2147483647, %v652
        %v655 = vand.u32 2147483647, %v653
        %v656 = vsub.f32 1.0, %v654
        %v657 = vsub.f32 1.0, %v655
        %v658 = vmax.f32 %v656, 0.0
        %v659 = vmax.f32 %v657, 0.0
        %v660 = vsel %vm636, 1, 0
        %vm661 = vcmp.eq.s32.totalorder %v660, 1
        %v662 = vsel %vm661, %v650, 0.0
        %v663 = vsel %vm661, %v651, 0.0
        %v664 = vadd.f32 %v622, %v662
        %v665 = vadd.f32 %v623, %v663
        %v666 = vsel %vm639, 1, 0
        %vm667 = vcmp.eq.s32.totalorder %v666, 1
        %v668 = vsel %vm667, %v658, 0.0
        %v669 = vsel %vm667, %v659, 0.0
        %v670 = vadd.f32 %v628, %v668
        %v671 = vadd.f32 %v629, %v669
        %v672 = vmul.f32 %v670, 0.25
        %v673 = vmul.f32 %v671, 0.25
        %v674 = vperm.slane %v664, 0
        %v675 = vperm.slane %v665, 0
        %v676 = vmul.f32 %v674, %v672
        %v677 = vmul.f32 %v675, %v673
        %v678 = vperm.slane %v664, 1
        %v679 = vperm.slane %v665, 1
        %v680 = vmul.f32 %v678, %v672
        %v681 = vmul.f32 %v679, %v673
        %v682 = vpack.c.bf16 %v677, %v676
        %v683 = vpack.c.bf16 %v681, %v680
        %684 = vst [vmem:[#allocation2 + $0x80] sm:$0xff] %v682
        %685 = vst [vmem:[#allocation2 + $0x88] sm:$0xff] %v683
        %v686 = vperm.slane %v664, 2
        %v687 = vperm.slane %v665, 2
        %v688 = vmul.f32 %v686, %v672
        %v689 = vmul.f32 %v687, %v673
        %v690 = vperm.slane %v664, 3
        %v691 = vperm.slane %v665, 3
        %v692 = vmul.f32 %v690, %v672
        %v693 = vmul.f32 %v691, %v673
        %v694 = vpack.c.bf16 %v689, %v688
        %v695 = vpack.c.bf16 %v693, %v692
        %696 = vst [vmem:[#allocation2 + $0x90] sm:$0xff] %v694
        %697 = vst [vmem:[#allocation2 + $0x98] sm:$0xff] %v695
        %v698 = vperm.slane %v664, 4
        %v699 = vperm.slane %v665, 4
        %v700 = vmul.f32 %v698, %v672
        %v701 = vmul.f32 %v699, %v673
        %v702 = vperm.slane %v664, 5
        %v703 = vperm.slane %v665, 5
        %v704 = vmul.f32 %v702, %v672
        %v705 = vmul.f32 %v703, %v673
        %v706 = vpack.c.bf16 %v701, %v700
        %v707 = vpack.c.bf16 %v705, %v704
        %708 = vst [vmem:[#allocation2 + $0xa0] sm:$0xff] %v706
        %709 = vst [vmem:[#allocation2 + $0xa8] sm:$0xff] %v707
        %v710 = vperm.slane %v664, 6
        %v711 = vperm.slane %v665, 6
        %v712 = vmul.f32 %v710, %v672
        %v713 = vmul.f32 %v711, %v673
        %v714 = vperm.slane %v664, 7
        %v715 = vperm.slane %v665, 7
        %v716 = vmul.f32 %v714, %v672
        %v717 = vmul.f32 %v715, %v673
        %v718 = vpack.c.bf16 %v713, %v712
        %v719 = vpack.c.bf16 %v717, %v716
        %720 = vst [vmem:[#allocation2 + $0xb0] sm:$0xff] %v718
        %721 = vst [vmem:[#allocation2 + $0xb8] sm:$0xff] %v719
        %s722 = sadd.s32 %s407, 3
        %s723 = smul.u32 %s722, 4
        %s724 = sld [smem:[#allocation5 + %s723]]
        %s725 = smul.f32 %s724, 0.25
        %s726 = sadd.s32 %s723, 1
        %s727 = sld [smem:[#allocation5 + %s726]]
        %s728 = smul.f32 %s727, 0.25
        %s729 = sadd.s32 %s723, 2
        %s730 = sld [smem:[#allocation5 + %s729]]
        %s731 = smul.f32 %s730, 0.25
        %s732 = sadd.s32 %s723, 3
        %s733 = sld [smem:[#allocation5 + %s732]]
        %s734 = smul.f32 %s733, 0.25
        %s735 = ssub.f32 %s731, %s725
        %s736 = smax.f32 %s735, 1.0
        %s737 = smul.f32 %s736, 0.14285715
        %s738 = ssub.f32 %s734, %s728
        %s739 = smax.f32 %s738, 1.0
        %s740 = smul.f32 %s739, 0.14285715
        %v741 = vstv %s740
        %v742 = vmul.f32 %v257, %v741
        %v743 = vstv %s728
        %v744 = vadd.f32 %v743, %v742
        %v745 = vstv %s737
        %v746 = vmul.f32 %v257, %v745
        %v747 = vstv %s725
        %v748 = vadd.f32 %v747, %v746
        %vm749 = vcmp.ge.f32.partialorder %v744, -1.0
        %vm750 = vcmp.le.f32.partialorder %v744, 16.0
        %vm751 = vmand %vm749, %vm750
        %vm752 = vcmp.ge.f32.partialorder %v748, -1.0
        %vm753 = vcmp.le.f32.partialorder %v748, 16.0
        %vm754 = vmand %vm752, %vm753
        %v755 = vmax.f32 %v744, 0.0
        %v756 = vmin.f32 %v755, 15.0
        %v757 = vmax.f32 %v748, 0.0
        %v758 = vmin.f32 %v757, 15.0
        %v759 = vsub.f32 %v756, %v277
        %v760 = vsub.f32 %v756, %v278
        %v761 = vand.u32 2147483647, %v759
        %v762 = vand.u32 2147483647, %v760
        %v763 = vsub.f32 1.0, %v761
        %v764 = vsub.f32 1.0, %v762
        %v765 = vmax.f32 %v763, 0.0
        %v766 = vmax.f32 %v764, 0.0
        %v767 = vsub.f32 %v758, %v290
        %v768 = vsub.f32 %v758, %v291
        %v769 = vand.u32 2147483647, %v767
        %v770 = vand.u32 2147483647, %v768
        %v771 = vsub.f32 1.0, %v769
        %v772 = vsub.f32 1.0, %v770
        %v773 = vmax.f32 %v771, 0.0
        %v774 = vmax.f32 %v772, 0.0
        %v775 = vsel %vm751, 1, 0
        %vm776 = vcmp.eq.s32.totalorder %v775, 1
        %v777 = vsel %vm776, %v765, 0.0
        %v778 = vsel %vm776, %v766, 0.0
        %v779 = vadd.f32 %v777, 0.0
        %v780 = vadd.f32 %v778, 0.0
        %v781 = vsel %vm754, 1, 0
        %vm782 = vcmp.eq.s32.totalorder %v781, 1
        %v783 = vsel %vm782, %v773, 0.0
        %v784 = vsel %vm782, %v774, 0.0
        %v785 = vadd.f32 %v783, 0.0
        %v786 = vadd.f32 %v784, 0.0
        %v787 = vmul.f32 %v314, %v741
        %v788 = vadd.f32 %v743, %v787
        %v789 = vmul.f32 %v314, %v745
        %v790 = vadd.f32 %v747, %v789
        %vm791 = vcmp.ge.f32.partialorder %v788, -1.0
        %vm792 = vcmp.le.f32.partialorder %v788, 16.0
        %vm793 = vmand %vm791, %vm792
        %vm794 = vcmp.ge.f32.partialorder %v790, -1.0
        %vm795 = vcmp.le.f32.partialorder %v790, 16.0
        %vm796 = vmand %vm794, %vm795
        %v797 = vmax.f32 %v788, 0.0
        %v798 = vmin.f32 %v797, 15.0
        %v799 = vmax.f32 %v790, 0.0
        %v800 = vmin.f32 %v799, 15.0
        %v801 = vsub.f32 %v798, %v277
        %v802 = vsub.f32 %v798, %v278
        %v803 = vand.u32 2147483647, %v801
        %v804 = vand.u32 2147483647, %v802
        %v805 = vsub.f32 1.0, %v803
        %v806 = vsub.f32 1.0, %v804
        %v807 = vmax.f32 %v805, 0.0
        %v808 = vmax.f32 %v806, 0.0
        %v809 = vsub.f32 %v800, %v290
        %v810 = vsub.f32 %v800, %v291
        %v811 = vand.u32 2147483647, %v809
        %v812 = vand.u32 2147483647, %v810
        %v813 = vsub.f32 1.0, %v811
        %v814 = vsub.f32 1.0, %v812
        %v815 = vmax.f32 %v813, 0.0
        %v816 = vmax.f32 %v814, 0.0
        %v817 = vsel %vm793, 1, 0
        %vm818 = vcmp.eq.s32.totalorder %v817, 1
        %v819 = vsel %vm818, %v807, 0.0
        %v820 = vsel %vm818, %v808, 0.0
        %v821 = vadd.f32 %v779, %v819
        %v822 = vadd.f32 %v780, %v820
        %v823 = vsel %vm796, 1, 0
        %vm824 = vcmp.eq.s32.totalorder %v823, 1
        %v825 = vsel %vm824, %v815, 0.0
        %v826 = vsel %vm824, %v816, 0.0
        %v827 = vadd.f32 %v785, %v825
        %v828 = vadd.f32 %v786, %v826
        %v829 = vmul.f32 %v827, 0.25
        %v830 = vmul.f32 %v828, 0.25
        %v831 = vperm.slane %v821, 0
        %v832 = vperm.slane %v822, 0
        %v833 = vmul.f32 %v831, %v829
        %v834 = vmul.f32 %v832, %v830
        %v835 = vperm.slane %v821, 1
        %v836 = vperm.slane %v822, 1
        %v837 = vmul.f32 %v835, %v829
        %v838 = vmul.f32 %v836, %v830
        %v839 = vpack.c.bf16 %v834, %v833
        %v840 = vpack.c.bf16 %v838, %v837
        %841 = vst [vmem:[#allocation2 + $0xc0] sm:$0xff] %v839
        %842 = vst [vmem:[#allocation2 + $0xc8] sm:$0xff] %v840
        %v843 = vperm.slane %v821, 2
        %v844 = vperm.slane %v822, 2
        %v845 = vmul.f32 %v843, %v829
        %v846 = vmul.f32 %v844, %v830
        %v847 = vperm.slane %v821, 3
        %v848 = vperm.slane %v822, 3
        %v849 = vmul.f32 %v847, %v829
        %v850 = vmul.f32 %v848, %v830
        %v851 = vpack.c.bf16 %v846, %v845
        %v852 = vpack.c.bf16 %v850, %v849
        %853 = vst [vmem:[#allocation2 + $0xd0] sm:$0xff] %v851
        %854 = vst [vmem:[#allocation2 + $0xd8] sm:$0xff] %v852
        %v855 = vperm.slane %v821, 4
        %v856 = vperm.slane %v822, 4
        %v857 = vmul.f32 %v855, %v829
        %v858 = vmul.f32 %v856, %v830
        %v859 = vperm.slane %v821, 5
        %v860 = vperm.slane %v822, 5
        %v861 = vmul.f32 %v859, %v829
        %v862 = vmul.f32 %v860, %v830
        %v863 = vpack.c.bf16 %v858, %v857
        %v864 = vpack.c.bf16 %v862, %v861
        %865 = vst [vmem:[#allocation2 + $0xe0] sm:$0xff] %v863
        %866 = vst [vmem:[#allocation2 + $0xe8] sm:$0xff] %v864
        %v867 = vperm.slane %v821, 6
        %v868 = vperm.slane %v822, 6
        %v869 = vmul.f32 %v867, %v829
        %v870 = vmul.f32 %v868, %v830
        %v871 = vperm.slane %v821, 7
        %v872 = vperm.slane %v822, 7
        %v873 = vmul.f32 %v871, %v829
        %v874 = vmul.f32 %v872, %v830
        %v875 = vpack.c.bf16 %v870, %v869
        %v876 = vpack.c.bf16 %v874, %v873
        %877 = vst [vmem:[#allocation2 + $0xf0] sm:$0xff] %v875
        %878 = vst [vmem:[#allocation2 + $0xf8] sm:$0xff] %v876
        %s879 = sadd.s32 %s407, 4
        %s880 = smul.u32 %s879, 4
        %s881 = sld [smem:[#allocation5 + %s880]]
        %s882 = smul.f32 %s881, 0.25
        %s883 = sadd.s32 %s880, 1
        %s884 = sld [smem:[#allocation5 + %s883]]
        %s885 = smul.f32 %s884, 0.25
        %s886 = sadd.s32 %s880, 2
        %s887 = sld [smem:[#allocation5 + %s886]]
        %s888 = smul.f32 %s887, 0.25
        %s889 = sadd.s32 %s880, 3
        %s890 = sld [smem:[#allocation5 + %s889]]
        %s891 = smul.f32 %s890, 0.25
        %s892 = ssub.f32 %s888, %s882
        %s893 = smax.f32 %s892, 1.0
        %s894 = smul.f32 %s893, 0.14285715
        %s895 = ssub.f32 %s891, %s885
        %s896 = smax.f32 %s895, 1.0
        %s897 = smul.f32 %s896, 0.14285715
        %v898 = vstv %s897
        %v899 = vmul.f32 %v257, %v898
        %v900 = vstv %s885
        %v901 = vadd.f32 %v900, %v899
        %v902 = vstv %s894
        %v903 = vmul.f32 %v257, %v902
        %v904 = vstv %s882
        %v905 = vadd.f32 %v904, %v903
        %vm906 = vcmp.ge.f32.partialorder %v901, -1.0
        %vm907 = vcmp.le.f32.partialorder %v901, 16.0
        %vm908 = vmand %vm906, %vm907
        %vm909 = vcmp.ge.f32.partialorder %v905, -1.0
        %vm910 = vcmp.le.f32.partialorder %v905, 16.0
        %vm911 = vmand %vm909, %vm910
        %v912 = vmax.f32 %v901, 0.0
        %v913 = vmin.f32 %v912, 15.0
        %v914 = vmax.f32 %v905, 0.0
        %v915 = vmin.f32 %v914, 15.0
        %v916 = vsub.f32 %v913, %v277
        %v917 = vsub.f32 %v913, %v278
        %v918 = vand.u32 2147483647, %v916
        %v919 = vand.u32 2147483647, %v917
        %v920 = vsub.f32 1.0, %v918
        %v921 = vsub.f32 1.0, %v919
        %v922 = vmax.f32 %v920, 0.0
        %v923 = vmax.f32 %v921, 0.0
        %v924 = vsub.f32 %v915, %v290
        %v925 = vsub.f32 %v915, %v291
        %v926 = vand.u32 2147483647, %v924
        %v927 = vand.u32 2147483647, %v925
        %v928 = vsub.f32 1.0, %v926
        %v929 = vsub.f32 1.0, %v927
        %v930 = vmax.f32 %v928, 0.0
        %v931 = vmax.f32 %v929, 0.0
        %v932 = vsel %vm908, 1, 0
        %vm933 = vcmp.eq.s32.totalorder %v932, 1
        %v934 = vsel %vm933, %v922, 0.0
        %v935 = vsel %vm933, %v923, 0.0
        %v936 = vadd.f32 %v934, 0.0
        %v937 = vadd.f32 %v935, 0.0
        %v938 = vsel %vm911, 1, 0
        %vm939 = vcmp.eq.s32.totalorder %v938, 1
        %v940 = vsel %vm939, %v930, 0.0
        %v941 = vsel %vm939, %v931, 0.0
        %v942 = vadd.f32 %v940, 0.0
        %v943 = vadd.f32 %v941, 0.0
        %v944 = vmul.f32 %v314, %v898
        %v945 = vadd.f32 %v900, %v944
        %v946 = vmul.f32 %v314, %v902
        %v947 = vadd.f32 %v904, %v946
        %vm948 = vcmp.ge.f32.partialorder %v945, -1.0
        %vm949 = vcmp.le.f32.partialorder %v945, 16.0
        %vm950 = vmand %vm948, %vm949
        %vm951 = vcmp.ge.f32.partialorder %v947, -1.0
        %vm952 = vcmp.le.f32.partialorder %v947, 16.0
        %vm953 = vmand %vm951, %vm952
        %v954 = vmax.f32 %v945, 0.0
        %v955 = vmin.f32 %v954, 15.0
        %v956 = vmax.f32 %v947, 0.0
        %v957 = vmin.f32 %v956, 15.0
        %v958 = vsub.f32 %v955, %v277
        %v959 = vsub.f32 %v955, %v278
        %v960 = vand.u32 2147483647, %v958
        %v961 = vand.u32 2147483647, %v959
        %v962 = vsub.f32 1.0, %v960
        %v963 = vsub.f32 1.0, %v961
        %v964 = vmax.f32 %v962, 0.0
        %v965 = vmax.f32 %v963, 0.0
        %v966 = vsub.f32 %v957, %v290
        %v967 = vsub.f32 %v957, %v291
        %v968 = vand.u32 2147483647, %v966
        %v969 = vand.u32 2147483647, %v967
        %v970 = vsub.f32 1.0, %v968
        %v971 = vsub.f32 1.0, %v969
        %v972 = vmax.f32 %v970, 0.0
        %v973 = vmax.f32 %v971, 0.0
        %v974 = vsel %vm950, 1, 0
        %vm975 = vcmp.eq.s32.totalorder %v974, 1
        %v976 = vsel %vm975, %v964, 0.0
        %v977 = vsel %vm975, %v965, 0.0
        %v978 = vadd.f32 %v936, %v976
        %v979 = vadd.f32 %v937, %v977
        %v980 = vsel %vm953, 1, 0
        %vm981 = vcmp.eq.s32.totalorder %v980, 1
        %v982 = vsel %vm981, %v972, 0.0
        %v983 = vsel %vm981, %v973, 0.0
        %v984 = vadd.f32 %v942, %v982
        %v985 = vadd.f32 %v943, %v983
        %v986 = vmul.f32 %v984, 0.25
        %v987 = vmul.f32 %v985, 0.25
        %v988 = vperm.slane %v978, 0
        %v989 = vperm.slane %v979, 0
        %v990 = vmul.f32 %v988, %v986
        %v991 = vmul.f32 %v989, %v987
        %v992 = vperm.slane %v978, 1
        %v993 = vperm.slane %v979, 1
        %v994 = vmul.f32 %v992, %v986
        %v995 = vmul.f32 %v993, %v987
        %v996 = vpack.c.bf16 %v991, %v990
        %v997 = vpack.c.bf16 %v995, %v994
        %998 = vst [vmem:[#allocation2 + $0x100] sm:$0xff] %v996
        %999 = vst [vmem:[#allocation2 + $0x108] sm:$0xff] %v997
        %v1000 = vperm.slane %v978, 2
        %v1001 = vperm.slane %v979, 2
        %v1002 = vmul.f32 %v1000, %v986
        %v1003 = vmul.f32 %v1001, %v987
        %v1004 = vperm.slane %v978, 3
        %v1005 = vperm.slane %v979, 3
        %v1006 = vmul.f32 %v1004, %v986
        %v1007 = vmul.f32 %v1005, %v987
        %v1008 = vpack.c.bf16 %v1003, %v1002
        %v1009 = vpack.c.bf16 %v1007, %v1006
        %1010 = vst [vmem:[#allocation2 + $0x110] sm:$0xff] %v1008
        %1011 = vst [vmem:[#allocation2 + $0x118] sm:$0xff] %v1009
        %v1012 = vperm.slane %v978, 4
        %v1013 = vperm.slane %v979, 4
        %v1014 = vmul.f32 %v1012, %v986
        %v1015 = vmul.f32 %v1013, %v987
        %v1016 = vperm.slane %v978, 5
        %v1017 = vperm.slane %v979, 5
        %v1018 = vmul.f32 %v1016, %v986
        %v1019 = vmul.f32 %v1017, %v987
        %v1020 = vpack.c.bf16 %v1015, %v1014
        %v1021 = vpack.c.bf16 %v1019, %v1018
        %1022 = vst [vmem:[#allocation2 + $0x120] sm:$0xff] %v1020
        %1023 = vst [vmem:[#allocation2 + $0x128] sm:$0xff] %v1021
        %v1024 = vperm.slane %v978, 6
        %v1025 = vperm.slane %v979, 6
        %v1026 = vmul.f32 %v1024, %v986
        %v1027 = vmul.f32 %v1025, %v987
        %v1028 = vperm.slane %v978, 7
        %v1029 = vperm.slane %v979, 7
        %v1030 = vmul.f32 %v1028, %v986
        %v1031 = vmul.f32 %v1029, %v987
        %v1032 = vpack.c.bf16 %v1027, %v1026
        %v1033 = vpack.c.bf16 %v1031, %v1030
        %1034 = vst [vmem:[#allocation2 + $0x130] sm:$0xff] %v1032
        %1035 = vst [vmem:[#allocation2 + $0x138] sm:$0xff] %v1033
        %s1036 = sadd.s32 %s407, 5
        %s1037 = smul.u32 %s1036, 4
        %s1038 = sld [smem:[#allocation5 + %s1037]]
        %s1039 = smul.f32 %s1038, 0.25
        %s1040 = sadd.s32 %s1037, 1
        %s1041 = sld [smem:[#allocation5 + %s1040]]
        %s1042 = smul.f32 %s1041, 0.25
        %s1043 = sadd.s32 %s1037, 2
        %s1044 = sld [smem:[#allocation5 + %s1043]]
        %s1045 = smul.f32 %s1044, 0.25
        %s1046 = sadd.s32 %s1037, 3
        %s1047 = sld [smem:[#allocation5 + %s1046]]
        %s1048 = smul.f32 %s1047, 0.25
        %s1049 = ssub.f32 %s1045, %s1039
        %s1050 = smax.f32 %s1049, 1.0
        %s1051 = smul.f32 %s1050, 0.14285715
        %s1052 = ssub.f32 %s1048, %s1042
        %s1053 = smax.f32 %s1052, 1.0
        %s1054 = smul.f32 %s1053, 0.14285715
        %v1055 = vstv %s1054
        %v1056 = vmul.f32 %v257, %v1055
        %v1057 = vstv %s1042
        %v1058 = vadd.f32 %v1057, %v1056
        %v1059 = vstv %s1051
        %v1060 = vmul.f32 %v257, %v1059
        %v1061 = vstv %s1039
        %v1062 = vadd.f32 %v1061, %v1060
        %vm1063 = vcmp.ge.f32.partialorder %v1058, -1.0
        %vm1064 = vcmp.le.f32.partialorder %v1058, 16.0
        %vm1065 = vmand %vm1063, %vm1064
        %vm1066 = vcmp.ge.f32.partialorder %v1062, -1.0
        %vm1067 = vcmp.le.f32.partialorder %v1062, 16.0
        %vm1068 = vmand %vm1066, %vm1067
        %v1069 = vmax.f32 %v1058, 0.0
        %v1070 = vmin.f32 %v1069, 15.0
        %v1071 = vmax.f32 %v1062, 0.0
        %v1072 = vmin.f32 %v1071, 15.0
        %v1073 = vsub.f32 %v1070, %v277
        %v1074 = vsub.f32 %v1070, %v278
        %v1075 = vand.u32 2147483647, %v1073
        %v1076 = vand.u32 2147483647, %v1074
        %v1077 = vsub.f32 1.0, %v1075
        %v1078 = vsub.f32 1.0, %v1076
        %v1079 = vmax.f32 %v1077, 0.0
        %v1080 = vmax.f32 %v1078, 0.0
        %v1081 = vsub.f32 %v1072, %v290
        %v1082 = vsub.f32 %v1072, %v291
        %v1083 = vand.u32 2147483647, %v1081
        %v1084 = vand.u32 2147483647, %v1082
        %v1085 = vsub.f32 1.0, %v1083
        %v1086 = vsub.f32 1.0, %v1084
        %v1087 = vmax.f32 %v1085, 0.0
        %v1088 = vmax.f32 %v1086, 0.0
        %v1089 = vsel %vm1065, 1, 0
        %vm1090 = vcmp.eq.s32.totalorder %v1089, 1
        %v1091 = vsel %vm1090, %v1079, 0.0
        %v1092 = vsel %vm1090, %v1080, 0.0
        %v1093 = vadd.f32 %v1091, 0.0
        %v1094 = vadd.f32 %v1092, 0.0
        %v1095 = vsel %vm1068, 1, 0
        %vm1096 = vcmp.eq.s32.totalorder %v1095, 1
        %v1097 = vsel %vm1096, %v1087, 0.0
        %v1098 = vsel %vm1096, %v1088, 0.0
        %v1099 = vadd.f32 %v1097, 0.0
        %v1100 = vadd.f32 %v1098, 0.0
        %v1101 = vmul.f32 %v314, %v1055
        %v1102 = vadd.f32 %v1057, %v1101
        %v1103 = vmul.f32 %v314, %v1059
        %v1104 = vadd.f32 %v1061, %v1103
        %vm1105 = vcmp.ge.f32.partialorder %v1102, -1.0
        %vm1106 = vcmp.le.f32.partialorder %v1102, 16.0
        %vm1107 = vmand %vm1105, %vm1106
        %vm1108 = vcmp.ge.f32.partialorder %v1104, -1.0
        %vm1109 = vcmp.le.f32.partialorder %v1104, 16.0
        %vm1110 = vmand %vm1108, %vm1109
        %v1111 = vmax.f32 %v1102, 0.0
        %v1112 = vmin.f32 %v1111, 15.0
        %v1113 = vmax.f32 %v1104, 0.0
        %v1114 = vmin.f32 %v1113, 15.0
        %v1115 = vsub.f32 %v1112, %v277
        %v1116 = vsub.f32 %v1112, %v278
        %v1117 = vand.u32 2147483647, %v1115
        %v1118 = vand.u32 2147483647, %v1116
        %v1119 = vsub.f32 1.0, %v1117
        %v1120 = vsub.f32 1.0, %v1118
        %v1121 = vmax.f32 %v1119, 0.0
        %v1122 = vmax.f32 %v1120, 0.0
        %v1123 = vsub.f32 %v1114, %v290
        %v1124 = vsub.f32 %v1114, %v291
        %v1125 = vand.u32 2147483647, %v1123
        %v1126 = vand.u32 2147483647, %v1124
        %v1127 = vsub.f32 1.0, %v1125
        %v1128 = vsub.f32 1.0, %v1126
        %v1129 = vmax.f32 %v1127, 0.0
        %v1130 = vmax.f32 %v1128, 0.0
        %v1131 = vsel %vm1107, 1, 0
        %vm1132 = vcmp.eq.s32.totalorder %v1131, 1
        %v1133 = vsel %vm1132, %v1121, 0.0
        %v1134 = vsel %vm1132, %v1122, 0.0
        %v1135 = vadd.f32 %v1093, %v1133
        %v1136 = vadd.f32 %v1094, %v1134
        %v1137 = vsel %vm1110, 1, 0
        %vm1138 = vcmp.eq.s32.totalorder %v1137, 1
        %v1139 = vsel %vm1138, %v1129, 0.0
        %v1140 = vsel %vm1138, %v1130, 0.0
        %v1141 = vadd.f32 %v1099, %v1139
        %v1142 = vadd.f32 %v1100, %v1140
        %v1143 = vmul.f32 %v1141, 0.25
        %v1144 = vmul.f32 %v1142, 0.25
        %v1145 = vperm.slane %v1135, 0
        %v1146 = vperm.slane %v1136, 0
        %v1147 = vmul.f32 %v1145, %v1143
        %v1148 = vmul.f32 %v1146, %v1144
        %v1149 = vperm.slane %v1135, 1
        %v1150 = vperm.slane %v1136, 1
        %v1151 = vmul.f32 %v1149, %v1143
        %v1152 = vmul.f32 %v1150, %v1144
        %v1153 = vpack.c.bf16 %v1148, %v1147
        %v1154 = vpack.c.bf16 %v1152, %v1151
        %1155 = vst [vmem:[#allocation2 + $0x140] sm:$0xff] %v1153
        %1156 = vst [vmem:[#allocation2 + $0x148] sm:$0xff] %v1154
        %v1157 = vperm.slane %v1135, 2
        %v1158 = vperm.slane %v1136, 2
        %v1159 = vmul.f32 %v1157, %v1143
        %v1160 = vmul.f32 %v1158, %v1144
        %v1161 = vperm.slane %v1135, 3
        %v1162 = vperm.slane %v1136, 3
        %v1163 = vmul.f32 %v1161, %v1143
        %v1164 = vmul.f32 %v1162, %v1144
        %v1165 = vpack.c.bf16 %v1160, %v1159
        %v1166 = vpack.c.bf16 %v1164, %v1163
        %1167 = vst [vmem:[#allocation2 + $0x150] sm:$0xff] %v1165
        %1168 = vst [vmem:[#allocation2 + $0x158] sm:$0xff] %v1166
        %v1169 = vperm.slane %v1135, 4
        %v1170 = vperm.slane %v1136, 4
        %v1171 = vmul.f32 %v1169, %v1143
        %v1172 = vmul.f32 %v1170, %v1144
        %v1173 = vperm.slane %v1135, 5
        %v1174 = vperm.slane %v1136, 5
        %v1175 = vmul.f32 %v1173, %v1143
        %v1176 = vmul.f32 %v1174, %v1144
        %v1177 = vpack.c.bf16 %v1172, %v1171
        %v1178 = vpack.c.bf16 %v1176, %v1175
        %1179 = vst [vmem:[#allocation2 + $0x160] sm:$0xff] %v1177
        %1180 = vst [vmem:[#allocation2 + $0x168] sm:$0xff] %v1178
        %v1181 = vperm.slane %v1135, 6
        %v1182 = vperm.slane %v1136, 6
        %v1183 = vmul.f32 %v1181, %v1143
        %v1184 = vmul.f32 %v1182, %v1144
        %v1185 = vperm.slane %v1135, 7
        %v1186 = vperm.slane %v1136, 7
        %v1187 = vmul.f32 %v1185, %v1143
        %v1188 = vmul.f32 %v1186, %v1144
        %v1189 = vpack.c.bf16 %v1184, %v1183
        %v1190 = vpack.c.bf16 %v1188, %v1187
        %1191 = vst [vmem:[#allocation2 + $0x170] sm:$0xff] %v1189
        %1192 = vst [vmem:[#allocation2 + $0x178] sm:$0xff] %v1190
        %s1193 = sadd.s32 %s407, 6
        %s1194 = smul.u32 %s1193, 4
        %s1195 = sld [smem:[#allocation5 + %s1194]]
        %s1196 = smul.f32 %s1195, 0.25
        %s1197 = sadd.s32 %s1194, 1
        %s1198 = sld [smem:[#allocation5 + %s1197]]
        %s1199 = smul.f32 %s1198, 0.25
        %s1200 = sadd.s32 %s1194, 2
        %s1201 = sld [smem:[#allocation5 + %s1200]]
        %s1202 = smul.f32 %s1201, 0.25
        %s1203 = sadd.s32 %s1194, 3
        %s1204 = sld [smem:[#allocation5 + %s1203]]
        %s1205 = smul.f32 %s1204, 0.25
        %s1206 = ssub.f32 %s1202, %s1196
        %s1207 = smax.f32 %s1206, 1.0
        %s1208 = smul.f32 %s1207, 0.14285715
        %s1209 = ssub.f32 %s1205, %s1199
        %s1210 = smax.f32 %s1209, 1.0
        %s1211 = smul.f32 %s1210, 0.14285715
        %v1212 = vstv %s1211
        %v1213 = vmul.f32 %v257, %v1212
        %v1214 = vstv %s1199
        %v1215 = vadd.f32 %v1214, %v1213
        %v1216 = vstv %s1208
        %v1217 = vmul.f32 %v257, %v1216
        %v1218 = vstv %s1196
        %v1219 = vadd.f32 %v1218, %v1217
        %vm1220 = vcmp.ge.f32.partialorder %v1215, -1.0
        %vm1221 = vcmp.le.f32.partialorder %v1215, 16.0
        %vm1222 = vmand %vm1220, %vm1221
        %vm1223 = vcmp.ge.f32.partialorder %v1219, -1.0
        %vm1224 = vcmp.le.f32.partialorder %v1219, 16.0
        %vm1225 = vmand %vm1223, %vm1224
        %v1226 = vmax.f32 %v1215, 0.0
        %v1227 = vmin.f32 %v1226, 15.0
        %v1228 = vmax.f32 %v1219, 0.0
        %v1229 = vmin.f32 %v1228, 15.0
        %v1230 = vsub.f32 %v1227, %v277
        %v1231 = vsub.f32 %v1227, %v278
        %v1232 = vand.u32 2147483647, %v1230
        %v1233 = vand.u32 2147483647, %v1231
        %v1234 = vsub.f32 1.0, %v1232
        %v1235 = vsub.f32 1.0, %v1233
        %v1236 = vmax.f32 %v1234, 0.0
        %v1237 = vmax.f32 %v1235, 0.0
        %v1238 = vsub.f32 %v1229, %v290
        %v1239 = vsub.f32 %v1229, %v291
        %v1240 = vand.u32 2147483647, %v1238
        %v1241 = vand.u32 2147483647, %v1239
        %v1242 = vsub.f32 1.0, %v1240
        %v1243 = vsub.f32 1.0, %v1241
        %v1244 = vmax.f32 %v1242, 0.0
        %v1245 = vmax.f32 %v1243, 0.0
        %v1246 = vsel %vm1222, 1, 0
        %vm1247 = vcmp.eq.s32.totalorder %v1246, 1
        %v1248 = vsel %vm1247, %v1236, 0.0
        %v1249 = vsel %vm1247, %v1237, 0.0
        %v1250 = vadd.f32 %v1248, 0.0
        %v1251 = vadd.f32 %v1249, 0.0
        %v1252 = vsel %vm1225, 1, 0
        %vm1253 = vcmp.eq.s32.totalorder %v1252, 1
        %v1254 = vsel %vm1253, %v1244, 0.0
        %v1255 = vsel %vm1253, %v1245, 0.0
        %v1256 = vadd.f32 %v1254, 0.0
        %v1257 = vadd.f32 %v1255, 0.0
        %v1258 = vmul.f32 %v314, %v1212
        %v1259 = vadd.f32 %v1214, %v1258
        %v1260 = vmul.f32 %v314, %v1216
        %v1261 = vadd.f32 %v1218, %v1260
        %vm1262 = vcmp.ge.f32.partialorder %v1259, -1.0
        %vm1263 = vcmp.le.f32.partialorder %v1259, 16.0
        %vm1264 = vmand %vm1262, %vm1263
        %vm1265 = vcmp.ge.f32.partialorder %v1261, -1.0
        %vm1266 = vcmp.le.f32.partialorder %v1261, 16.0
        %vm1267 = vmand %vm1265, %vm1266
        %v1268 = vmax.f32 %v1259, 0.0
        %v1269 = vmin.f32 %v1268, 15.0
        %v1270 = vmax.f32 %v1261, 0.0
        %v1271 = vmin.f32 %v1270, 15.0
        %v1272 = vsub.f32 %v1269, %v277
        %v1273 = vsub.f32 %v1269, %v278
        %v1274 = vand.u32 2147483647, %v1272
        %v1275 = vand.u32 2147483647, %v1273
        %v1276 = vsub.f32 1.0, %v1274
        %v1277 = vsub.f32 1.0, %v1275
        %v1278 = vmax.f32 %v1276, 0.0
        %v1279 = vmax.f32 %v1277, 0.0
        %v1280 = vsub.f32 %v1271, %v290
        %v1281 = vsub.f32 %v1271, %v291
        %v1282 = vand.u32 2147483647, %v1280
        %v1283 = vand.u32 2147483647, %v1281
        %v1284 = vsub.f32 1.0, %v1282
        %v1285 = vsub.f32 1.0, %v1283
        %v1286 = vmax.f32 %v1284, 0.0
        %v1287 = vmax.f32 %v1285, 0.0
        %v1288 = vsel %vm1264, 1, 0
        %vm1289 = vcmp.eq.s32.totalorder %v1288, 1
        %v1290 = vsel %vm1289, %v1278, 0.0
        %v1291 = vsel %vm1289, %v1279, 0.0
        %v1292 = vadd.f32 %v1250, %v1290
        %v1293 = vadd.f32 %v1251, %v1291
        %v1294 = vsel %vm1267, 1, 0
        %vm1295 = vcmp.eq.s32.totalorder %v1294, 1
        %v1296 = vsel %vm1295, %v1286, 0.0
        %v1297 = vsel %vm1295, %v1287, 0.0
        %v1298 = vadd.f32 %v1256, %v1296
        %v1299 = vadd.f32 %v1257, %v1297
        %v1300 = vmul.f32 %v1298, 0.25
        %v1301 = vmul.f32 %v1299, 0.25
        %v1302 = vperm.slane %v1292, 0
        %v1303 = vperm.slane %v1293, 0
        %v1304 = vmul.f32 %v1302, %v1300
        %v1305 = vmul.f32 %v1303, %v1301
        %v1306 = vperm.slane %v1292, 1
        %v1307 = vperm.slane %v1293, 1
        %v1308 = vmul.f32 %v1306, %v1300
        %v1309 = vmul.f32 %v1307, %v1301
        %v1310 = vpack.c.bf16 %v1305, %v1304
        %v1311 = vpack.c.bf16 %v1309, %v1308
        %1312 = vst [vmem:[#allocation2 + $0x180] sm:$0xff] %v1310
        %1313 = vst [vmem:[#allocation2 + $0x188] sm:$0xff] %v1311
        %v1314 = vperm.slane %v1292, 2
        %v1315 = vperm.slane %v1293, 2
        %v1316 = vmul.f32 %v1314, %v1300
        %v1317 = vmul.f32 %v1315, %v1301
        %v1318 = vperm.slane %v1292, 3
        %v1319 = vperm.slane %v1293, 3
        %v1320 = vmul.f32 %v1318, %v1300
        %v1321 = vmul.f32 %v1319, %v1301
        %v1322 = vpack.c.bf16 %v1317, %v1316
        %v1323 = vpack.c.bf16 %v1321, %v1320
        %1324 = vst [vmem:[#allocation2 + $0x190] sm:$0xff] %v1322
        %1325 = vst [vmem:[#allocation2 + $0x198] sm:$0xff] %v1323
        %v1326 = vperm.slane %v1292, 4
        %v1327 = vperm.slane %v1293, 4
        %v1328 = vmul.f32 %v1326, %v1300
        %v1329 = vmul.f32 %v1327, %v1301
        %v1330 = vperm.slane %v1292, 5
        %v1331 = vperm.slane %v1293, 5
        %v1332 = vmul.f32 %v1330, %v1300
        %v1333 = vmul.f32 %v1331, %v1301
        %v1334 = vpack.c.bf16 %v1329, %v1328
        %v1335 = vpack.c.bf16 %v1333, %v1332
        %1336 = vst [vmem:[#allocation2 + $0x1a0] sm:$0xff] %v1334
        %1337 = vst [vmem:[#allocation2 + $0x1a8] sm:$0xff] %v1335
        %v1338 = vperm.slane %v1292, 6
        %v1339 = vperm.slane %v1293, 6
        %v1340 = vmul.f32 %v1338, %v1300
        %v1341 = vmul.f32 %v1339, %v1301
        %v1342 = vperm.slane %v1292, 7
        %v1343 = vperm.slane %v1293, 7
        %v1344 = vmul.f32 %v1342, %v1300
        %v1345 = vmul.f32 %v1343, %v1301
        %v1346 = vpack.c.bf16 %v1341, %v1340
        %v1347 = vpack.c.bf16 %v1345, %v1344
        %1348 = vst [vmem:[#allocation2 + $0x1b0] sm:$0xff] %v1346
        %1349 = vst [vmem:[#allocation2 + $0x1b8] sm:$0xff] %v1347
        %s1350 = sadd.s32 %s407, 7
        %s1351 = smul.u32 %s1350, 4
        %s1352 = sld [smem:[#allocation5 + %s1351]]
        %s1353 = smul.f32 %s1352, 0.25
        %s1354 = sadd.s32 %s1351, 1
        %s1355 = sld [smem:[#allocation5 + %s1354]]
        %s1356 = smul.f32 %s1355, 0.25
        %s1357 = sadd.s32 %s1351, 2
        %s1358 = sld [smem:[#allocation5 + %s1357]]
        %s1359 = smul.f32 %s1358, 0.25
        %s1360 = sadd.s32 %s1351, 3
        %s1361 = sld [smem:[#allocation5 + %s1360]]
        %s1362 = smul.f32 %s1361, 0.25
        %s1363 = ssub.f32 %s1359, %s1353
        %s1364 = smax.f32 %s1363, 1.0
        %s1365 = smul.f32 %s1364, 0.14285715
        %s1366 = ssub.f32 %s1362, %s1356
        %s1367 = smax.f32 %s1366, 1.0
        %s1368 = smul.f32 %s1367, 0.14285715
        %v1369 = vstv %s1368
        %v1370 = vmul.f32 %v257, %v1369
        %v1371 = vstv %s1356
        %v1372 = vadd.f32 %v1371, %v1370
        %v1373 = vstv %s1365
        %v1374 = vmul.f32 %v257, %v1373
        %v1375 = vstv %s1353
        %v1376 = vadd.f32 %v1375, %v1374
        %vm1377 = vcmp.ge.f32.partialorder %v1372, -1.0
        %vm1378 = vcmp.le.f32.partialorder %v1372, 16.0
        %vm1379 = vmand %vm1377, %vm1378
        %vm1380 = vcmp.ge.f32.partialorder %v1376, -1.0
        %vm1381 = vcmp.le.f32.partialorder %v1376, 16.0
        %vm1382 = vmand %vm1380, %vm1381
        %v1383 = vmax.f32 %v1372, 0.0
        %v1384 = vmin.f32 %v1383, 15.0
        %v1385 = vmax.f32 %v1376, 0.0
        %v1386 = vmin.f32 %v1385, 15.0
        %v1387 = vsub.f32 %v1384, %v277
        %v1388 = vsub.f32 %v1384, %v278
        %v1389 = vand.u32 2147483647, %v1387
        %v1390 = vand.u32 2147483647, %v1388
        %v1391 = vsub.f32 1.0, %v1389
        %v1392 = vsub.f32 1.0, %v1390
        %v1393 = vmax.f32 %v1391, 0.0
        %v1394 = vmax.f32 %v1392, 0.0
        %v1395 = vsub.f32 %v1386, %v290
        %v1396 = vsub.f32 %v1386, %v291
        %v1397 = vand.u32 2147483647, %v1395
        %v1398 = vand.u32 2147483647, %v1396
        %v1399 = vsub.f32 1.0, %v1397
        %v1400 = vsub.f32 1.0, %v1398
        %v1401 = vmax.f32 %v1399, 0.0
        %v1402 = vmax.f32 %v1400, 0.0
        %v1403 = vsel %vm1379, 1, 0
        %vm1404 = vcmp.eq.s32.totalorder %v1403, 1
        %v1405 = vsel %vm1404, %v1393, 0.0
        %v1406 = vsel %vm1404, %v1394, 0.0
        %v1407 = vadd.f32 %v1405, 0.0
        %v1408 = vadd.f32 %v1406, 0.0
        %v1409 = vsel %vm1382, 1, 0
        %vm1410 = vcmp.eq.s32.totalorder %v1409, 1
        %v1411 = vsel %vm1410, %v1401, 0.0
        %v1412 = vsel %vm1410, %v1402, 0.0
        %v1413 = vadd.f32 %v1411, 0.0
        %v1414 = vadd.f32 %v1412, 0.0
        %v1415 = vmul.f32 %v314, %v1369
        %v1416 = vadd.f32 %v1371, %v1415
        %v1417 = vmul.f32 %v314, %v1373
        %v1418 = vadd.f32 %v1375, %v1417
        %vm1419 = vcmp.ge.f32.partialorder %v1416, -1.0
        %vm1420 = vcmp.le.f32.partialorder %v1416, 16.0
        %vm1421 = vmand %vm1419, %vm1420
        %vm1422 = vcmp.ge.f32.partialorder %v1418, -1.0
        %vm1423 = vcmp.le.f32.partialorder %v1418, 16.0
        %vm1424 = vmand %vm1422, %vm1423
        %v1425 = vmax.f32 %v1416, 0.0
        %v1426 = vmin.f32 %v1425, 15.0
        %v1427 = vmax.f32 %v1418, 0.0
        %v1428 = vmin.f32 %v1427, 15.0
        %v1429 = vsub.f32 %v1426, %v277
        %v1430 = vsub.f32 %v1426, %v278
        %v1431 = vand.u32 2147483647, %v1429
        %v1432 = vand.u32 2147483647, %v1430
        %v1433 = vsub.f32 1.0, %v1431
        %v1434 = vsub.f32 1.0, %v1432
        %v1435 = vmax.f32 %v1433, 0.0
        %v1436 = vmax.f32 %v1434, 0.0
        %v1437 = vsub.f32 %v1428, %v290
        %v1438 = vsub.f32 %v1428, %v291
        %v1439 = vand.u32 2147483647, %v1437
        %v1440 = vand.u32 2147483647, %v1438
        %v1441 = vsub.f32 1.0, %v1439
        %v1442 = vsub.f32 1.0, %v1440
        %v1443 = vmax.f32 %v1441, 0.0
        %v1444 = vmax.f32 %v1442, 0.0
        %v1445 = vsel %vm1421, 1, 0
        %vm1446 = vcmp.eq.s32.totalorder %v1445, 1
        %v1447 = vsel %vm1446, %v1435, 0.0
        %v1448 = vsel %vm1446, %v1436, 0.0
        %v1449 = vadd.f32 %v1407, %v1447
        %v1450 = vadd.f32 %v1408, %v1448
        %v1451 = vsel %vm1424, 1, 0
        %vm1452 = vcmp.eq.s32.totalorder %v1451, 1
        %v1453 = vsel %vm1452, %v1443, 0.0
        %v1454 = vsel %vm1452, %v1444, 0.0
        %v1455 = vadd.f32 %v1413, %v1453
        %v1456 = vadd.f32 %v1414, %v1454
        %v1457 = vmul.f32 %v1455, 0.25
        %v1458 = vmul.f32 %v1456, 0.25
        %v1459 = vperm.slane %v1449, 0
        %v1460 = vperm.slane %v1450, 0
        %v1461 = vmul.f32 %v1459, %v1457
        %v1462 = vmul.f32 %v1460, %v1458
        %v1463 = vperm.slane %v1449, 1
        %v1464 = vperm.slane %v1450, 1
        %v1465 = vmul.f32 %v1463, %v1457
        %v1466 = vmul.f32 %v1464, %v1458
        %v1467 = vpack.c.bf16 %v1462, %v1461
        %v1468 = vpack.c.bf16 %v1466, %v1465
        %1469 = vst [vmem:[#allocation2 + $0x1c0] sm:$0xff] %v1467
        %1470 = vst [vmem:[#allocation2 + $0x1c8] sm:$0xff] %v1468
        %v1471 = vperm.slane %v1449, 2
        %v1472 = vperm.slane %v1450, 2
        %v1473 = vmul.f32 %v1471, %v1457
        %v1474 = vmul.f32 %v1472, %v1458
        %v1475 = vperm.slane %v1449, 3
        %v1476 = vperm.slane %v1450, 3
        %v1477 = vmul.f32 %v1475, %v1457
        %v1478 = vmul.f32 %v1476, %v1458
        %v1479 = vpack.c.bf16 %v1474, %v1473
        %v1480 = vpack.c.bf16 %v1478, %v1477
        %1481 = vst [vmem:[#allocation2 + $0x1d0] sm:$0xff] %v1479
        %1482 = vst [vmem:[#allocation2 + $0x1d8] sm:$0xff] %v1480
        %v1483 = vperm.slane %v1449, 4
        %v1484 = vperm.slane %v1450, 4
        %v1485 = vmul.f32 %v1483, %v1457
        %v1486 = vmul.f32 %v1484, %v1458
        %v1487 = vperm.slane %v1449, 5
        %v1488 = vperm.slane %v1450, 5
        %v1489 = vmul.f32 %v1487, %v1457
        %v1490 = vmul.f32 %v1488, %v1458
        %v1491 = vpack.c.bf16 %v1486, %v1485
        %v1492 = vpack.c.bf16 %v1490, %v1489
        %1493 = vst [vmem:[#allocation2 + $0x1e0] sm:$0xff] %v1491
        %1494 = vst [vmem:[#allocation2 + $0x1e8] sm:$0xff] %v1492
        %v1495 = vperm.slane %v1449, 6
        %v1496 = vperm.slane %v1450, 6
        %v1497 = vmul.f32 %v1495, %v1457
        %v1498 = vmul.f32 %v1496, %v1458
        %v1499 = vperm.slane %v1449, 7
        %v1500 = vperm.slane %v1450, 7
        %v1501 = vmul.f32 %v1499, %v1457
        %v1502 = vmul.f32 %v1500, %v1458
        %v1503 = vpack.c.bf16 %v1498, %v1497
        %v1504 = vpack.c.bf16 %v1502, %v1501
        %1505 = vst [vmem:[#allocation2 + $0x1f0] sm:$0xff] %v1503
        %1506 = vst [vmem:[#allocation2 + $0x1f8] sm:$0xff] %v1504
        %v1507 = vld [vmem:[%s202] sm:$0xff]
        %v1508 = vld [vmem:[%s202 + $0x8] sm:$0xff]
        %v1509 = vld [vmem:[%s202 + $0x10] sm:$0xff]
        %v1510 = vld [vmem:[%s202 + $0x18] sm:$0xff]
        %v1511 = vld [vmem:[#allocation2] sm:$0xff]
        %v1512 = vld [vmem:[#allocation2 + $0x8] sm:$0xff]
        %v1513 = vld [vmem:[#allocation2 + $0x10] sm:$0xff]
        %v1514 = vld [vmem:[#allocation2 + $0x18] sm:$0xff]
        %v1515 = vld [vmem:[#allocation2 + $0x20] sm:$0xff]
        %v1516 = vld [vmem:[#allocation2 + $0x28] sm:$0xff]
        %v1517 = vld [vmem:[#allocation2 + $0x30] sm:$0xff]
        %v1518 = vld [vmem:[#allocation2 + $0x38] sm:$0xff]
        %v1519 = vld [vmem:[#allocation2 + $0x40] sm:$0xff]
        %v1520 = vld [vmem:[#allocation2 + $0x48] sm:$0xff]
        %v1521 = vld [vmem:[#allocation2 + $0x50] sm:$0xff]
        %v1522 = vld [vmem:[#allocation2 + $0x58] sm:$0xff]
        %v1523 = vld [vmem:[#allocation2 + $0x60] sm:$0xff]
        %v1524 = vld [vmem:[#allocation2 + $0x68] sm:$0xff]
        %v1525 = vld [vmem:[#allocation2 + $0x70] sm:$0xff]
        %v1526 = vld [vmem:[#allocation2 + $0x78] sm:$0xff]
        %v1527 = vld [vmem:[#allocation2 + $0x80] sm:$0xff]
        %v1528 = vld [vmem:[#allocation2 + $0x88] sm:$0xff]
        %v1529 = vld [vmem:[#allocation2 + $0x90] sm:$0xff]
        %v1530 = vld [vmem:[#allocation2 + $0x98] sm:$0xff]
        %v1531 = vld [vmem:[#allocation2 + $0xa0] sm:$0xff]
        %v1532 = vld [vmem:[#allocation2 + $0xa8] sm:$0xff]
        %v1533 = vld [vmem:[#allocation2 + $0xb0] sm:$0xff]
        %v1534 = vld [vmem:[#allocation2 + $0xb8] sm:$0xff]
        %v1535 = vld [vmem:[#allocation2 + $0xc0] sm:$0xff]
        %v1536 = vld [vmem:[#allocation2 + $0xc8] sm:$0xff]
        %v1537 = vld [vmem:[#allocation2 + $0xd0] sm:$0xff]
        %v1538 = vld [vmem:[#allocation2 + $0xd8] sm:$0xff]
        %v1539 = vld [vmem:[#allocation2 + $0xe0] sm:$0xff]
        %v1540 = vld [vmem:[#allocation2 + $0xe8] sm:$0xff]
        %v1541 = vld [vmem:[#allocation2 + $0xf0] sm:$0xff]
        %v1542 = vld [vmem:[#allocation2 + $0xf8] sm:$0xff]
        %v1543 = vld [vmem:[#allocation2 + $0x100] sm:$0xff]
        %v1544 = vld [vmem:[#allocation2 + $0x108] sm:$0xff]
        %v1545 = vld [vmem:[#allocation2 + $0x110] sm:$0xff]
        %v1546 = vld [vmem:[#allocation2 + $0x118] sm:$0xff]
        %v1547 = vld [vmem:[#allocation2 + $0x120] sm:$0xff]
        %v1548 = vld [vmem:[#allocation2 + $0x128] sm:$0xff]
        %v1549 = vld [vmem:[#allocation2 + $0x130] sm:$0xff]
        %v1550 = vld [vmem:[#allocation2 + $0x138] sm:$0xff]
        %v1551 = vld [vmem:[#allocation2 + $0x140] sm:$0xff]
        %v1552 = vld [vmem:[#allocation2 + $0x148] sm:$0xff]
        %v1553 = vld [vmem:[#allocation2 + $0x150] sm:$0xff]
        %v1554 = vld [vmem:[#allocation2 + $0x158] sm:$0xff]
        %v1555 = vld [vmem:[#allocation2 + $0x160] sm:$0xff]
        %v1556 = vld [vmem:[#allocation2 + $0x168] sm:$0xff]
        %v1557 = vld [vmem:[#allocation2 + $0x170] sm:$0xff]
        %v1558 = vld [vmem:[#allocation2 + $0x178] sm:$0xff]
        %v1559 = vld [vmem:[#allocation2 + $0x180] sm:$0xff]
        %v1560 = vld [vmem:[#allocation2 + $0x188] sm:$0xff]
        %v1561 = vld [vmem:[#allocation2 + $0x190] sm:$0xff]
        %v1562 = vld [vmem:[#allocation2 + $0x198] sm:$0xff]
        %v1563 = vld [vmem:[#allocation2 + $0x1a0] sm:$0xff]
        %v1564 = vld [vmem:[#allocation2 + $0x1a8] sm:$0xff]
        %v1565 = vld [vmem:[#allocation2 + $0x1b0] sm:$0xff]
        %v1566 = vld [vmem:[#allocation2 + $0x1b8] sm:$0xff]
        %v1567 = vld [vmem:[#allocation2 + $0x1c0] sm:$0xff]
        %v1568 = vld [vmem:[#allocation2 + $0x1c8] sm:$0xff]
        %v1569 = vld [vmem:[#allocation2 + $0x1d0] sm:$0xff]
        %v1570 = vld [vmem:[#allocation2 + $0x1d8] sm:$0xff]
        %v1571 = vld [vmem:[#allocation2 + $0x1e0] sm:$0xff]
        %v1572 = vld [vmem:[#allocation2 + $0x1e8] sm:$0xff]
        %v1573 = vld [vmem:[#allocation2 + $0x1f0] sm:$0xff]
        %v1574 = vld [vmem:[#allocation2 + $0x1f8] sm:$0xff]
        %v1579 = vunpack.c.l.b16 %v1507
        %v1580 = vunpack.c.h.b16 %v1507
        %v1581 = vunpack.c.l.b16 %v1508
        %v1582 = vunpack.c.h.b16 %v1508
        %v1583 = vunpack.c.l.b16 %v1509
        %v1584 = vunpack.c.h.b16 %v1509
        %v1585 = vunpack.c.l.b16 %v1510
        %v1586 = vunpack.c.h.b16 %v1510
        %v1587 = vpack.c.b16 %v1581, %v1579
        %v1588 = vpack.c.b16 %v1582, %v1580
        %v1589 = vpack.c.b16 %v1585, %v1583
        %v1590 = vpack.c.b16 %v1586, %v1584
        %v1659 = vunpack.c.l.b16 %v1511
        %v1660 = vunpack.c.h.b16 %v1511
        %v1661 = vunpack.c.l.b16 %v1512
        %v1662 = vunpack.c.h.b16 %v1512
        %v1663 = vunpack.c.l.b16 %v1513
        %v1664 = vunpack.c.h.b16 %v1513
        %v1665 = vunpack.c.l.b16 %v1514
        %v1666 = vunpack.c.h.b16 %v1514
        %v1667 = vunpack.c.l.b16 %v1515
        %v1668 = vunpack.c.h.b16 %v1515
        %v1669 = vunpack.c.l.b16 %v1516
        %v1670 = vunpack.c.h.b16 %v1516
        %v1671 = vunpack.c.l.b16 %v1517
        %v1672 = vunpack.c.h.b16 %v1517
        %v1673 = vunpack.c.l.b16 %v1518
        %v1674 = vunpack.c.h.b16 %v1518
        %v1675 = vunpack.c.l.b16 %v1519
        %v1676 = vunpack.c.h.b16 %v1519
        %v1677 = vunpack.c.l.b16 %v1520
        %v1678 = vunpack.c.h.b16 %v1520
        %v1679 = vunpack.c.l.b16 %v1521
        %v1680 = vunpack.c.h.b16 %v1521
        %v1681 = vunpack.c.l.b16 %v1522
        %v1682 = vunpack.c.h.b16 %v1522
        %v1683 = vunpack.c.l.b16 %v1523
        %v1684 = vunpack.c.h.b16 %v1523
        %v1685 = vunpack.c.l.b16 %v1524
        %v1686 = vunpack.c.h.b16 %v1524
        %v1687 = vunpack.c.l.b16 %v1525
        %v1688 = vunpack.c.h.b16 %v1525
        %v1689 = vunpack.c.l.b16 %v1526
        %v1690 = vunpack.c.h.b16 %v1526
        %v1691 = vunpack.c.l.b16 %v1527
        %v1692 = vunpack.c.h.b16 %v1527
        %v1693 = vunpack.c.l.b16 %v1528
        %v1694 = vunpack.c.h.b16 %v1528
        %v1695 = vunpack.c.l.b16 %v1529
        %v1696 = vunpack.c.h.b16 %v1529
        %v1697 = vunpack.c.l.b16 %v1530
        %v1698 = vunpack.c.h.b16 %v1530
        %v1699 = vunpack.c.l.b16 %v1531
        %v1700 = vunpack.c.h.b16 %v1531
        %v1701 = vunpack.c.l.b16 %v1532
        %v1702 = vunpack.c.h.b16 %v1532
        %v1703 = vunpack.c.l.b16 %v1533
        %v1704 = vunpack.c.h.b16 %v1533
        %v1705 = vunpack.c.l.b16 %v1534
        %v1706 = vunpack.c.h.b16 %v1534
        %v1707 = vunpack.c.l.b16 %v1535
        %v1708 = vunpack.c.h.b16 %v1535
        %v1709 = vunpack.c.l.b16 %v1536
        %v1710 = vunpack.c.h.b16 %v1536
        %v1711 = vunpack.c.l.b16 %v1537
        %v1712 = vunpack.c.h.b16 %v1537
        %v1713 = vunpack.c.l.b16 %v1538
        %v1714 = vunpack.c.h.b16 %v1538
        %v1715 = vunpack.c.l.b16 %v1539
        %v1716 = vunpack.c.h.b16 %v1539
        %v1717 = vunpack.c.l.b16 %v1540
        %v1718 = vunpack.c.h.b16 %v1540
        %v1719 = vunpack.c.l.b16 %v1541
        %v1720 = vunpack.c.h.b16 %v1541
        %v1721 = vunpack.c.l.b16 %v1542
        %v1722 = vunpack.c.h.b16 %v1542
        %v1723 = vunpack.c.l.b16 %v1543
        %v1724 = vunpack.c.h.b16 %v1543
        %v1725 = vunpack.c.l.b16 %v1544
        %v1726 = vunpack.c.h.b16 %v1544
        %v1727 = vunpack.c.l.b16 %v1545
        %v1728 = vunpack.c.h.b16 %v1545
        %v1729 = vunpack.c.l.b16 %v1546
        %v1730 = vunpack.c.h.b16 %v1546
        %v1731 = vunpack.c.l.b16 %v1547
        %v1732 = vunpack.c.h.b16 %v1547
        %v1733 = vunpack.c.l.b16 %v1548
        %v1734 = vunpack.c.h.b16 %v1548
        %v1735 = vunpack.c.l.b16 %v1549
        %v1736 = vunpack.c.h.b16 %v1549
        %v1737 = vunpack.c.l.b16 %v1550
        %v1738 = vunpack.c.h.b16 %v1550
        %v1739 = vunpack.c.l.b16 %v1551
        %v1740 = vunpack.c.h.b16 %v1551
        %v1741 = vunpack.c.l.b16 %v1552
        %v1742 = vunpack.c.h.b16 %v1552
        %v1743 = vunpack.c.l.b16 %v1553
        %v1744 = vunpack.c.h.b16 %v1553
        %v1745 = vunpack.c.l.b16 %v1554
        %v1746 = vunpack.c.h.b16 %v1554
        %v1747 = vunpack.c.l.b16 %v1555
        %v1748 = vunpack.c.h.b16 %v1555
        %v1749 = vunpack.c.l.b16 %v1556
        %v1750 = vunpack.c.h.b16 %v1556
        %v1751 = vunpack.c.l.b16 %v1557
        %v1752 = vunpack.c.h.b16 %v1557
        %v1753 = vunpack.c.l.b16 %v1558
        %v1754 = vunpack.c.h.b16 %v1558
        %v1755 = vunpack.c.l.b16 %v1559
        %v1756 = vunpack.c.h.b16 %v1559
        %v1757 = vunpack.c.l.b16 %v1560
        %v1758 = vunpack.c.h.b16 %v1560
        %v1759 = vunpack.c.l.b16 %v1561
        %v1760 = vunpack.c.h.b16 %v1561
        %v1761 = vunpack.c.l.b16 %v1562
        %v1762 = vunpack.c.h.b16 %v1562
        %v1763 = vunpack.c.l.b16 %v1563
        %v1764 = vunpack.c.h.b16 %v1563
        %v1765 = vunpack.c.l.b16 %v1564
        %v1766 = vunpack.c.h.b16 %v1564
        %v1767 = vunpack.c.l.b16 %v1565
        %v1768 = vunpack.c.h.b16 %v1565
        %v1769 = vunpack.c.l.b16 %v1566
        %v1770 = vunpack.c.h.b16 %v1566
        %v1771 = vunpack.c.l.b16 %v1567
        %v1772 = vunpack.c.h.b16 %v1567
        %v1773 = vunpack.c.l.b16 %v1568
        %v1774 = vunpack.c.h.b16 %v1568
        %v1775 = vunpack.c.l.b16 %v1569
        %v1776 = vunpack.c.h.b16 %v1569
        %v1777 = vunpack.c.l.b16 %v1570
        %v1778 = vunpack.c.h.b16 %v1570
        %v1779 = vunpack.c.l.b16 %v1571
        %v1780 = vunpack.c.h.b16 %v1571
        %v1781 = vunpack.c.l.b16 %v1572
        %v1782 = vunpack.c.h.b16 %v1572
        %v1783 = vunpack.c.l.b16 %v1573
        %v1784 = vunpack.c.h.b16 %v1573
        %v1785 = vunpack.c.l.b16 %v1574
        %v1786 = vunpack.c.h.b16 %v1574
        %v1787 = vpack.c.b16 %v1661, %v1659
        %v1788 = vpack.c.b16 %v1662, %v1660
        %v1789 = vpack.c.b16 %v1665, %v1663
        %v1790 = vpack.c.b16 %v1666, %v1664
        %v1791 = vpack.c.b16 %v1669, %v1667
        %v1792 = vpack.c.b16 %v1670, %v1668
        %v1793 = vpack.c.b16 %v1673, %v1671
        %v1794 = vpack.c.b16 %v1674, %v1672
        %v1795 = vpack.c.b16 %v1677, %v1675
        %v1796 = vpack.c.b16 %v1678, %v1676
        %v1797 = vpack.c.b16 %v1681, %v1679
        %v1798 = vpack.c.b16 %v1682, %v1680
        %v1799 = vpack.c.b16 %v1685, %v1683
        %v1800 = vpack.c.b16 %v1686, %v1684
        %v1801 = vpack.c.b16 %v1689, %v1687
        %v1802 = vpack.c.b16 %v1690, %v1688
        %v1803 = vpack.c.b16 %v1693, %v1691
        %v1804 = vpack.c.b16 %v1694, %v1692
        %v1805 = vpack.c.b16 %v1697, %v1695
        %v1806 = vpack.c.b16 %v1698, %v1696
        %v1807 = vpack.c.b16 %v1701, %v1699
        %v1808 = vpack.c.b16 %v1702, %v1700
        %v1809 = vpack.c.b16 %v1705, %v1703
        %v1810 = vpack.c.b16 %v1706, %v1704
        %v1811 = vpack.c.b16 %v1709, %v1707
        %v1812 = vpack.c.b16 %v1710, %v1708
        %v1813 = vpack.c.b16 %v1713, %v1711
        %v1814 = vpack.c.b16 %v1714, %v1712
        %v1815 = vpack.c.b16 %v1717, %v1715
        %v1816 = vpack.c.b16 %v1718, %v1716
        %v1817 = vpack.c.b16 %v1721, %v1719
        %v1818 = vpack.c.b16 %v1722, %v1720
        %v1819 = vpack.c.b16 %v1725, %v1723
        %v1820 = vpack.c.b16 %v1726, %v1724
        %v1821 = vpack.c.b16 %v1729, %v1727
        %v1822 = vpack.c.b16 %v1730, %v1728
        %v1823 = vpack.c.b16 %v1733, %v1731
        %v1824 = vpack.c.b16 %v1734, %v1732
        %v1825 = vpack.c.b16 %v1737, %v1735
        %v1826 = vpack.c.b16 %v1738, %v1736
        %v1827 = vpack.c.b16 %v1741, %v1739
        %v1828 = vpack.c.b16 %v1742, %v1740
        %v1829 = vpack.c.b16 %v1745, %v1743
        %v1830 = vpack.c.b16 %v1746, %v1744
        %v1831 = vpack.c.b16 %v1749, %v1747
        %v1832 = vpack.c.b16 %v1750, %v1748
        %v1833 = vpack.c.b16 %v1753, %v1751
        %v1834 = vpack.c.b16 %v1754, %v1752
        %v1835 = vpack.c.b16 %v1757, %v1755
        %v1836 = vpack.c.b16 %v1758, %v1756
        %v1837 = vpack.c.b16 %v1761, %v1759
        %v1838 = vpack.c.b16 %v1762, %v1760
        %v1839 = vpack.c.b16 %v1765, %v1763
        %v1840 = vpack.c.b16 %v1766, %v1764
        %v1841 = vpack.c.b16 %v1769, %v1767
        %v1842 = vpack.c.b16 %v1770, %v1768
        %v1843 = vpack.c.b16 %v1773, %v1771
        %v1844 = vpack.c.b16 %v1774, %v1772
        %v1845 = vpack.c.b16 %v1777, %v1775
        %v1846 = vpack.c.b16 %v1778, %v1776
        %v1847 = vpack.c.b16 %v1781, %v1779
        %v1848 = vpack.c.b16 %v1782, %v1780
        %v1849 = vpack.c.b16 %v1785, %v1783
        %v1850 = vpack.c.b16 %v1786, %v1784
        %1915 = vmatpush.bf16.xpose.msra.mxu0 %v1801
        %1916 = vmatpush.bf16.xpose.msra.mxu0 %v1799
        %1917 = vmatpush.bf16.xpose.msra.mxu0 %v1797
        %1918 = vmatpush.bf16.xpose.msra.mxu0 %v1795
        %1919 = vmatpush.bf16.xpose.msra.mxu0 %v1793
        %1920 = vmatpush.bf16.xpose.msra.mxu0 %v1791
        %1921 = vmatpush.bf16.xpose.msra.mxu0 %v1789
        %1922 = vmatpush.bf16.xpose.msra.mxu0 %v1787
        %1923 = vmatmul.bf16.gmra.mxu0 %v1587
        %v1924 = vpop.f32.mrf.mxu0
        %v1925 = vadd.f32 0.0, %v1924
        %v1926 = vpop.f32.mrf.mxu0
        %v1927 = vadd.f32 0.0, %v1926
        %1928 = vmatmul.bf16.gmra.mxu0 %v1589
        %v1929 = vpop.f32.mrf.mxu0
        %v1930 = vadd.f32 0.0, %v1929
        %v1931 = vpop.f32.mrf.mxu0
        %v1932 = vadd.f32 0.0, %v1931
        %1933 = vdwg.mxu0
        %1934 = vmatpush.bf16.xpose.msra.mxu0 %v1802
        %1935 = vmatpush.bf16.xpose.msra.mxu0 %v1800
        %1936 = vmatpush.bf16.xpose.msra.mxu0 %v1798
        %1937 = vmatpush.bf16.xpose.msra.mxu0 %v1796
        %1938 = vmatpush.bf16.xpose.msra.mxu0 %v1794
        %1939 = vmatpush.bf16.xpose.msra.mxu0 %v1792
        %1940 = vmatpush.bf16.xpose.msra.mxu0 %v1790
        %1941 = vmatpush.bf16.xpose.msra.mxu0 %v1788
        %1942 = vmatmul.bf16.gmra.mxu0 %v1588
        %v1943 = vpop.f32.mrf.mxu0
        %v1944 = vadd.f32 %v1925, %v1943
        %v1945 = vpop.f32.mrf.mxu0
        %v1946 = vadd.f32 %v1927, %v1945
        %1947 = vmatmul.bf16.gmra.mxu0 %v1590
        %v1948 = vpop.f32.mrf.mxu0
        %v1949 = vadd.f32 %v1930, %v1948
        %v1950 = vpop.f32.mrf.mxu0
        %v1951 = vadd.f32 %v1932, %v1950
        %1952 = vdwg.mxu0
        %1953 = vmatpush.bf16.xpose.msra.mxu0 %v1817
        %1954 = vmatpush.bf16.xpose.msra.mxu0 %v1815
        %1955 = vmatpush.bf16.xpose.msra.mxu0 %v1813
        %1956 = vmatpush.bf16.xpose.msra.mxu0 %v1811
        %1957 = vmatpush.bf16.xpose.msra.mxu0 %v1809
        %1958 = vmatpush.bf16.xpose.msra.mxu0 %v1807
        %1959 = vmatpush.bf16.xpose.msra.mxu0 %v1805
        %1960 = vmatpush.bf16.xpose.msra.mxu0 %v1803
        %1961 = vmatmul.bf16.gmra.mxu0 %v1587
        %v1962 = vpop.f32.mrf.mxu0
        %v1963 = vadd.f32 0.0, %v1962
        %v1964 = vpop.f32.mrf.mxu0
        %v1965 = vadd.f32 0.0, %v1964
        %1966 = vmatmul.bf16.gmra.mxu0 %v1589
        %v1967 = vpop.f32.mrf.mxu0
        %v1968 = vadd.f32 0.0, %v1967
        %v1969 = vpop.f32.mrf.mxu0
        %v1970 = vadd.f32 0.0, %v1969
        %1971 = vdwg.mxu0
        %1972 = vmatpush.bf16.xpose.msra.mxu0 %v1818
        %1973 = vmatpush.bf16.xpose.msra.mxu0 %v1816
        %1974 = vmatpush.bf16.xpose.msra.mxu0 %v1814
        %1975 = vmatpush.bf16.xpose.msra.mxu0 %v1812
        %1976 = vmatpush.bf16.xpose.msra.mxu0 %v1810
        %1977 = vmatpush.bf16.xpose.msra.mxu0 %v1808
        %1978 = vmatpush.bf16.xpose.msra.mxu0 %v1806
        %1979 = vmatpush.bf16.xpose.msra.mxu0 %v1804
        %1980 = vmatmul.bf16.gmra.mxu0 %v1588
        %v1981 = vpop.f32.mrf.mxu0
        %v1982 = vadd.f32 %v1963, %v1981
        %v1983 = vpop.f32.mrf.mxu0
        %v1984 = vadd.f32 %v1965, %v1983
        %1985 = vmatmul.bf16.gmra.mxu0 %v1590
        %v1986 = vpop.f32.mrf.mxu0
        %v1987 = vadd.f32 %v1968, %v1986
        %v1988 = vpop.f32.mrf.mxu0
        %v1989 = vadd.f32 %v1970, %v1988
        %1990 = vdwg.mxu0
        %1991 = vmatpush.bf16.xpose.msra.mxu0 %v1833
        %1992 = vmatpush.bf16.xpose.msra.mxu0 %v1831
        %1993 = vmatpush.bf16.xpose.msra.mxu0 %v1829
        %1994 = vmatpush.bf16.xpose.msra.mxu0 %v1827
        %1995 = vmatpush.bf16.xpose.msra.mxu0 %v1825
        %1996 = vmatpush.bf16.xpose.msra.mxu0 %v1823
        %1997 = vmatpush.bf16.xpose.msra.mxu0 %v1821
        %1998 = vmatpush.bf16.xpose.msra.mxu0 %v1819
        %1999 = vmatmul.bf16.gmra.mxu0 %v1587
        %v2000 = vpop.f32.mrf.mxu0
        %v2001 = vadd.f32 0.0, %v2000
        %v2002 = vpop.f32.mrf.mxu0
        %v2003 = vadd.f32 0.0, %v2002
        %2004 = vmatmul.bf16.gmra.mxu0 %v1589
        %v2005 = vpop.f32.mrf.mxu0
        %v2006 = vadd.f32 0.0, %v2005
        %v2007 = vpop.f32.mrf.mxu0
        %v2008 = vadd.f32 0.0, %v2007
        %2009 = vdwg.mxu0
        %2010 = vmatpush.bf16.xpose.msra.mxu0 %v1834
        %2011 = vmatpush.bf16.xpose.msra.mxu0 %v1832
        %2012 = vmatpush.bf16.xpose.msra.mxu0 %v1830
        %2013 = vmatpush.bf16.xpose.msra.mxu0 %v1828
        %2014 = vmatpush.bf16.xpose.msra.mxu0 %v1826
        %2015 = vmatpush.bf16.xpose.msra.mxu0 %v1824
        %2016 = vmatpush.bf16.xpose.msra.mxu0 %v1822
        %2017 = vmatpush.bf16.xpose.msra.mxu0 %v1820
        %2018 = vmatmul.bf16.gmra.mxu0 %v1588
        %v2019 = vpop.f32.mrf.mxu0
        %v2020 = vadd.f32 %v2001, %v2019
        %v2021 = vpop.f32.mrf.mxu0
        %v2022 = vadd.f32 %v2003, %v2021
        %2023 = vmatmul.bf16.gmra.mxu0 %v1590
        %v2024 = vpop.f32.mrf.mxu0
        %v2025 = vadd.f32 %v2006, %v2024
        %v2026 = vpop.f32.mrf.mxu0
        %v2027 = vadd.f32 %v2008, %v2026
        %2028 = vdwg.mxu0
        %2029 = vmatpush.bf16.xpose.msra.mxu0 %v1849
        %2030 = vmatpush.bf16.xpose.msra.mxu0 %v1847
        %2031 = vmatpush.bf16.xpose.msra.mxu0 %v1845
        %2032 = vmatpush.bf16.xpose.msra.mxu0 %v1843
        %2033 = vmatpush.bf16.xpose.msra.mxu0 %v1841
        %2034 = vmatpush.bf16.xpose.msra.mxu0 %v1839
        %2035 = vmatpush.bf16.xpose.msra.mxu0 %v1837
        %2036 = vmatpush.bf16.xpose.msra.mxu0 %v1835
        %2037 = vmatmul.bf16.gmra.mxu0 %v1587
        %v2038 = vpop.f32.mrf.mxu0
        %v2039 = vadd.f32 0.0, %v2038
        %v2040 = vpop.f32.mrf.mxu0
        %v2041 = vadd.f32 0.0, %v2040
        %2042 = vmatmul.bf16.gmra.mxu0 %v1589
        %v2043 = vpop.f32.mrf.mxu0
        %v2044 = vadd.f32 0.0, %v2043
        %v2045 = vpop.f32.mrf.mxu0
        %v2046 = vadd.f32 0.0, %v2045
        %2047 = vdwg.mxu0
        %2048 = vmatpush.bf16.xpose.msra.mxu0 %v1850
        %2049 = vmatpush.bf16.xpose.msra.mxu0 %v1848
        %2050 = vmatpush.bf16.xpose.msra.mxu0 %v1846
        %2051 = vmatpush.bf16.xpose.msra.mxu0 %v1844
        %2052 = vmatpush.bf16.xpose.msra.mxu0 %v1842
        %2053 = vmatpush.bf16.xpose.msra.mxu0 %v1840
        %2054 = vmatpush.bf16.xpose.msra.mxu0 %v1838
        %2055 = vmatpush.bf16.xpose.msra.mxu0 %v1836
        %2056 = vmatmul.bf16.gmra.mxu0 %v1588
        %v2057 = vpop.f32.mrf.mxu0
        %v2058 = vadd.f32 %v2039, %v2057
        %v2059 = vpop.f32.mrf.mxu0
        %v2060 = vadd.f32 %v2041, %v2059
        %2061 = vmatmul.bf16.gmra.mxu0 %v1590
        %v2062 = vpop.f32.mrf.mxu0
        %v2063 = vadd.f32 %v2044, %v2062
        %v2064 = vpop.f32.mrf.mxu0
        %v2065 = vadd.f32 %v2046, %v2064
        %2066 = vdwg.mxu0
        %2067 = vst [vmem:[%s231] sm:$0xff] %v1944
        %2068 = vst [vmem:[%s231 + $0x8] sm:$0xff] %v1982
        %2069 = vst [vmem:[%s231 + $0x10] sm:$0xff] %v2020
        %2070 = vst [vmem:[%s231 + $0x18] sm:$0xff] %v2058
        %2071 = vst [vmem:[%s231 + $0x20] sm:$0xff] %v1946
        %2072 = vst [vmem:[%s231 + $0x28] sm:$0xff] %v1984
        %2073 = vst [vmem:[%s231 + $0x30] sm:$0xff] %v2022
        %2074 = vst [vmem:[%s231 + $0x38] sm:$0xff] %v2060
        %2075 = vst [vmem:[%s231 + $0x40] sm:$0xff] %v1949
        %2076 = vst [vmem:[%s231 + $0x48] sm:$0xff] %v1987
        %2077 = vst [vmem:[%s231 + $0x50] sm:$0xff] %v2025
        %2078 = vst [vmem:[%s231 + $0x58] sm:$0xff] %v2063
        %2079 = vst [vmem:[%s231 + $0x60] sm:$0xff] %v1951
        %2080 = vst [vmem:[%s231 + $0x68] sm:$0xff] %v1989
        %2081 = vst [vmem:[%s231 + $0x70] sm:$0xff] %v2027
        %2082 = vst [vmem:[%s231 + $0x78] sm:$0xff] %v2065
        %s2083 = sand.u32 %s109, 1
        %s2084 = scalar_lea.sflag [#allocation7], %s2083
        %s2085 = sand.u32 %s109, 1
        %s2086 = smul.addr %s2085, 128
        %s2087 = scalar_lea.vmem [#allocation12], %s2086
        // Predicated region
        $region45: #{tpu_custom_call.1} parent=31 // pred_check
          %p2088 = pneg %p119
        $region46: #{tpu_custom_call.1} parent=31 // pred_check_branch
          %2090 = sbr.rel (%p2088) target = $region48
        $region47: #{tpu_custom_call.1} parent=31 // pred_region
          %2092 = vsyncadd %s2084, 0
          %s2093 = smul.addr %s31, 16
          %s2094 = smul.addr %s2093, 8
          %s2095 = scalar_lea.hbm %s4, %s2094
          %s2096 = sshll.u32 %s2087, 4
          %s2097 = int_to_ptr.vmem [resolvable:$true] %s2096
          %s2098 = sshll.u32 %s2095, 4
          %s2099 = int_to_ptr.hbm [resolvable:$true] %s2098
          %2104 = dma.vmem_to_hbm [thread:$0]  %s2097, 2048, %s2099, %s2084, 512, 512, 32
        $region48: #{tpu_custom_call.1} parent=31 // pred_fallthru
          _
      $region32: #{tpu_custom_call.1} parent=5 // pred_fallthru
        _
      %p2105 = scmp.le.s32.totalorder 2, %s26
      // Predicated region
      $region49: #{tpu_custom_call.1} parent=5 // pred_check
        %p2106 = pneg %p2105
      $region50: #{tpu_custom_call.1} parent=5 // pred_check_branch
        %2108 = sbr.rel (%p2106) target = $region52
      $region51: #{tpu_custom_call.1} parent=5 // pred_region
        %s2109 = ssub.s32 %s26, 2
        // Predicated region
        $region53: #{tpu_custom_call.1} parent=51 // pred_check
          %p2110 = pneg %p125
        $region54: #{tpu_custom_call.1} parent=51 // pred_check_branch
          %2112 = sbr.rel (%p2110) target = $region56
        $region55: #{tpu_custom_call.1} parent=51 // pred_region
          %s2113 = sand.u32 %s110, 1
          %s2114 = scalar_lea.sflag [#allocation7], %s2113
          %s2115 = sand.u32 %s110, 1
          %s2116 = smul.addr %s2115, 128
          %s2117 = scalar_lea.vmem [#allocation12], %s2116
          %2119 = dma.done %s2114, 2048
        $region56: #{tpu_custom_call.1} parent=51 // pred_fallthru
          _
      $region52: #{tpu_custom_call.1} parent=5 // pred_fallthru
        _
    $region6: #{tpu_custom_call.1} parent=1 // loop_footer
      %s30 = sadd.s32 1, %s26
    $region7: #{tpu_custom_call.1} parent=1 // loop_footer_branch
      %25 = sbr.rel target = $region3
    $region8: #{tpu_custom_call.1} parent=1 // loop_exit
      _
    %2120 = vsyncpa [#allocation6], 1
    %s2121 = scalar_lea.sflag [#allocation6], 1
    %2122 = vsyncpa %s2121, 1
    %2123 = vsyncpa [#allocation11], 1
    %2124 = vsyncpa [#allocation7], 1
    %s2125 = scalar_lea.sflag [#allocation7], 1
    %2126 = vsyncpa %s2125, 1
    %2127 = vsyncpa [#allocation8], 1
    %s2128 = scalar_lea.sflag [#allocation8], 1
    %2129 = vsyncpa %s2128, 1

</llo_original>
